<compile_context>
chip_gen: v7x
topology: tpu7x:2x2x1
jax: 0.10.0
libtpu: 0.0.40
codegen_flags: <defaults>
</compile_context>

<pallas_src>
from functools import partial

import jax
import jax.numpy as jnp
import numpy as np
from jax.experimental import pallas as pl
from jax.experimental.pallas import tpu as pltpu


def _up_block_kernel(H2, W2, B, Cx, Cr, F_,
                     xu_ref, res_ref, m_ref,
                     w1_ref, b1_ref, w2_ref, b2_ref, wres_ref, bres_ref,
                     o_ref, z_scr, s1_scr, s2_scr):
    """UpBlock forward on a batch-folded, lane-flattened (B*C, H2*W2) layout.

    xu_ref:   (B*Cx, HW2)        nearest-neighbour 2x replicate of x
    res_ref:  (B*Cr, HW2)        skip connection
    m_ref:    (6, HW2) f32{0,1}  col_even, row_even, w==0, w==W2-1, h==0, h==H2-1
    w1_ref:   (B*F, 9*B*(Cx+Cr)) conv1, taps+concat+batch folded (block-diag)
    w2_ref:   (B*F, 9*B*F)       conv2, taps+batch folded (block-diag)
    wres_ref: (B*F, B*Cx)        ConvTranspose2d(1x1, stride 2), batch folded
    b*_ref:   (B*F, 1)           biases (tiled over batch)
    o_ref:    (B*F, HW2)         output slab
    z_scr:    (B*(Cx+Cr), HW2)   combined [upsampled x ; res] slab
    s1_scr:   (9*B*(Cx+Cr), HW2) conv1 tap stack
    s2_scr:   (9*B*F, HW2)       conv2 tap stack
    """
    HW2 = H2 * W2
    f32 = jnp.float32
    BCx = B * Cx
    BC1 = B * (Cx + Cr)
    BF = B * F_

    # Boolean spatial masks, materialized at each operand's sublane height via
    # f32 broadcast + compare (selects then replace all mask arithmetic).
    m = m_ref[...].astype(f32)                       # (6, HW2)
    _names = ("col_even", "row_even", "w0", "wlast", "h0", "hlast")
    _mask_cache = {}

    def masks_at(rows):
        if rows not in _mask_cache:
            _mask_cache[rows] = {
                name: jnp.broadcast_to(m[k:k + 1], (rows, HW2)) > 0.5
                for k, name in enumerate(_names)}
        return _mask_cache[rows]

    # ---- bilinear 2x upsample (align_corners=False), expressed on the
    # nearest-replicated grid: out[k] = 0.75*n[k] + 0.25*n[k-1] (k even)
    #                                 = 0.75*n[k] + 0.25*n[k+1] (k odd), clamped.
    mk = masks_at(BCx)
    nn_up = xu_ref[...].astype(f32)                  # (B*Cx, HW2)
    prev_c = jnp.where(mk["w0"], nn_up, pltpu.roll(nn_up, shift=1, axis=1))
    next_c = jnp.where(mk["wlast"], nn_up, pltpu.roll(nn_up, shift=HW2 - 1, axis=1))
    t_col = 0.75 * nn_up + 0.25 * jnp.where(mk["col_even"], prev_c, next_c)
    prev_r = jnp.where(mk["h0"], t_col, pltpu.roll(t_col, shift=W2, axis=1))
    next_r = jnp.where(mk["hlast"], t_col, pltpu.roll(t_col, shift=HW2 - W2, axis=1))
    xu = 0.75 * t_col + 0.25 * jnp.where(mk["row_even"], prev_r, next_r)

    # ---- combined conv1 input slab [upsampled x ; res].  The channel concat
    # and the batch fold live in the block-diagonal weights, so only one roll
    # per 3x3 tap is needed on this full-8-sublane slab.
    z_scr[0:BCx, :] = xu
    z_scr[BCx:BC1, :] = res_ref[...].astype(f32)
    z = z_scr[...]

    def shift_tap(v, dy, dx, mv):
        # Value v[h+dy, w+dx] at (h, w); zero outside (padding=1).
        d = dy * W2 + dx
        vs = v if d == 0 else pltpu.roll(v, shift=(-d) % HW2, axis=1)
        if dy == -1:
            vs = jnp.where(mv["h0"], 0.0, vs)
        elif dy == 1:
            vs = jnp.where(mv["hlast"], 0.0, vs)
        if dx == -1:
            vs = jnp.where(mv["w0"], 0.0, vs)
        elif dx == 1:
            vs = jnp.where(mv["wlast"], 0.0, vs)
        return vs

    def build_tap_stack(stack_ref, v, rows):
        # Stack the 9 shifted / zero-padded taps along sublanes (8-aligned
        # full-tile stores) so each 3x3 conv is a single MXU contraction.
        mv = masks_at(rows)
        for dy in (-1, 0, 1):
            for dx in (-1, 0, 1):
                tap = (dy + 1) * 3 + (dx + 1)
                stack_ref[tap * rows:(tap + 1) * rows, :] = shift_tap(v, dy, dx, mv)

    def lrelu(u):
        return jnp.maximum(u, 0.2 * u)

    # double_conv on cat([xu, res]): one dot per conv (K = 9*B*Cin).
    build_tap_stack(s1_scr, z, BC1)
    y = lrelu(jnp.dot(w1_ref[...].astype(f32), s1_scr[...],
                      preferred_element_type=f32) + b1_ref[...].astype(f32))

    build_tap_stack(s2_scr, y, BF)
    y = lrelu(jnp.dot(w2_ref[...].astype(f32), s2_scr[...],
                      preferred_element_type=f32) + b2_ref[...].astype(f32))

    # ConvTranspose2d(Cx, F, 1, stride=2) with output_size=(2H, 2W): only the
    # (even row, even col) positions see the input; everywhere else bias only.
    mo = masks_at(BF)
    cres = jnp.dot(wres_ref[...].astype(f32), xu_ref[...].astype(f32),
                   preferred_element_type=f32)
    cres = jnp.where(jnp.logical_and(mo["col_even"], mo["row_even"]), cres, 0.0)

    o_ref[...] = (y + cres + bres_ref[...].astype(f32)).astype(o_ref.dtype)


def up_block_forward(x, res, params):
    """Pallas implementation of UpBlock.forward (NCHW, like PyTorch)."""
    B, Cx, H, W = x.shape
    Br, Cr, H2, W2 = res.shape
    assert Br == B and H2 == 2 * H and W2 == 2 * W
    HW2 = H2 * W2

    w1 = params["conv1_w"]           # (F, Cx + Cr, 3, 3)
    b1 = params["conv1_b"]           # (F,)
    w2 = params["conv2_w"]           # (F, F, 3, 3)
    b2 = params["conv2_b"]           # (F,)
    wres = params["conv_res_w"]      # (Cx, F, 1, 1)  (ConvTranspose2d layout)
    bres = params["conv_res_b"]      # (F,)
    F_ = w1.shape[0]
    Cin1 = Cx + Cr
    assert w1.shape[1] == Cin1

    # ---- layout plumbing only (no arithmetic hoisted out of the kernel):
    # nearest-neighbour 2x replicate of x, lane-dense flatten, batch folded
    # into the sublane axis.
    xu_nn = jnp.repeat(jnp.repeat(x, 2, axis=2), 2, axis=3).reshape(B * Cx, HW2)
    res_f = res.reshape(B * Cr, HW2)

    # Spatial parity / boundary masks (f32 in HBM, turned into booleans
    # in-kernel; constant, DMA'd once since grid has a single step).
    col = np.arange(HW2) % W2
    row = np.arange(HW2) // W2
    masks = jnp.asarray(np.stack([
        (col % 2 == 0), (row % 2 == 0),
        (col == 0), (col == W2 - 1),
        (row == 0), (row == H2 - 1),
    ]).astype(np.float32))                                  # (6, HW2)

    # ---- fold the 3x3 taps, the xu/res concat and the batch into
    # batch-block-diagonal weights so each conv is ONE MXU contraction.
    eyeB = jnp.eye(B, dtype=jnp.float32)
    w1_t = jnp.transpose(w1, (2, 3, 0, 1)).reshape(9, F_, Cin1)   # tap = ky*3+kx
    w1a = w1_t[:, :, :Cx]                                         # acts on upsampled x
    w1b = w1_t[:, :, Cx:]                                         # acts on res
    W1a = jnp.einsum("tfc,ab->aftbc", w1a, eyeB).reshape(B, F_, 9, B * Cx)
    W1b = jnp.einsum("tfc,ab->aftbc", w1b, eyeB).reshape(B, F_, 9, B * Cr)
    W1 = jnp.concatenate([W1a, W1b], axis=-1).reshape(B * F_, 9 * B * Cin1)

    w2_t = jnp.transpose(w2, (2, 3, 0, 1)).reshape(9, F_, F_)
    W2m = jnp.einsum("tfc,ab->aftbc", w2_t, eyeB).reshape(B * F_, 9 * B * F_)

    wres_t = jnp.transpose(wres.reshape(Cx, F_))                  # (F, Cx)
    Wres = jnp.einsum("fc,ab->afbc", wres_t, eyeB).reshape(B * F_, B * Cx)

    b1_c = jnp.tile(b1, B).reshape(B * F_, 1)
    b2_c = jnp.tile(b2, B).reshape(B * F_, 1)
    bres_c = jnp.tile(bres, B).reshape(B * F_, 1)

    kernel = partial(_up_block_kernel, H2, W2, B, Cx, Cr, F_)
    out = pl.pallas_call(
        kernel,
        out_shape=jax.ShapeDtypeStruct((B * F_, HW2), x.dtype),
        grid_spec=pltpu.PrefetchScalarGridSpec(
            num_scalar_prefetch=0,
            grid=(1,),
            in_specs=[
                pl.BlockSpec((B * Cx, HW2), lambda i: (0, 0)),
                pl.BlockSpec((B * Cr, HW2), lambda i: (0, 0)),
                pl.BlockSpec((6, HW2), lambda i: (0, 0)),
                pl.BlockSpec((B * F_, 9 * B * Cin1), lambda i: (0, 0)),
                pl.BlockSpec((B * F_, 1), lambda i: (0, 0)),
                pl.BlockSpec((B * F_, 9 * B * F_), lambda i: (0, 0)),
                pl.BlockSpec((B * F_, 1), lambda i: (0, 0)),
                pl.BlockSpec((B * F_, B * Cx), lambda i: (0, 0)),
                pl.BlockSpec((B * F_, 1), lambda i: (0, 0)),
            ],
            out_specs=pl.BlockSpec((B * F_, HW2), lambda i: (0, 0)),
            scratch_shapes=[
                pltpu.VMEM((B * Cin1, HW2), jnp.float32),        # combined slab
                pltpu.VMEM((9 * B * Cin1, HW2), jnp.float32),    # conv1 tap stack
                pltpu.VMEM((9 * B * F_, HW2), jnp.float32),      # conv2 tap stack
            ],
        ),
        compiler_params=pltpu.CompilerParams(
            dimension_semantics=("arbitrary",)),
    )(xu_nn, res_f, masks, W1, b1_c, W2m, b2_c, Wres, bres_c)

    # Contiguous reshape only; rows are (batch, filter), lanes are h*W2 + w.
    return out.reshape(B, F_, H2, W2)


def up_block_reference(x, res, params):
    """Pure-JAX reference matching the PyTorch UpBlock.forward."""
    B, Cx, H, W = x.shape
    H2, W2 = 2 * H, 2 * W
    F_ = params["conv1_w"].shape[0]
    hi = jax.lax.Precision.HIGHEST

    # ConvTranspose2d(Cx, F, 1, stride=2) with output_size=(2H, 2W).
    wres = params["conv_res_w"].reshape(Cx, F_)
    vals = jnp.einsum("bchw,cf->bfhw", x, wres, precision=hi)
    cres = jnp.zeros((B, F_, H2, W2), x.dtype).at[:, :, ::2, ::2].set(vals)
    cres = cres + params["conv_res_b"][None, :, None, None]

    # Bilinear x2, align_corners=False (jax.image.resize matches for 2x).
    xu = jax.image.resize(x, (B, Cx, H2, W2), method="bilinear")
    z = jnp.concatenate([xu, res], axis=1)

    def conv(v, w, b):
        y = jax.lax.conv_general_dilated(
            v, w, window_strides=(1, 1), padding="SAME",
            dimension_numbers=("NCHW", "OIHW", "NCHW"), precision=hi)
        return y + b[None, :, None, None]

    y = conv(z, params["conv1_w"], params["conv1_b"])
    y = jnp.where(y > 0, y, 0.2 * y)
    y = conv(y, params["conv2_w"], params["conv2_b"])
    y = jnp.where(y > 0, y, 0.2 * y)
    return y + cres


if __name__ == "__main__":
    B = 2
    input_channels = 4            # UpBlock(input_channels=4, filters=4)
    filters = 4
    Cx = input_channels // 2      # channels of x (and of the skip `res`)
    H = W = 16

    key = jax.random.PRNGKey(0)
    ks = jax.random.split(key, 8)

    x = jax.random.normal(ks[0], (B, Cx, H, W), jnp.float32)
    res = jax.random.normal(ks[1], (B, Cx, 2 * H, 2 * W), jnp.float32)

    def u(k, shape, fan_in):
        lim = 1.0 / np.sqrt(fan_in)
        return jax.random.uniform(k, shape, jnp.float32, -lim, lim)

    params = {
        # ConvTranspose2d(Cx, filters, 1, stride=2): weight (in, out, 1, 1)
        "conv_res_w": u(ks[2], (Cx, filters, 1, 1), Cx),
        "conv_res_b": u(ks[3], (filters,), Cx),
        # Conv2d(input_channels, filters, 3, padding=1)
        "conv1_w": u(ks[4], (filters, input_channels, 3, 3), input_channels * 9),
        "conv1_b": u(ks[5], (filters,), input_channels * 9),
        # Conv2d(filters, filters, 3, padding=1)
        "conv2_w": u(ks[6], (filters, filters, 3, 3), filters * 9),
        "conv2_b": u(ks[7], (filters,), filters * 9),
    }

    out = jax.block_until_ready(up_block_forward(x, res, params))
    ref = jax.block_until_ready(up_block_reference(x, res, params))

    assert out.shape == (B, filters, 2 * H, 2 * W), out.shape
    np.testing.assert_allclose(np.asarray(out), np.asarray(ref),
                               rtol=1e-4, atol=1e-4)

    print("KERNEL_OK")
</pallas_src>

<mosaic_0001>
module attributes {stable_mosaic.version = 11 : i64} {
  func.func @_up_block_kernel(%arg0: i32, %arg1: memref<4x1024xf32, #tpu.memory_space<vmem>>, %arg2: memref<4x1024xf32, #tpu.memory_space<vmem>>, %arg3: memref<6x1024xf32, #tpu.memory_space<vmem>>, %arg4: memref<8x72xf32, #tpu.memory_space<vmem>>, %arg5: memref<8x1xf32, #tpu.memory_space<vmem>>, %arg6: memref<8x72xf32, #tpu.memory_space<vmem>>, %arg7: memref<8x1xf32, #tpu.memory_space<vmem>>, %arg8: memref<8x4xf32, #tpu.memory_space<vmem>>, %arg9: memref<8x1xf32, #tpu.memory_space<vmem>>, %arg10: memref<8x1024xf32, #tpu.memory_space<vmem>>, %arg11: memref<8x1024xf32, #tpu.memory_space<vmem>>, %arg12: memref<72x1024xf32, #tpu.memory_space<vmem>>, %arg13: memref<72x1024xf32, #tpu.memory_space<vmem>>) attributes {dimension_semantics = [#tpu.dimension_semantics<arbitrary>], iteration_bounds = array<i64: 1>, scalar_prefetch = 0 : i64, scratch_operands = 3 : i64, tpu.core_type = #tpu.core_type<tc>, window_params = [{pipeline_mode = #tpu.pipeline_mode<synchronous>, transform_indices = @transform_0, window_bounds = array<i64: 4, 1024>}, {pipeline_mode = #tpu.pipeline_mode<synchronous>, transform_indices = @transform_1, window_bounds = array<i64: 4, 1024>}, {pipeline_mode = #tpu.pipeline_mode<synchronous>, transform_indices = @transform_2, window_bounds = array<i64: 6, 1024>}, {pipeline_mode = #tpu.pipeline_mode<synchronous>, transform_indices = @transform_3, window_bounds = array<i64: 8, 72>}, {pipeline_mode = #tpu.pipeline_mode<synchronous>, transform_indices = @transform_4, window_bounds = array<i64: 8, 1>}, {pipeline_mode = #tpu.pipeline_mode<synchronous>, transform_indices = @transform_5, window_bounds = array<i64: 8, 72>}, {pipeline_mode = #tpu.pipeline_mode<synchronous>, transform_indices = @transform_6, window_bounds = array<i64: 8, 1>}, {pipeline_mode = #tpu.pipeline_mode<synchronous>, transform_indices = @transform_7, window_bounds = array<i64: 8, 4>}, {pipeline_mode = #tpu.pipeline_mode<synchronous>, transform_indices = @transform_8, window_bounds = array<i64: 8, 1>}, {pipeline_mode = #tpu.pipeline_mode<synchronous>, transform_indices = @transform_9, window_bounds = array<i64: 8, 1024>}]} {
    %c0 = arith.constant 0 : index
    %c0_0 = arith.constant 0 : index
    %0 = vector.load %arg3[%c0, %c0_0] : memref<6x1024xf32, #tpu.memory_space<vmem>>, vector<6x1024xf32>
    %1 = vector.extract_strided_slice %0 {offsets = [0, 0], sizes = [1, 1024], strides = [1, 1]} : vector<6x1024xf32> to vector<1x1024xf32>
    %2 = vector.shape_cast %1 : vector<1x1024xf32> to vector<1x1024xf32>
    %3 = vector.broadcast %2 : vector<1x1024xf32> to vector<4x1024xf32>
    %cst = arith.constant 5.000000e-01 : f32
    %4 = vector.broadcast %cst : f32 to vector<4x1024xf32>
    %5 = arith.cmpf ogt, %3, %4 : vector<4x1024xf32>
    %6 = vector.extract_strided_slice %0 {offsets = [1, 0], sizes = [1, 1024], strides = [1, 1]} : vector<6x1024xf32> to vector<1x1024xf32>
    %7 = vector.shape_cast %6 : vector<1x1024xf32> to vector<1x1024xf32>
    %8 = vector.broadcast %7 : vector<1x1024xf32> to vector<4x1024xf32>
    %cst_1 = arith.constant 5.000000e-01 : f32
    %9 = vector.broadcast %cst_1 : f32 to vector<4x1024xf32>
    %10 = arith.cmpf ogt, %8, %9 : vector<4x1024xf32>
    %11 = vector.extract_strided_slice %0 {offsets = [2, 0], sizes = [1, 1024], strides = [1, 1]} : vector<6x1024xf32> to vector<1x1024xf32>
    %12 = vector.shape_cast %11 : vector<1x1024xf32> to vector<1x1024xf32>
    %13 = vector.broadcast %12 : vector<1x1024xf32> to vector<4x1024xf32>
    %cst_2 = arith.constant 5.000000e-01 : f32
    %14 = vector.broadcast %cst_2 : f32 to vector<4x1024xf32>
    %15 = arith.cmpf ogt, %13, %14 : vector<4x1024xf32>
    %16 = vector.extract_strided_slice %0 {offsets = [3, 0], sizes = [1, 1024], strides = [1, 1]} : vector<6x1024xf32> to vector<1x1024xf32>
    %17 = vector.shape_cast %16 : vector<1x1024xf32> to vector<1x1024xf32>
    %18 = vector.broadcast %17 : vector<1x1024xf32> to vector<4x1024xf32>
    %cst_3 = arith.constant 5.000000e-01 : f32
    %19 = vector.broadcast %cst_3 : f32 to vector<4x1024xf32>
    %20 = arith.cmpf ogt, %18, %19 : vector<4x1024xf32>
    %21 = vector.extract_strided_slice %0 {offsets = [4, 0], sizes = [1, 1024], strides = [1, 1]} : vector<6x1024xf32> to vector<1x1024xf32>
    %22 = vector.shape_cast %21 : vector<1x1024xf32> to vector<1x1024xf32>
    %23 = vector.broadcast %22 : vector<1x1024xf32> to vector<4x1024xf32>
    %cst_4 = arith.constant 5.000000e-01 : f32
    %24 = vector.broadcast %cst_4 : f32 to vector<4x1024xf32>
    %25 = arith.cmpf ogt, %23, %24 : vector<4x1024xf32>
    %26 = vector.extract_strided_slice %0 {offsets = [5, 0], sizes = [1, 1024], strides = [1, 1]} : vector<6x1024xf32> to vector<1x1024xf32>
    %27 = vector.shape_cast %26 : vector<1x1024xf32> to vector<1x1024xf32>
    %28 = vector.broadcast %27 : vector<1x1024xf32> to vector<4x1024xf32>
    %cst_5 = arith.constant 5.000000e-01 : f32
    %29 = vector.broadcast %cst_5 : f32 to vector<4x1024xf32>
    %30 = arith.cmpf ogt, %28, %29 : vector<4x1024xf32>
    %c0_6 = arith.constant 0 : index
    %c0_7 = arith.constant 0 : index
    %31 = vector.load %arg1[%c0_6, %c0_7] : memref<4x1024xf32, #tpu.memory_space<vmem>>, vector<4x1024xf32>
    %c1_i32 = arith.constant 1 : i32
    %32 = tpu.dynamic_rotate %31 by %c1_i32 dim 1 : vector<4x1024xf32>, i32 -> vector<4x1024xf32>
    %33 = arith.select %15, %31, %32 : vector<4x1024xi1>, vector<4x1024xf32>
    %c1023_i32 = arith.constant 1023 : i32
    %34 = tpu.dynamic_rotate %31 by %c1023_i32 dim 1 : vector<4x1024xf32>, i32 -> vector<4x1024xf32>
    %35 = arith.select %20, %31, %34 : vector<4x1024xi1>, vector<4x1024xf32>
    %cst_8 = arith.constant 7.500000e-01 : f32
    %36 = vector.broadcast %cst_8 : f32 to vector<4x1024xf32>
    %37 = arith.mulf %36, %31 : vector<4x1024xf32>
    %38 = arith.select %5, %33, %35 : vector<4x1024xi1>, vector<4x1024xf32>
    %cst_9 = arith.constant 2.500000e-01 : f32
    %39 = vector.broadcast %cst_9 : f32 to vector<4x1024xf32>
    %40 = arith.mulf %39, %38 : vector<4x1024xf32>
    %41 = arith.addf %37, %40 : vector<4x1024xf32>
    %c32_i32 = arith.constant 32 : i32
    %42 = tpu.dynamic_rotate %41 by %c32_i32 dim 1 : vector<4x1024xf32>, i32 -> vector<4x1024xf32>
    %43 = arith.select %25, %41, %42 : vector<4x1024xi1>, vector<4x1024xf32>
    %c992_i32 = arith.constant 992 : i32
    %44 = tpu.dynamic_rotate %41 by %c992_i32 dim 1 : vector<4x1024xf32>, i32 -> vector<4x1024xf32>
    %45 = arith.select %30, %41, %44 : vector<4x1024xi1>, vector<4x1024xf32>
    %cst_10 = arith.constant 7.500000e-01 : f32
    %46 = vector.broadcast %cst_10 : f32 to vector<4x1024xf32>
    %47 = arith.mulf %46, %41 : vector<4x1024xf32>
    %48 = arith.select %10, %43, %45 : vector<4x1024xi1>, vector<4x1024xf32>
    %cst_11 = arith.constant 2.500000e-01 : f32
    %49 = vector.broadcast %cst_11 : f32 to vector<4x1024xf32>
    %50 = arith.mulf %49, %48 : vector<4x1024xf32>
    %51 = arith.addf %47, %50 : vector<4x1024xf32>
    %c0_12 = arith.constant 0 : index
    %c0_13 = arith.constant 0 : index
    %52 = vector.load %arg11[%c0_12, %c0_13] : memref<8x1024xf32, #tpu.memory_space<vmem>>, vector<4x1024xf32>
    tpu.vector_store %arg11[%c0_12, %c0_13], %51 {strides = array<i32>} : memref<8x1024xf32, #tpu.memory_space<vmem>>, vector<4x1024xf32>,
    %c0_14 = arith.constant 0 : index
    %c0_15 = arith.constant 0 : index
    %53 = vector.load %arg2[%c0_14, %c0_15] : memref<4x1024xf32, #tpu.memory_space<vmem>>, vector<4x1024xf32>
    %c4 = arith.constant 4 : index
    %c0_16 = arith.constant 0 : index
    %54 = vector.load %arg11[%c4, %c0_16] : memref<8x1024xf32, #tpu.memory_space<vmem>>, vector<4x1024xf32>
    tpu.vector_store %arg11[%c4, %c0_16], %53 {strides = array<i32>} : memref<8x1024xf32, #tpu.memory_space<vmem>>, vector<4x1024xf32>,
    %c0_17 = arith.constant 0 : index
    %c0_18 = arith.constant 0 : index
    %55 = vector.load %arg11[%c0_17, %c0_18] : memref<8x1024xf32, #tpu.memory_space<vmem>>, vector<8x1024xf32>
    %56 = vector.extract_strided_slice %0 {offsets = [0, 0], sizes = [1, 1024], strides = [1, 1]} : vector<6x1024xf32> to vector<1x1024xf32>
    %57 = vector.shape_cast %56 : vector<1x1024xf32> to vector<1x1024xf32>
    %58 = vector.broadcast %57 : vector<1x1024xf32> to vector<8x1024xf32>
    %cst_19 = arith.constant 5.000000e-01 : f32
    %59 = vector.broadcast %cst_19 : f32 to vector<8x1024xf32>
    %60 = arith.cmpf ogt, %58, %59 : vector<8x1024xf32>
    %61 = vector.extract_strided_slice %0 {offsets = [1, 0], sizes = [1, 1024], strides = [1, 1]} : vector<6x1024xf32> to vector<1x1024xf32>
    %62 = vector.shape_cast %61 : vector<1x1024xf32> to vector<1x1024xf32>
    %63 = vector.broadcast %62 : vector<1x1024xf32> to vector<8x1024xf32>
    %cst_20 = arith.constant 5.000000e-01 : f32
    %64 = vector.broadcast %cst_20 : f32 to vector<8x1024xf32>
    %65 = arith.cmpf ogt, %63, %64 : vector<8x1024xf32>
    %66 = vector.extract_strided_slice %0 {offsets = [2, 0], sizes = [1, 1024], strides = [1, 1]} : vector<6x1024xf32> to vector<1x1024xf32>
    %67 = vector.shape_cast %66 : vector<1x1024xf32> to vector<1x1024xf32>
    %68 = vector.broadcast %67 : vector<1x1024xf32> to vector<8x1024xf32>
    %cst_21 = arith.constant 5.000000e-01 : f32
    %69 = vector.broadcast %cst_21 : f32 to vector<8x1024xf32>
    %70 = arith.cmpf ogt, %68, %69 : vector<8x1024xf32>
    %71 = vector.extract_strided_slice %0 {offsets = [3, 0], sizes = [1, 1024], strides = [1, 1]} : vector<6x1024xf32> to vector<1x1024xf32>
    %72 = vector.shape_cast %71 : vector<1x1024xf32> to vector<1x1024xf32>
    %73 = vector.broadcast %72 : vector<1x1024xf32> to vector<8x1024xf32>
    %cst_22 = arith.constant 5.000000e-01 : f32
    %74 = vector.broadcast %cst_22 : f32 to vector<8x1024xf32>
    %75 = arith.cmpf ogt, %73, %74 : vector<8x1024xf32>
    %76 = vector.extract_strided_slice %0 {offsets = [4, 0], sizes = [1, 1024], strides = [1, 1]} : vector<6x1024xf32> to vector<1x1024xf32>
    %77 = vector.shape_cast %76 : vector<1x1024xf32> to vector<1x1024xf32>
    %78 = vector.broadcast %77 : vector<1x1024xf32> to vector<8x1024xf32>
    %cst_23 = arith.constant 5.000000e-01 : f32
    %79 = vector.broadcast %cst_23 : f32 to vector<8x1024xf32>
    %80 = arith.cmpf ogt, %78, %79 : vector<8x1024xf32>
    %81 = vector.extract_strided_slice %0 {offsets = [5, 0], sizes = [1, 1024], strides = [1, 1]} : vector<6x1024xf32> to vector<1x1024xf32>
    %82 = vector.shape_cast %81 : vector<1x1024xf32> to vector<1x1024xf32>
    %83 = vector.broadcast %82 : vector<1x1024xf32> to vector<8x1024xf32>
    %cst_24 = arith.constant 5.000000e-01 : f32
    %84 = vector.broadcast %cst_24 : f32 to vector<8x1024xf32>
    %85 = arith.cmpf ogt, %83, %84 : vector<8x1024xf32>
    %c33_i32 = arith.constant 33 : i32
    %86 = tpu.dynamic_rotate %55 by %c33_i32 dim 1 : vector<8x1024xf32>, i32 -> vector<8x1024xf32>
    %cst_25 = arith.constant 0.000000e+00 : f32
    %87 = vector.broadcast %cst_25 : f32 to vector<8x1024xf32>
    %88 = arith.select %80, %87, %86 : vector<8x1024xi1>, vector<8x1024xf32>
    %cst_26 = arith.constant 0.000000e+00 : f32
    %89 = vector.broadcast %cst_26 : f32 to vector<8x1024xf32>
    %90 = arith.select %70, %89, %88 : vector<8x1024xi1>, vector<8x1024xf32>
    %c0_27 = arith.constant 0 : index
    %c0_28 = arith.constant 0 : index
    %91 = vector.load %arg12[%c0_27, %c0_28] : memref<72x1024xf32, #tpu.memory_space<vmem>>, vector<8x1024xf32>
    tpu.vector_store %arg12[%c0_27, %c0_28], %90 {strides = array<i32>} : memref<72x1024xf32, #tpu.memory_space<vmem>>, vector<8x1024xf32>,
    %c32_i32_29 = arith.constant 32 : i32
    %92 = tpu.dynamic_rotate %55 by %c32_i32_29 dim 1 : vector<8x1024xf32>, i32 -> vector<8x1024xf32>
    %cst_30 = arith.constant 0.000000e+00 : f32
    %93 = vector.broadcast %cst_30 : f32 to vector<8x1024xf32>
    %94 = arith.select %80, %93, %92 : vector<8x1024xi1>, vector<8x1024xf32>
    %c8 = arith.constant 8 : index
    %c0_31 = arith.constant 0 : index
    %95 = vector.load %arg12[%c8, %c0_31] : memref<72x1024xf32, #tpu.memory_space<vmem>>, vector<8x1024xf32>
    tpu.vector_store %arg12[%c8, %c0_31], %94 {strides = array<i32>} : memref<72x1024xf32, #tpu.memory_space<vmem>>, vector<8x1024xf32>,
    %c31_i32 = arith.constant 31 : i32
    %96 = tpu.dynamic_rotate %55 by %c31_i32 dim 1 : vector<8x1024xf32>, i32 -> vector<8x1024xf32>
    %cst_32 = arith.constant 0.000000e+00 : f32
    %97 = vector.broadcast %cst_32 : f32 to vector<8x1024xf32>
    %98 = arith.select %80, %97, %96 : vector<8x1024xi1>, vector<8x1024xf32>
    %cst_33 = arith.constant 0.000000e+00 : f32
    %99 = vector.broadcast %cst_33 : f32 to vector<8x1024xf32>
    %100 = arith.select %75, %99, %98 : vector<8x1024xi1>, vector<8x1024xf32>
    %c16 = arith.constant 16 : index
    %c0_34 = arith.constant 0 : index
    %101 = vector.load %arg12[%c16, %c0_34] : memref<72x1024xf32, #tpu.memory_space<vmem>>, vector<8x1024xf32>
    tpu.vector_store %arg12[%c16, %c0_34], %100 {strides = array<i32>} : memref<72x1024xf32, #tpu.memory_space<vmem>>, vector<8x1024xf32>,
    %c1_i32_35 = arith.constant 1 : i32
    %102 = tpu.dynamic_rotate %55 by %c1_i32_35 dim 1 : vector<8x1024xf32>, i32 -> vector<8x1024xf32>
    %cst_36 = arith.constant 0.000000e+00 : f32
    %103 = vector.broadcast %cst_36 : f32 to vector<8x1024xf32>
    %104 = arith.select %70, %103, %102 : vector<8x1024xi1>, vector<8x1024xf32>
    %c24 = arith.constant 24 : index
    %c0_37 = arith.constant 0 : index
    %105 = vector.load %arg12[%c24, %c0_37] : memref<72x1024xf32, #tpu.memory_space<vmem>>, vector<8x1024xf32>
    tpu.vector_store %arg12[%c24, %c0_37], %104 {strides = array<i32>} : memref<72x1024xf32, #tpu.memory_space<vmem>>, vector<8x1024xf32>,
    %c32 = arith.constant 32 : index
    %c0_38 = arith.constant 0 : index
    %106 = vector.load %arg12[%c32, %c0_38] : memref<72x1024xf32, #tpu.memory_space<vmem>>, vector<8x1024xf32>
    tpu.vector_store %arg12[%c32, %c0_38], %55 {strides = array<i32>} : memref<72x1024xf32, #tpu.memory_space<vmem>>, vector<8x1024xf32>,
    %c1023_i32_39 = arith.constant 1023 : i32
    %107 = tpu.dynamic_rotate %55 by %c1023_i32_39 dim 1 : vector<8x1024xf32>, i32 -> vector<8x1024xf32>
    %cst_40 = arith.constant 0.000000e+00 : f32
    %108 = vector.broadcast %cst_40 : f32 to vector<8x1024xf32>
    %109 = arith.select %75, %108, %107 : vector<8x1024xi1>, vector<8x1024xf32>
    %c40 = arith.constant 40 : index
    %c0_41 = arith.constant 0 : index
    %110 = vector.load %arg12[%c40, %c0_41] : memref<72x1024xf32, #tpu.memory_space<vmem>>, vector<8x1024xf32>
    tpu.vector_store %arg12[%c40, %c0_41], %109 {strides = array<i32>} : memref<72x1024xf32, #tpu.memory_space<vmem>>, vector<8x1024xf32>,
    %c993_i32 = arith.constant 993 : i32
    %111 = tpu.dynamic_rotate %55 by %c993_i32 dim 1 : vector<8x1024xf32>, i32 -> vector<8x1024xf32>
    %cst_42 = arith.constant 0.000000e+00 : f32
    %112 = vector.broadcast %cst_42 : f32 to vector<8x1024xf32>
    %113 = arith.select %85, %112, %111 : vector<8x1024xi1>, vector<8x1024xf32>
    %cst_43 = arith.constant 0.000000e+00 : f32
    %114 = vector.broadcast %cst_43 : f32 to vector<8x1024xf32>
    %115 = arith.select %70, %114, %113 : vector<8x1024xi1>, vector<8x1024xf32>
    %c48 = arith.constant 48 : index
    %c0_44 = arith.constant 0 : index
    %116 = vector.load %arg12[%c48, %c0_44] : memref<72x1024xf32, #tpu.memory_space<vmem>>, vector<8x1024xf32>
    tpu.vector_store %arg12[%c48, %c0_44], %115 {strides = array<i32>} : memref<72x1024xf32, #tpu.memory_space<vmem>>, vector<8x1024xf32>,
    %c992_i32_45 = arith.constant 992 : i32
    %117 = tpu.dynamic_rotate %55 by %c992_i32_45 dim 1 : vector<8x1024xf32>, i32 -> vector<8x1024xf32>
    %cst_46 = arith.constant 0.000000e+00 : f32
    %118 = vector.broadcast %cst_46 : f32 to vector<8x1024xf32>
    %119 = arith.select %85, %118, %117 : vector<8x1024xi1>, vector<8x1024xf32>
    %c56 = arith.constant 56 : index
    %c0_47 = arith.constant 0 : index
    %120 = vector.load %arg12[%c56, %c0_47] : memref<72x1024xf32, #tpu.memory_space<vmem>>, vector<8x1024xf32>
    tpu.vector_store %arg12[%c56, %c0_47], %119 {strides = array<i32>} : memref<72x1024xf32, #tpu.memory_space<vmem>>, vector<8x1024xf32>,
    %c991_i32 = arith.constant 991 : i32
    %121 = tpu.dynamic_rotate %55 by %c991_i32 dim 1 : vector<8x1024xf32>, i32 -> vector<8x1024xf32>
    %cst_48 = arith.constant 0.000000e+00 : f32
    %122 = vector.broadcast %cst_48 : f32 to vector<8x1024xf32>
    %123 = arith.select %85, %122, %121 : vector<8x1024xi1>, vector<8x1024xf32>
    %cst_49 = arith.constant 0.000000e+00 : f32
    %124 = vector.broadcast %cst_49 : f32 to vector<8x1024xf32>
    %125 = arith.select %75, %124, %123 : vector<8x1024xi1>, vector<8x1024xf32>
    %c64 = arith.constant 64 : index
    %c0_50 = arith.constant 0 : index
    %126 = vector.load %arg12[%c64, %c0_50] : memref<72x1024xf32, #tpu.memory_space<vmem>>, vector<8x1024xf32>
    tpu.vector_store %arg12[%c64, %c0_50], %125 {strides = array<i32>} : memref<72x1024xf32, #tpu.memory_space<vmem>>, vector<8x1024xf32>,
    %c0_51 = arith.constant 0 : index
    %c0_52 = arith.constant 0 : index
    %127 = vector.load %arg4[%c0_51, %c0_52] : memref<8x72xf32, #tpu.memory_space<vmem>>, vector<8x72xf32>
    %c0_53 = arith.constant 0 : index
    %c0_54 = arith.constant 0 : index
    %128 = vector.load %arg12[%c0_53, %c0_54] : memref<72x1024xf32, #tpu.memory_space<vmem>>, vector<72x1024xf32>
    %cst_55 = arith.constant dense<0.000000e+00> : vector<8x1024xf32>
    %129 = tpu.matmul %127, %128, %cst_55 {dimension_numbers = #tpu.dot_dimension_numbers<[1], [0], [0], [1], [0, 0, 1, 1], [], []>} : vector<8x72xf32>, vector<72x1024xf32>, vector<8x1024xf32> -> vector<8x1024xf32>
    %c0_56 = arith.constant 0 : index
    %c0_57 = arith.constant 0 : index
    %130 = vector.load %arg5[%c0_56, %c0_57] : memref<8x1xf32, #tpu.memory_space<vmem>>, vector<8x1xf32>
    %131 = vector.broadcast %130 : vector<8x1xf32> to vector<8x1024xf32>
    %132 = arith.addf %129, %131 : vector<8x1024xf32>
    %cst_58 = arith.constant 2.000000e-01 : f32
    %133 = vector.broadcast %cst_58 : f32 to vector<8x1024xf32>
    %134 = arith.mulf %133, %132 : vector<8x1024xf32>
    %135 = arith.maximumf %132, %134 : vector<8x1024xf32>
    %c33_i32_59 = arith.constant 33 : i32
    %136 = tpu.dynamic_rotate %135 by %c33_i32_59 dim 1 : vector<8x1024xf32>, i32 -> vector<8x1024xf32>
    %cst_60 = arith.constant 0.000000e+00 : f32
    %137 = vector.broadcast %cst_60 : f32 to vector<8x1024xf32>
    %138 = arith.select %80, %137, %136 : vector<8x1024xi1>, vector<8x1024xf32>
    %cst_61 = arith.constant 0.000000e+00 : f32
    %139 = vector.broadcast %cst_61 : f32 to vector<8x1024xf32>
    %140 = arith.select %70, %139, %138 : vector<8x1024xi1>, vector<8x1024xf32>
    %c0_62 = arith.constant 0 : index
    %c0_63 = arith.constant 0 : index
    %141 = vector.load %arg13[%c0_62, %c0_63] : memref<72x1024xf32, #tpu.memory_space<vmem>>, vector<8x1024xf32>
    tpu.vector_store %arg13[%c0_62, %c0_63], %140 {strides = array<i32>} : memref<72x1024xf32, #tpu.memory_space<vmem>>, vector<8x1024xf32>,
    %c32_i32_64 = arith.constant 32 : i32
    %142 = tpu.dynamic_rotate %135 by %c32_i32_64 dim 1 : vector<8x1024xf32>, i32 -> vector<8x1024xf32>
    %cst_65 = arith.constant 0.000000e+00 : f32
    %143 = vector.broadcast %cst_65 : f32 to vector<8x1024xf32>
    %144 = arith.select %80, %143, %142 : vector<8x1024xi1>, vector<8x1024xf32>
    %c8_66 = arith.constant 8 : index
    %c0_67 = arith.constant 0 : index
    %145 = vector.load %arg13[%c8_66, %c0_67] : memref<72x1024xf32, #tpu.memory_space<vmem>>, vector<8x1024xf32>
    tpu.vector_store %arg13[%c8_66, %c0_67], %144 {strides = array<i32>} : memref<72x1024xf32, #tpu.memory_space<vmem>>, vector<8x1024xf32>,
    %c31_i32_68 = arith.constant 31 : i32
    %146 = tpu.dynamic_rotate %135 by %c31_i32_68 dim 1 : vector<8x1024xf32>, i32 -> vector<8x1024xf32>
    %cst_69 = arith.constant 0.000000e+00 : f32
    %147 = vector.broadcast %cst_69 : f32 to vector<8x1024xf32>
    %148 = arith.select %80, %147, %146 : vector<8x1024xi1>, vector<8x1024xf32>
    %cst_70 = arith.constant 0.000000e+00 : f32
    %149 = vector.broadcast %cst_70 : f32 to vector<8x1024xf32>
    %150 = arith.select %75, %149, %148 : vector<8x1024xi1>, vector<8x1024xf32>
    %c16_71 = arith.constant 16 : index
    %c0_72 = arith.constant 0 : index
    %151 = vector.load %arg13[%c16_71, %c0_72] : memref<72x1024xf32, #tpu.memory_space<vmem>>, vector<8x1024xf32>
    tpu.vector_store %arg13[%c16_71, %c0_72], %150 {strides = array<i32>} : memref<72x1024xf32, #tpu.memory_space<vmem>>, vector<8x1024xf32>,
    %c1_i32_73 = arith.constant 1 : i32
    %152 = tpu.dynamic_rotate %135 by %c1_i32_73 dim 1 : vector<8x1024xf32>, i32 -> vector<8x1024xf32>
    %cst_74 = arith.constant 0.000000e+00 : f32
    %153 = vector.broadcast %cst_74 : f32 to vector<8x1024xf32>
    %154 = arith.select %70, %153, %152 : vector<8x1024xi1>, vector<8x1024xf32>
    %c24_75 = arith.constant 24 : index
    %c0_76 = arith.constant 0 : index
    %155 = vector.load %arg13[%c24_75, %c0_76] : memref<72x1024xf32, #tpu.memory_space<vmem>>, vector<8x1024xf32>
    tpu.vector_store %arg13[%c24_75, %c0_76], %154 {strides = array<i32>} : memref<72x1024xf32, #tpu.memory_space<vmem>>, vector<8x1024xf32>,
    %c32_77 = arith.constant 32 : index
    %c0_78 = arith.constant 0 : index
    %156 = vector.load %arg13[%c32_77, %c0_78] : memref<72x1024xf32, #tpu.memory_space<vmem>>, vector<8x1024xf32>
    tpu.vector_store %arg13[%c32_77, %c0_78], %135 {strides = array<i32>} : memref<72x1024xf32, #tpu.memory_space<vmem>>, vector<8x1024xf32>,
    %c1023_i32_79 = arith.constant 1023 : i32
    %157 = tpu.dynamic_rotate %135 by %c1023_i32_79 dim 1 : vector<8x1024xf32>, i32 -> vector<8x1024xf32>
    %cst_80 = arith.constant 0.000000e+00 : f32
    %158 = vector.broadcast %cst_80 : f32 to vector<8x1024xf32>
    %159 = arith.select %75, %158, %157 : vector<8x1024xi1>, vector<8x1024xf32>
    %c40_81 = arith.constant 40 : index
    %c0_82 = arith.constant 0 : index
    %160 = vector.load %arg13[%c40_81, %c0_82] : memref<72x1024xf32, #tpu.memory_space<vmem>>, vector<8x1024xf32>
    tpu.vector_store %arg13[%c40_81, %c0_82], %159 {strides = array<i32>} : memref<72x1024xf32, #tpu.memory_space<vmem>>, vector<8x1024xf32>,
    %c993_i32_83 = arith.constant 993 : i32
    %161 = tpu.dynamic_rotate %135 by %c993_i32_83 dim 1 : vector<8x1024xf32>, i32 -> vector<8x1024xf32>
    %cst_84 = arith.constant 0.000000e+00 : f32
    %162 = vector.broadcast %cst_84 : f32 to vector<8x1024xf32>
    %163 = arith.select %85, %162, %161 : vector<8x1024xi1>, vector<8x1024xf32>
    %cst_85 = arith.constant 0.000000e+00 : f32
    %164 = vector.broadcast %cst_85 : f32 to vector<8x1024xf32>
    %165 = arith.select %70, %164, %163 : vector<8x1024xi1>, vector<8x1024xf32>
    %c48_86 = arith.constant 48 : index
    %c0_87 = arith.constant 0 : index
    %166 = vector.load %arg13[%c48_86, %c0_87] : memref<72x1024xf32, #tpu.memory_space<vmem>>, vector<8x1024xf32>
    tpu.vector_store %arg13[%c48_86, %c0_87], %165 {strides = array<i32>} : memref<72x1024xf32, #tpu.memory_space<vmem>>, vector<8x1024xf32>,
    %c992_i32_88 = arith.constant 992 : i32
    %167 = tpu.dynamic_rotate %135 by %c992_i32_88 dim 1 : vector<8x1024xf32>, i32 -> vector<8x1024xf32>
    %cst_89 = arith.constant 0.000000e+00 : f32
    %168 = vector.broadcast %cst_89 : f32 to vector<8x1024xf32>
    %169 = arith.select %85, %168, %167 : vector<8x1024xi1>, vector<8x1024xf32>
    %c56_90 = arith.constant 56 : index
    %c0_91 = arith.constant 0 : index
    %170 = vector.load %arg13[%c56_90, %c0_91] : memref<72x1024xf32, #tpu.memory_space<vmem>>, vector<8x1024xf32>
    tpu.vector_store %arg13[%c56_90, %c0_91], %169 {strides = array<i32>} : memref<72x1024xf32, #tpu.memory_space<vmem>>, vector<8x1024xf32>,
    %c991_i32_92 = arith.constant 991 : i32
    %171 = tpu.dynamic_rotate %135 by %c991_i32_92 dim 1 : vector<8x1024xf32>, i32 -> vector<8x1024xf32>
    %cst_93 = arith.constant 0.000000e+00 : f32
    %172 = vector.broadcast %cst_93 : f32 to vector<8x1024xf32>
    %173 = arith.select %85, %172, %171 : vector<8x1024xi1>, vector<8x1024xf32>
    %cst_94 = arith.constant 0.000000e+00 : f32
    %174 = vector.broadcast %cst_94 : f32 to vector<8x1024xf32>
    %175 = arith.select %75, %174, %173 : vector<8x1024xi1>, vector<8x1024xf32>
    %c64_95 = arith.constant 64 : index
    %c0_96 = arith.constant 0 : index
    %176 = vector.load %arg13[%c64_95, %c0_96] : memref<72x1024xf32, #tpu.memory_space<vmem>>, vector<8x1024xf32>
    tpu.vector_store %arg13[%c64_95, %c0_96], %175 {strides = array<i32>} : memref<72x1024xf32, #tpu.memory_space<vmem>>, vector<8x1024xf32>,
    %c0_97 = arith.constant 0 : index
    %c0_98 = arith.constant 0 : index
    %177 = vector.load %arg6[%c0_97, %c0_98] : memref<8x72xf32, #tpu.memory_space<vmem>>, vector<8x72xf32>
    %c0_99 = arith.constant 0 : index
    %c0_100 = arith.constant 0 : index
    %178 = vector.load %arg13[%c0_99, %c0_100] : memref<72x1024xf32, #tpu.memory_space<vmem>>, vector<72x1024xf32>
    %cst_101 = arith.constant dense<0.000000e+00> : vector<8x1024xf32>
    %179 = tpu.matmul %177, %178, %cst_101 {dimension_numbers = #tpu.dot_dimension_numbers<[1], [0], [0], [1], [0, 0, 1, 1], [], []>} : vector<8x72xf32>, vector<72x1024xf32>, vector<8x1024xf32> -> vector<8x1024xf32>
    %c0_102 = arith.constant 0 : index
    %c0_103 = arith.constant 0 : index
    %180 = vector.load %arg7[%c0_102, %c0_103] : memref<8x1xf32, #tpu.memory_space<vmem>>, vector<8x1xf32>
    %181 = vector.broadcast %180 : vector<8x1xf32> to vector<8x1024xf32>
    %182 = arith.addf %179, %181 : vector<8x1024xf32>
    %cst_104 = arith.constant 2.000000e-01 : f32
    %183 = vector.broadcast %cst_104 : f32 to vector<8x1024xf32>
    %184 = arith.mulf %183, %182 : vector<8x1024xf32>
    %185 = arith.maximumf %182, %184 : vector<8x1024xf32>
    %c0_105 = arith.constant 0 : index
    %c0_106 = arith.constant 0 : index
    %186 = vector.load %arg8[%c0_105, %c0_106] : memref<8x4xf32, #tpu.memory_space<vmem>>, vector<8x4xf32>
    %c0_107 = arith.constant 0 : index
    %c0_108 = arith.constant 0 : index
    %187 = vector.load %arg1[%c0_107, %c0_108] : memref<4x1024xf32, #tpu.memory_space<vmem>>, vector<4x1024xf32>
    %cst_109 = arith.constant dense<0.000000e+00> : vector<8x1024xf32>
    %188 = tpu.matmul %186, %187, %cst_109 {dimension_numbers = #tpu.dot_dimension_numbers<[1], [0], [0], [1], [0, 0, 1, 1], [], []>} : vector<8x4xf32>, vector<4x1024xf32>, vector<8x1024xf32> -> vector<8x1024xf32>
    %189 = arith.andi %60, %65 : vector<8x1024xi1>
    %cst_110 = arith.constant 0.000000e+00 : f32
    %190 = vector.broadcast %cst_110 : f32 to vector<8x1024xf32>
    %191 = arith.select %189, %188, %190 : vector<8x1024xi1>, vector<8x1024xf32>
    %192 = arith.addf %185, %191 : vector<8x1024xf32>
    %c0_111 = arith.constant 0 : index
    %c0_112 = arith.constant 0 : index
    %193 = vector.load %arg9[%c0_111, %c0_112] : memref<8x1xf32, #tpu.memory_space<vmem>>, vector<8x1xf32>
    %194 = vector.broadcast %193 : vector<8x1xf32> to vector<8x1024xf32>
    %195 = arith.addf %192, %194 : vector<8x1024xf32>
    %c0_113 = arith.constant 0 : index
    %c0_114 = arith.constant 0 : index
    %196 = vector.load %arg10[%c0_113, %c0_114] : memref<8x1024xf32, #tpu.memory_space<vmem>>, vector<8x1024xf32>
    tpu.vector_store %arg10[%c0_113, %c0_114], %195 {strides = array<i32>} : memref<8x1024xf32, #tpu.memory_space<vmem>>, vector<8x1024xf32>,
    return
  }
  func.func @transform_0(%arg0: i32) -> (i32, i32) {
    %c0_i32 = arith.constant 0 : i32
    %c0_i32_0 = arith.constant 0 : i32
    %c0_i32_1 = arith.constant 0 : i32
    return %c0_i32, %c0_i32_0 : i32, i32
  }
  func.func @transform_1(%arg0: i32) -> (i32, i32) {
    %c0_i32 = arith.constant 0 : i32
    %c0_i32_0 = arith.constant 0 : i32
    %c0_i32_1 = arith.constant 0 : i32
    return %c0_i32, %c0_i32_0 : i32, i32
  }
  func.func @transform_2(%arg0: i32) -> (i32, i32) {
    %c0_i32 = arith.constant 0 : i32
    %c0_i32_0 = arith.constant 0 : i32
    %c0_i32_1 = arith.constant 0 : i32
    return %c0_i32, %c0_i32_0 : i32, i32
  }
  func.func @transform_3(%arg0: i32) -> (i32, i32) {
    %c0_i32 = arith.constant 0 : i32
    %c0_i32_0 = arith.constant 0 : i32
    %c0_i32_1 = arith.constant 0 : i32
    return %c0_i32, %c0_i32_0 : i32, i32
  }
  func.func @transform_4(%arg0: i32) -> (i32, i32) {
    %c0_i32 = arith.constant 0 : i32
    %c0_i32_0 = arith.constant 0 : i32
    %c0_i32_1 = arith.constant 0 : i32
    return %c0_i32, %c0_i32_0 : i32, i32
  }
  func.func @transform_5(%arg0: i32) -> (i32, i32) {
    %c0_i32 = arith.constant 0 : i32
    %c0_i32_0 = arith.constant 0 : i32
    %c0_i32_1 = arith.constant 0 : i32
    return %c0_i32, %c0_i32_0 : i32, i32
  }
  func.func @transform_6(%arg0: i32) -> (i32, i32) {
    %c0_i32 = arith.constant 0 : i32
    %c0_i32_0 = arith.constant 0 : i32
    %c0_i32_1 = arith.constant 0 : i32
    return %c0_i32, %c0_i32_0 : i32, i32
  }
  func.func @transform_7(%arg0: i32) -> (i32, i32) {
    %c0_i32 = arith.constant 0 : i32
    %c0_i32_0 = arith.constant 0 : i32
    %c0_i32_1 = arith.constant 0 : i32
    return %c0_i32, %c0_i32_0 : i32, i32
  }
  func.func @transform_8(%arg0: i32) -> (i32, i32) {
    %c0_i32 = arith.constant 0 : i32
    %c0_i32_0 = arith.constant 0 : i32
    %c0_i32_1 = arith.constant 0 : i32
    return %c0_i32, %c0_i32_0 : i32, i32
  }
  func.func @transform_9(%arg0: i32) -> (i32, i32) {
    %c0_i32 = arith.constant 0 : i32
    %c0_i32_0 = arith.constant 0 : i32
    %c0_i32_1 = arith.constant 0 : i32
    return %c0_i32, %c0_i32_0 : i32, i32
  }
}

</mosaic_0001>

<llo_original>
// kernel: tpu_custom_call.1
$region0: #{tpu_custom_call.1}
  #allocation0 [shape = 'u32[]', space=smem, size = 0x4, offset = 0x4, fixed_abs, tag = 'smem constant byte address 0x4 - core index']
  #allocation1 [shape = 'u32[144,128]{1,0:T(1,128)}', space=vmem, size = 0x12000, scoped, tag = 'internal scratch']
  #allocation2 [shape = 'f32[8,1024]{1,0:T(8,128)}', space=vmem, size = 0x8000, scoped, tag = 'scratch operand']
  #allocation3 [shape = 'f32[72,1024]{1,0:T(8,128)}', space=vmem, size = 0x48000, scoped, tag = 'scratch operand']
  #allocation4 [shape = 'f32[72,1024]{1,0:T(8,128)}', space=vmem, size = 0x48000, scoped, tag = 'scratch operand']
  %s0 = inlined_call_operand.vmem [shape: f32[4,1024], index: 0, kind: input, shape index: {}]
  %s1 = inlined_call_operand.hbm [shape: f32[4,1024], index: 1, kind: input, shape index: {}]
  %s2 = inlined_call_operand.hbm [shape: f32[6,1024], index: 2, kind: input, shape index: {}]
  %s3 = inlined_call_operand.vmem [shape: f32[8,72], index: 3, kind: input, shape index: {}]
  %s4 = inlined_call_operand.vmem [shape: f32[8,1], index: 4, kind: input, shape index: {}]
  %s5 = inlined_call_operand.vmem [shape: f32[8,72], index: 5, kind: input, shape index: {}]
  %s6 = inlined_call_operand.vmem [shape: f32[8,1], index: 6, kind: input, shape index: {}]
  %s7 = inlined_call_operand.vmem [shape: f32[8,4], index: 7, kind: input, shape index: {}]
  %s8 = inlined_call_operand.vmem [shape: f32[8,1], index: 8, kind: input, shape index: {}]
  %s9 = inlined_call_operand.hbm [shape: f32[8,1024], index: 9, kind: output, shape index: {}]
  %s10 = sld [smem:[#allocation0]]
  $region54: #{tpu_custom_call.1} parent=0
    _
  %s12 = ssub.s32 1, %s10
  %s13 = scalar_select 0, %s12, %s10
  $region1: #{tpu_custom_call.1} parent=0
    #allocation5 [shape = 'u8[16384]{0}', space=vmem, size = 0x4000, scoped, tag = 'input window, operand 1, single buffered']
    #allocation6 [shape = 's32[1]{0}', space=sflag, size = 0x4, scoped, tag = 'scoped memory for tpu_custom_call.1']
    #allocation7 [shape = 's32[1]{0}', space=sflag, size = 0x4, scoped, tag = 'scoped memory for tpu_custom_call.1']
    #allocation8 [shape = 'u8[32768]{0}', space=vmem, size = 0x8000, scoped, tag = 'input window, operand 2, single buffered']
    #allocation9 [shape = 's32[1]{0}', space=sflag, size = 0x4, scoped, tag = 'scoped memory for tpu_custom_call.1']
    #allocation10 [shape = 'u8[32768]{0}', space=vmem, size = 0x8000, scoped, tag = 'output window, operand 0, single buffered']
    %14 = vsyncpa [#allocation6], 0
    %15 = vsyncpa [#allocation9], 0
    %16 = vsyncpa [#allocation7], 0
    // Predicated region
    $region2: #{tpu_custom_call.1} parent=1 // pred_check
      _
    $region3: #{tpu_custom_call.1} parent=1 // pred_check_branch
      %18 = sbr.rel (0) target = $region5
    $region4: #{tpu_custom_call.1} parent=1 // pred_region
      _
    $region5: #{tpu_custom_call.1} parent=1 // pred_fallthru
      _
    // Predicated region
    $region6: #{tpu_custom_call.1} parent=1 // pred_check
      _
    $region7: #{tpu_custom_call.1} parent=1 // pred_check_branch
      %20 = sbr.rel (0) target = $region9
    $region8: #{tpu_custom_call.1} parent=1 // pred_region
      %s22 = ssub.s32 512, 512
      %23 = vsyncadd [#allocation6], %s22
      %s25 = sshll.u32 [#allocation5], 4
      %s26 = int_to_ptr.vmem [resolvable:$true] %s25
      %28 = dma.hbm_to_vmem [thread:$0]  %s1, 512, %s26, [#allocation6]
    $region9: #{tpu_custom_call.1} parent=1 // pred_fallthru
      _
    // Predicated region
    $region10: #{tpu_custom_call.1} parent=1 // pred_check
      _
    $region11: #{tpu_custom_call.1} parent=1 // pred_check_branch
      %30 = sbr.rel (0) target = $region13
    $region12: #{tpu_custom_call.1} parent=1 // pred_region
      %s32 = ssub.s32 1024, 1024
      %33 = vsyncadd [#allocation9], %s32
      %s35 = sshll.u32 [#allocation8], 4
      %s36 = int_to_ptr.vmem [resolvable:$true] %s35
      %38 = dma.hbm_to_vmem [thread:$0]  %s2, 1024, %s36, [#allocation9]
    $region13: #{tpu_custom_call.1} parent=1 // pred_fallthru
      _
    // Predicated region
    $region14: #{tpu_custom_call.1} parent=1 // pred_check
      _
    $region15: #{tpu_custom_call.1} parent=1 // pred_check_branch
      %40 = sbr.rel (0) target = $region17
    $region16: #{tpu_custom_call.1} parent=1 // pred_region
      _
    $region17: #{tpu_custom_call.1} parent=1 // pred_fallthru
      _
    // Predicated region
    $region18: #{tpu_custom_call.1} parent=1 // pred_check
      _
    $region19: #{tpu_custom_call.1} parent=1 // pred_check_branch
      %42 = sbr.rel (0) target = $region21
    $region20: #{tpu_custom_call.1} parent=1 // pred_region
      _
    $region21: #{tpu_custom_call.1} parent=1 // pred_fallthru
      _
    // Predicated region
    $region22: #{tpu_custom_call.1} parent=1 // pred_check
      _
    $region23: #{tpu_custom_call.1} parent=1 // pred_check_branch
      %44 = sbr.rel (0) target = $region25
    $region24: #{tpu_custom_call.1} parent=1 // pred_region
      _
    $region25: #{tpu_custom_call.1} parent=1 // pred_fallthru
      _
    // Predicated region
    $region26: #{tpu_custom_call.1} parent=1 // pred_check
      _
    $region27: #{tpu_custom_call.1} parent=1 // pred_check_branch
      %46 = sbr.rel (0) target = $region29
    $region28: #{tpu_custom_call.1} parent=1 // pred_region
      _
    $region29: #{tpu_custom_call.1} parent=1 // pred_fallthru
      _
    // Predicated region
    $region30: #{tpu_custom_call.1} parent=1 // pred_check
      _
    $region31: #{tpu_custom_call.1} parent=1 // pred_check_branch
      %48 = sbr.rel (0) target = $region33
    $region32: #{tpu_custom_call.1} parent=1 // pred_region
      _
    $region33: #{tpu_custom_call.1} parent=1 // pred_fallthru
      _
    // Predicated region
    $region34: #{tpu_custom_call.1} parent=1 // pred_check
      _
    $region35: #{tpu_custom_call.1} parent=1 // pred_check_branch
      %50 = sbr.rel (0) target = $region37
    $region36: #{tpu_custom_call.1} parent=1 // pred_region
      _
    $region37: #{tpu_custom_call.1} parent=1 // pred_fallthru
      _
    // Predicated region
    $region38: #{tpu_custom_call.1} parent=1 // pred_check
      _
    $region39: #{tpu_custom_call.1} parent=1 // pred_check_branch
      %52 = sbr.rel (0) target = $region41
    $region40: #{tpu_custom_call.1} parent=1 // pred_region
      %53 = dma.done [#allocation6], 512
    $region41: #{tpu_custom_call.1} parent=1 // pred_fallthru
      _
    // Predicated region
    $region42: #{tpu_custom_call.1} parent=1 // pred_check
      _
    $region43: #{tpu_custom_call.1} parent=1 // pred_check_branch
      %55 = sbr.rel (0) target = $region45
    $region44: #{tpu_custom_call.1} parent=1 // pred_region
      %56 = dma.done [#allocation9], 1024
    $region45: #{tpu_custom_call.1} parent=1 // pred_fallthru
      _
    %v57 = vld [vmem:[#allocation8] sm:$0x3f]
    %v58 = vld [vmem:[#allocation8 + $0x8] sm:$0x3f]
    %v59 = vld [vmem:[#allocation8 + $0x10] sm:$0x3f]
    %v60 = vld [vmem:[#allocation8 + $0x18] sm:$0x3f]
    %v61 = vld [vmem:[#allocation8 + $0x20] sm:$0x3f]
    %v62 = vld [vmem:[#allocation8 + $0x28] sm:$0x3f]
    %v63 = vld [vmem:[#allocation8 + $0x30] sm:$0x3f]
    %v64 = vld [vmem:[#allocation8 + $0x38] sm:$0x3f]
    %v65 = vlaneseq
    %v66 = vshrl.u32 %v65, 7
    %v67 = vsub.s32 0, %v66
    %v68 = vrot.slane %v57, %v67
    %v69 = vlaneseq
    %v70 = vshrl.u32 %v69, 7
    %v71 = vsub.s32 0, %v70
    %v72 = vrot.slane %v58, %v71
    %v73 = vlaneseq
    %v74 = vshrl.u32 %v73, 7
    %v75 = vsub.s32 0, %v74
    %v76 = vrot.slane %v59, %v75
    %v77 = vlaneseq
    %v78 = vshrl.u32 %v77, 7
    %v79 = vsub.s32 0, %v78
    %v80 = vrot.slane %v60, %v79
    %v81 = vlaneseq
    %v82 = vshrl.u32 %v81, 7
    %v83 = vsub.s32 0, %v82
    %v84 = vrot.slane %v61, %v83
    %v85 = vlaneseq
    %v86 = vshrl.u32 %v85, 7
    %v87 = vsub.s32 0, %v86
    %v88 = vrot.slane %v62, %v87
    %v89 = vlaneseq
    %v90 = vshrl.u32 %v89, 7
    %v91 = vsub.s32 0, %v90
    %v92 = vrot.slane %v63, %v91
    %v93 = vlaneseq
    %v94 = vshrl.u32 %v93, 7
    %v95 = vsub.s32 0, %v94
    %v96 = vrot.slane %v64, %v95
    %vm97 = vcmp.gt.f32.partialorder %v68, 0.5
    %vm98 = vcmp.gt.f32.partialorder %v72, 0.5
    %vm99 = vcmp.gt.f32.partialorder %v76, 0.5
    %vm100 = vcmp.gt.f32.partialorder %v80, 0.5
    %vm101 = vcmp.gt.f32.partialorder %v84, 0.5
    %vm102 = vcmp.gt.f32.partialorder %v88, 0.5
    %vm103 = vcmp.gt.f32.partialorder %v92, 0.5
    %vm104 = vcmp.gt.f32.partialorder %v96, 0.5
    %v105 = vlaneseq
    %v106 = vshrl.u32 %v105, 7
    %v107 = vsub.s32 1, %v106
    %v108 = vrot.slane %v57, %v107
    %v109 = vlaneseq
    %v110 = vshrl.u32 %v109, 7
    %v111 = vsub.s32 1, %v110
    %v112 = vrot.slane %v58, %v111
    %v113 = vlaneseq
    %v114 = vshrl.u32 %v113, 7
    %v115 = vsub.s32 1, %v114
    %v116 = vrot.slane %v59, %v115
    %v117 = vlaneseq
    %v118 = vshrl.u32 %v117, 7
    %v119 = vsub.s32 1, %v118
    %v120 = vrot.slane %v60, %v119
    %v121 = vlaneseq
    %v122 = vshrl.u32 %v121, 7
    %v123 = vsub.s32 1, %v122
    %v124 = vrot.slane %v61, %v123
    %v125 = vlaneseq
    %v126 = vshrl.u32 %v125, 7
    %v127 = vsub.s32 1, %v126
    %v128 = vrot.slane %v62, %v127
    %v129 = vlaneseq
    %v130 = vshrl.u32 %v129, 7
    %v131 = vsub.s32 1, %v130
    %v132 = vrot.slane %v63, %v131
    %v133 = vlaneseq
    %v134 = vshrl.u32 %v133, 7
    %v135 = vsub.s32 1, %v134
    %v136 = vrot.slane %v64, %v135
    %vm137 = vcmp.gt.f32.partialorder %v108, 0.5
    %vm138 = vcmp.gt.f32.partialorder %v112, 0.5
    %vm139 = vcmp.gt.f32.partialorder %v116, 0.5
    %vm140 = vcmp.gt.f32.partialorder %v120, 0.5
    %vm141 = vcmp.gt.f32.partialorder %v124, 0.5
    %vm142 = vcmp.gt.f32.partialorder %v128, 0.5
    %vm143 = vcmp.gt.f32.partialorder %v132, 0.5
    %vm144 = vcmp.gt.f32.partialorder %v136, 0.5
    %v145 = vlaneseq
    %v146 = vshrl.u32 %v145, 7
    %v147 = vsub.s32 2, %v146
    %v148 = vrot.slane %v57, %v147
    %v149 = vlaneseq
    %v150 = vshrl.u32 %v149, 7
    %v151 = vsub.s32 2, %v150
    %v152 = vrot.slane %v58, %v151
    %v153 = vlaneseq
    %v154 = vshrl.u32 %v153, 7
    %v155 = vsub.s32 2, %v154
    %v156 = vrot.slane %v59, %v155
    %v157 = vlaneseq
    %v158 = vshrl.u32 %v157, 7
    %v159 = vsub.s32 2, %v158
    %v160 = vrot.slane %v60, %v159
    %v161 = vlaneseq
    %v162 = vshrl.u32 %v161, 7
    %v163 = vsub.s32 2, %v162
    %v164 = vrot.slane %v61, %v163
    %v165 = vlaneseq
    %v166 = vshrl.u32 %v165, 7
    %v167 = vsub.s32 2, %v166
    %v168 = vrot.slane %v62, %v167
    %v169 = vlaneseq
    %v170 = vshrl.u32 %v169, 7
    %v171 = vsub.s32 2, %v170
    %v172 = vrot.slane %v63, %v171
    %v173 = vlaneseq
    %v174 = vshrl.u32 %v173, 7
    %v175 = vsub.s32 2, %v174
    %v176 = vrot.slane %v64, %v175
    %vm177 = vcmp.gt.f32.partialorder %v148, 0.5
    %vm178 = vcmp.gt.f32.partialorder %v152, 0.5
    %vm179 = vcmp.gt.f32.partialorder %v156, 0.5
    %vm180 = vcmp.gt.f32.partialorder %v160, 0.5
    %vm181 = vcmp.gt.f32.partialorder %v164, 0.5
    %vm182 = vcmp.gt.f32.partialorder %v168, 0.5
    %vm183 = vcmp.gt.f32.partialorder %v172, 0.5
    %vm184 = vcmp.gt.f32.partialorder %v176, 0.5
    %v185 = vlaneseq
    %v186 = vshrl.u32 %v185, 7
    %v187 = vsub.s32 3, %v186
    %v188 = vrot.slane %v57, %v187
    %v189 = vlaneseq
    %v190 = vshrl.u32 %v189, 7
    %v191 = vsub.s32 3, %v190
    %v192 = vrot.slane %v58, %v191
    %v193 = vlaneseq
    %v194 = vshrl.u32 %v193, 7
    %v195 = vsub.s32 3, %v194
    %v196 = vrot.slane %v59, %v195
    %v197 = vlaneseq
    %v198 = vshrl.u32 %v197, 7
    %v199 = vsub.s32 3, %v198
    %v200 = vrot.slane %v60, %v199
    %v201 = vlaneseq
    %v202 = vshrl.u32 %v201, 7
    %v203 = vsub.s32 3, %v202
    %v204 = vrot.slane %v61, %v203
    %v205 = vlaneseq
    %v206 = vshrl.u32 %v205, 7
    %v207 = vsub.s32 3, %v206
    %v208 = vrot.slane %v62, %v207
    %v209 = vlaneseq
    %v210 = vshrl.u32 %v209, 7
    %v211 = vsub.s32 3, %v210
    %v212 = vrot.slane %v63, %v211
    %v213 = vlaneseq
    %v214 = vshrl.u32 %v213, 7
    %v215 = vsub.s32 3, %v214
    %v216 = vrot.slane %v64, %v215
    %vm217 = vcmp.gt.f32.partialorder %v188, 0.5
    %vm218 = vcmp.gt.f32.partialorder %v192, 0.5
    %vm219 = vcmp.gt.f32.partialorder %v196, 0.5
    %vm220 = vcmp.gt.f32.partialorder %v200, 0.5
    %vm221 = vcmp.gt.f32.partialorder %v204, 0.5
    %vm222 = vcmp.gt.f32.partialorder %v208, 0.5
    %vm223 = vcmp.gt.f32.partialorder %v212, 0.5
    %vm224 = vcmp.gt.f32.partialorder %v216, 0.5
    %v225 = vlaneseq
    %v226 = vshrl.u32 %v225, 7
    %v227 = vsub.s32 4, %v226
    %v228 = vrot.slane %v57, %v227
    %v229 = vlaneseq
    %v230 = vshrl.u32 %v229, 7
    %v231 = vsub.s32 4, %v230
    %v232 = vrot.slane %v58, %v231
    %v233 = vlaneseq
    %v234 = vshrl.u32 %v233, 7
    %v235 = vsub.s32 4, %v234
    %v236 = vrot.slane %v59, %v235
    %v237 = vlaneseq
    %v238 = vshrl.u32 %v237, 7
    %v239 = vsub.s32 4, %v238
    %v240 = vrot.slane %v60, %v239
    %v241 = vlaneseq
    %v242 = vshrl.u32 %v241, 7
    %v243 = vsub.s32 4, %v242
    %v244 = vrot.slane %v61, %v243
    %v245 = vlaneseq
    %v246 = vshrl.u32 %v245, 7
    %v247 = vsub.s32 4, %v246
    %v248 = vrot.slane %v62, %v247
    %v249 = vlaneseq
    %v250 = vshrl.u32 %v249, 7
    %v251 = vsub.s32 4, %v250
    %v252 = vrot.slane %v63, %v251
    %v253 = vlaneseq
    %v254 = vshrl.u32 %v253, 7
    %v255 = vsub.s32 4, %v254
    %v256 = vrot.slane %v64, %v255
    %vm257 = vcmp.gt.f32.partialorder %v228, 0.5
    %vm258 = vcmp.gt.f32.partialorder %v232, 0.5
    %vm259 = vcmp.gt.f32.partialorder %v236, 0.5
    %vm260 = vcmp.gt.f32.partialorder %v240, 0.5
    %vm261 = vcmp.gt.f32.partialorder %v244, 0.5
    %vm262 = vcmp.gt.f32.partialorder %v248, 0.5
    %vm263 = vcmp.gt.f32.partialorder %v252, 0.5
    %vm264 = vcmp.gt.f32.partialorder %v256, 0.5
    %v265 = vlaneseq
    %v266 = vshrl.u32 %v265, 7
    %v267 = vsub.s32 5, %v266
    %v268 = vrot.slane %v57, %v267
    %v269 = vlaneseq
    %v270 = vshrl.u32 %v269, 7
    %v271 = vsub.s32 5, %v270
    %v272 = vrot.slane %v58, %v271
    %v273 = vlaneseq
    %v274 = vshrl.u32 %v273, 7
    %v275 = vsub.s32 5, %v274
    %v276 = vrot.slane %v59, %v275
    %v277 = vlaneseq
    %v278 = vshrl.u32 %v277, 7
    %v279 = vsub.s32 5, %v278
    %v280 = vrot.slane %v60, %v279
    %v281 = vlaneseq
    %v282 = vshrl.u32 %v281, 7
    %v283 = vsub.s32 5, %v282
    %v284 = vrot.slane %v61, %v283
    %v285 = vlaneseq
    %v286 = vshrl.u32 %v285, 7
    %v287 = vsub.s32 5, %v286
    %v288 = vrot.slane %v62, %v287
    %v289 = vlaneseq
    %v290 = vshrl.u32 %v289, 7
    %v291 = vsub.s32 5, %v290
    %v292 = vrot.slane %v63, %v291
    %v293 = vlaneseq
    %v294 = vshrl.u32 %v293, 7
    %v295 = vsub.s32 5, %v294
    %v296 = vrot.slane %v64, %v295
    %vm297 = vcmp.gt.f32.partialorder %v268, 0.5
    %vm298 = vcmp.gt.f32.partialorder %v272, 0.5
    %vm299 = vcmp.gt.f32.partialorder %v276, 0.5
    %vm300 = vcmp.gt.f32.partialorder %v280, 0.5
    %vm301 = vcmp.gt.f32.partialorder %v284, 0.5
    %vm302 = vcmp.gt.f32.partialorder %v288, 0.5
    %vm303 = vcmp.gt.f32.partialorder %v292, 0.5
    %vm304 = vcmp.gt.f32.partialorder %v296, 0.5
    %v305 = vld [vmem:[%s0] sm:$0xff]
    %v306 = vld [vmem:[%s0 + $0x8] sm:$0xff]
    %v307 = vld [vmem:[%s0 + $0x10] sm:$0xff]
    %v308 = vld [vmem:[%s0 + $0x18] sm:$0xff]
    %v313 = vcombine.high %v305, %v305
    %v314 = vcombine.high %v306, %v306
    %v315 = vcombine.high %v307, %v307
    %v316 = vcombine.high %v308, %v308
    %321 = vrot.lane.b32.xlu0 %v305, 1
    %v322 = vpop.permute.xlu0 %321
    %323 = vrot.lane.b32.xlu0 %v313, 1
    %v324 = vpop.permute.xlu0 %323
    %325 = vrot.lane.b32.xlu0 %v306, 1
    %v326 = vpop.permute.xlu0 %325
    %327 = vrot.lane.b32.xlu0 %v314, 1
    %v328 = vpop.permute.xlu0 %327
    %329 = vrot.lane.b32.xlu0 %v307, 1
    %v330 = vpop.permute.xlu0 %329
    %331 = vrot.lane.b32.xlu0 %v315, 1
    %v332 = vpop.permute.xlu0 %331
    %333 = vrot.lane.b32.xlu0 %v308, 1
    %v334 = vpop.permute.xlu0 %333
    %335 = vrot.lane.b32.xlu0 %v316, 1
    %v336 = vpop.permute.xlu0 %335
    %v337 = vlaneseq
    %v338 = vand.u32 %v337, 127
    %vm339 = vcmp.lt.s32.totalorder %v338, 1
    %v340 = vsel %vm339, %v334, %v336
    %v341 = vsel %vm339, %v332, %v334
    %v342 = vsel %vm339, %v330, %v332
    %v343 = vsel %vm339, %v328, %v330
    %v344 = vsel %vm339, %v326, %v328
    %v345 = vsel %vm339, %v324, %v326
    %v346 = vsel %vm339, %v322, %v324
    %v347 = vsel %vm339, %v336, %v322
    %v348 = vsel %vm177, %v305, %v347
    %v349 = vsel %vm178, %v313, %v346
    %v350 = vsel %vm179, %v306, %v345
    %v351 = vsel %vm180, %v314, %v344
    %v352 = vsel %vm181, %v307, %v343
    %v353 = vsel %vm182, %v315, %v342
    %v354 = vsel %vm183, %v308, %v341
    %v355 = vsel %vm184, %v316, %v340
    %356 = vrot.lane.b32.xlu0 %v305, 127
    %v357 = vpop.permute.xlu0 %356
    %358 = vrot.lane.b32.xlu0 %v313, 127
    %v359 = vpop.permute.xlu0 %358
    %360 = vrot.lane.b32.xlu0 %v306, 127
    %v361 = vpop.permute.xlu0 %360
    %362 = vrot.lane.b32.xlu0 %v314, 127
    %v363 = vpop.permute.xlu0 %362
    %364 = vrot.lane.b32.xlu0 %v307, 127
    %v365 = vpop.permute.xlu0 %364
    %366 = vrot.lane.b32.xlu0 %v315, 127
    %v367 = vpop.permute.xlu0 %366
    %368 = vrot.lane.b32.xlu0 %v308, 127
    %v369 = vpop.permute.xlu0 %368
    %370 = vrot.lane.b32.xlu0 %v316, 127
    %v371 = vpop.permute.xlu0 %370
    %vm372 = vcmp.lt.s32.totalorder %v338, 127
    %v373 = vsel %vm372, %v369, %v371
    %v374 = vsel %vm372, %v367, %v369
    %v375 = vsel %vm372, %v365, %v367
    %v376 = vsel %vm372, %v363, %v365
    %v377 = vsel %vm372, %v361, %v363
    %v378 = vsel %vm372, %v359, %v361
    %v379 = vsel %vm372, %v357, %v359
    %v380 = vsel %vm372, %v371, %v357
    %v381 = vsel %vm217, %v305, %v379
    %v382 = vsel %vm218, %v313, %v378
    %v383 = vsel %vm219, %v306, %v377
    %v384 = vsel %vm220, %v314, %v376
    %v385 = vsel %vm221, %v307, %v375
    %v386 = vsel %vm222, %v315, %v374
    %v387 = vsel %vm223, %v308, %v373
    %v388 = vsel %vm224, %v316, %v380
    %v389 = vmul.f32 %v305, 0.75
    %v390 = vmul.f32 %v306, 0.75
    %v391 = vmul.f32 %v307, 0.75
    %v392 = vmul.f32 %v308, 0.75
    %v393 = vsel %vm97, %v348, %v381
    %v394 = vsel %vm98, %v349, %v382
    %v395 = vsel %vm99, %v350, %v383
    %v396 = vsel %vm100, %v351, %v384
    %v397 = vsel %vm101, %v352, %v385
    %v398 = vsel %vm102, %v353, %v386
    %v399 = vsel %vm103, %v354, %v387
    %v400 = vsel %vm104, %v355, %v388
    %v401 = vmul.f32 %v393, 0.25
    %v402 = vmul.f32 %v394, 0.25
    %v403 = vmul.f32 %v395, 0.25
    %v404 = vmul.f32 %v396, 0.25
    %v405 = vmul.f32 %v397, 0.25
    %v406 = vmul.f32 %v398, 0.25
    %v407 = vmul.f32 %v399, 0.25
    %v408 = vmul.f32 %v400, 0.25
    %v417 = vcombine.low %v401, %v402
    %v418 = vcombine.low %v403, %v404
    %v419 = vcombine.low %v405, %v406
    %v420 = vcombine.low %v407, %v408
    %v425 = vadd.f32 %v389, %v417
    %v426 = vadd.f32 %v390, %v418
    %v427 = vadd.f32 %v391, %v419
    %v428 = vadd.f32 %v392, %v420
    %v433 = vcombine.high %v425, %v425
    %v434 = vcombine.high %v426, %v426
    %v435 = vcombine.high %v427, %v427
    %v436 = vcombine.high %v428, %v428
    %441 = vrot.lane.b32.xlu0 %v425, 32
    %v442 = vpop.permute.xlu0 %441
    %443 = vrot.lane.b32.xlu0 %v433, 32
    %v444 = vpop.permute.xlu0 %443
    %445 = vrot.lane.b32.xlu0 %v426, 32
    %v446 = vpop.permute.xlu0 %445
    %447 = vrot.lane.b32.xlu0 %v434, 32
    %v448 = vpop.permute.xlu0 %447
    %449 = vrot.lane.b32.xlu0 %v427, 32
    %v450 = vpop.permute.xlu0 %449
    %451 = vrot.lane.b32.xlu0 %v435, 32
    %v452 = vpop.permute.xlu0 %451
    %453 = vrot.lane.b32.xlu0 %v428, 32
    %v454 = vpop.permute.xlu0 %453
    %455 = vrot.lane.b32.xlu0 %v436, 32
    %v456 = vpop.permute.xlu0 %455
    %vm457 = vcmp.lt.s32.totalorder %v338, 32
    %v458 = vsel %vm457, %v454, %v456
    %v459 = vsel %vm457, %v452, %v454
    %v460 = vsel %vm457, %v450, %v452
    %v461 = vsel %vm457, %v448, %v450
    %v462 = vsel %vm457, %v446, %v448
    %v463 = vsel %vm457, %v444, %v446
    %v464 = vsel %vm457, %v442, %v444
    %v465 = vsel %vm457, %v456, %v442
    %v466 = vsel %vm257, %v425, %v465
    %v467 = vsel %vm258, %v433, %v464
    %v468 = vsel %vm259, %v426, %v463
    %v469 = vsel %vm260, %v434, %v462
    %v470 = vsel %vm261, %v427, %v461
    %v471 = vsel %vm262, %v435, %v460
    %v472 = vsel %vm263, %v428, %v459
    %v473 = vsel %vm264, %v436, %v458
    %474 = vrot.lane.b32.xlu0 %v425, 96
    %v475 = vpop.permute.xlu0 %474
    %476 = vrot.lane.b32.xlu0 %v433, 96
    %v477 = vpop.permute.xlu0 %476
    %478 = vrot.lane.b32.xlu0 %v426, 96
    %v479 = vpop.permute.xlu0 %478
    %480 = vrot.lane.b32.xlu0 %v434, 96
    %v481 = vpop.permute.xlu0 %480
    %482 = vrot.lane.b32.xlu0 %v427, 96
    %v483 = vpop.permute.xlu0 %482
    %484 = vrot.lane.b32.xlu0 %v435, 96
    %v485 = vpop.permute.xlu0 %484
    %486 = vrot.lane.b32.xlu0 %v428, 96
    %v487 = vpop.permute.xlu0 %486
    %488 = vrot.lane.b32.xlu0 %v436, 96
    %v489 = vpop.permute.xlu0 %488
    %vm490 = vcmp.lt.s32.totalorder %v338, 96
    %v491 = vsel %vm490, %v487, %v489
    %v492 = vsel %vm490, %v485, %v487
    %v493 = vsel %vm490, %v483, %v485
    %v494 = vsel %vm490, %v481, %v483
    %v495 = vsel %vm490, %v479, %v481
    %v496 = vsel %vm490, %v477, %v479
    %v497 = vsel %vm490, %v475, %v477
    %v498 = vsel %vm490, %v489, %v475
    %v499 = vsel %vm297, %v425, %v497
    %v500 = vsel %vm298, %v433, %v496
    %v501 = vsel %vm299, %v426, %v495
    %v502 = vsel %vm300, %v434, %v494
    %v503 = vsel %vm301, %v427, %v493
    %v504 = vsel %vm302, %v435, %v492
    %v505 = vsel %vm303, %v428, %v491
    %v506 = vsel %vm304, %v436, %v498
    %v507 = vmul.f32 %v425, 0.75
    %v508 = vmul.f32 %v426, 0.75
    %v509 = vmul.f32 %v427, 0.75
    %v510 = vmul.f32 %v428, 0.75
    %v511 = vsel %vm137, %v466, %v499
    %v512 = vsel %vm138, %v467, %v500
    %v513 = vsel %vm139, %v468, %v501
    %v514 = vsel %vm140, %v469, %v502
    %v515 = vsel %vm141, %v470, %v503
    %v516 = vsel %vm142, %v471, %v504
    %v517 = vsel %vm143, %v472, %v505
    %v518 = vsel %vm144, %v473, %v506
    %v519 = vmul.f32 %v511, 0.25
    %v520 = vmul.f32 %v512, 0.25
    %v521 = vmul.f32 %v513, 0.25
    %v522 = vmul.f32 %v514, 0.25
    %v523 = vmul.f32 %v515, 0.25
    %v524 = vmul.f32 %v516, 0.25
    %v525 = vmul.f32 %v517, 0.25
    %v526 = vmul.f32 %v518, 0.25
    %v535 = vcombine.low %v519, %v520
    %v536 = vcombine.low %v521, %v522
    %v537 = vcombine.low %v523, %v524
    %v538 = vcombine.low %v525, %v526
    %v543 = vadd.f32 %v507, %v535
    %v544 = vadd.f32 %v508, %v536
    %v545 = vadd.f32 %v509, %v537
    %v546 = vadd.f32 %v510, %v538
    %v551 = vcombine.high %v543, %v543
    %v552 = vcombine.high %v544, %v544
    %v553 = vcombine.high %v545, %v545
    %v554 = vcombine.high %v546, %v546
    %559 = vst [vmem:[#allocation2] sm:$0xf] %v543
    %560 = vst [vmem:[#allocation2 + $0x8] sm:$0xf] %v551
    %561 = vst [vmem:[#allocation2 + $0x10] sm:$0xf] %v544
    %562 = vst [vmem:[#allocation2 + $0x18] sm:$0xf] %v552
    %563 = vst [vmem:[#allocation2 + $0x20] sm:$0xf] %v545
    %564 = vst [vmem:[#allocation2 + $0x28] sm:$0xf] %v553
    %565 = vst [vmem:[#allocation2 + $0x30] sm:$0xf] %v546
    %566 = vst [vmem:[#allocation2 + $0x38] sm:$0xf] %v554
    %v567 = vld [vmem:[#allocation5] sm:$0xff]
    %v568 = vld [vmem:[#allocation5 + $0x8] sm:$0xff]
    %v569 = vld [vmem:[#allocation5 + $0x10] sm:$0xff]
    %v570 = vld [vmem:[#allocation5 + $0x18] sm:$0xff]
    %v575 = vcombine.low %v567, %v567
    %v576 = vcombine.low %v568, %v568
    %v577 = vcombine.low %v569, %v569
    %v578 = vcombine.low %v570, %v570
    %583 = vst [vmem:[#allocation2] sm:$0xf0] %v575
    %584 = vst [vmem:[#allocation2 + $0x8] sm:$0xf0] %v567
    %585 = vst [vmem:[#allocation2 + $0x10] sm:$0xf0] %v576
    %586 = vst [vmem:[#allocation2 + $0x18] sm:$0xf0] %v568
    %587 = vst [vmem:[#allocation2 + $0x20] sm:$0xf0] %v577
    %588 = vst [vmem:[#allocation2 + $0x28] sm:$0xf0] %v569
    %589 = vst [vmem:[#allocation2 + $0x30] sm:$0xf0] %v578
    %590 = vst [vmem:[#allocation2 + $0x38] sm:$0xf0] %v570
    %v591 = vld [vmem:[#allocation2] sm:$0xff]
    %v592 = vld [vmem:[#allocation2 + $0x8] sm:$0xff]
    %v593 = vld [vmem:[#allocation2 + $0x10] sm:$0xff]
    %v594 = vld [vmem:[#allocation2 + $0x18] sm:$0xff]
    %v595 = vld [vmem:[#allocation2 + $0x20] sm:$0xff]
    %v596 = vld [vmem:[#allocation2 + $0x28] sm:$0xff]
    %v597 = vld [vmem:[#allocation2 + $0x30] sm:$0xff]
    %v598 = vld [vmem:[#allocation2 + $0x38] sm:$0xff]
    %599 = vrot.lane.b32.xlu0 %v591, 33
    %v600 = vpop.permute.xlu0 %599
    %601 = vrot.lane.b32.xlu0 %v592, 33
    %v602 = vpop.permute.xlu0 %601
    %603 = vrot.lane.b32.xlu0 %v593, 33
    %v604 = vpop.permute.xlu0 %603
    %605 = vrot.lane.b32.xlu0 %v594, 33
    %v606 = vpop.permute.xlu0 %605
    %607 = vrot.lane.b32.xlu0 %v595, 33
    %v608 = vpop.permute.xlu0 %607
    %609 = vrot.lane.b32.xlu0 %v596, 33
    %v610 = vpop.permute.xlu0 %609
    %611 = vrot.lane.b32.xlu0 %v597, 33
    %v612 = vpop.permute.xlu0 %611
    %613 = vrot.lane.b32.xlu0 %v598, 33
    %v614 = vpop.permute.xlu0 %613
    %vm615 = vcmp.lt.s32.totalorder %v338, 33
    %v616 = vsel %vm615, %v612, %v614
    %v617 = vsel %vm615, %v610, %v612
    %v618 = vsel %vm615, %v608, %v610
    %v619 = vsel %vm615, %v606, %v608
    %v620 = vsel %vm615, %v604, %v606
    %v621 = vsel %vm615, %v602, %v604
    %v622 = vsel %vm615, %v600, %v602
    %v623 = vsel %vm615, %v614, %v600
    %v624 = vsel %vm257, 0.0, %v623
    %v625 = vsel %vm258, 0.0, %v622
    %v626 = vsel %vm259, 0.0, %v621
    %v627 = vsel %vm260, 0.0, %v620
    %v628 = vsel %vm261, 0.0, %v619
    %v629 = vsel %vm262, 0.0, %v618
    %v630 = vsel %vm263, 0.0, %v617
    %v631 = vsel %vm264, 0.0, %v616
    %v632 = vsel %vm177, 0.0, %v624
    %v633 = vsel %vm178, 0.0, %v625
    %v634 = vsel %vm179, 0.0, %v626
    %v635 = vsel %vm180, 0.0, %v627
    %v636 = vsel %vm181, 0.0, %v628
    %v637 = vsel %vm182, 0.0, %v629
    %v638 = vsel %vm183, 0.0, %v630
    %v639 = vsel %vm184, 0.0, %v631
    %640 = vst [vmem:[#allocation3] sm:$0xff] %v632
    %641 = vst [vmem:[#allocation3 + $0x8] sm:$0xff] %v633
    %642 = vst [vmem:[#allocation3 + $0x10] sm:$0xff] %v634
    %643 = vst [vmem:[#allocation3 + $0x18] sm:$0xff] %v635
    %644 = vst [vmem:[#allocation3 + $0x20] sm:$0xff] %v636
    %645 = vst [vmem:[#allocation3 + $0x28] sm:$0xff] %v637
    %646 = vst [vmem:[#allocation3 + $0x30] sm:$0xff] %v638
    %647 = vst [vmem:[#allocation3 + $0x38] sm:$0xff] %v639
    %648 = vrot.lane.b32.xlu0 %v591, 32
    %v649 = vpop.permute.xlu0 %648
    %650 = vrot.lane.b32.xlu0 %v592, 32
    %v651 = vpop.permute.xlu0 %650
    %652 = vrot.lane.b32.xlu0 %v593, 32
    %v653 = vpop.permute.xlu0 %652
    %654 = vrot.lane.b32.xlu0 %v594, 32
    %v655 = vpop.permute.xlu0 %654
    %656 = vrot.lane.b32.xlu0 %v595, 32
    %v657 = vpop.permute.xlu0 %656
    %658 = vrot.lane.b32.xlu0 %v596, 32
    %v659 = vpop.permute.xlu0 %658
    %660 = vrot.lane.b32.xlu0 %v597, 32
    %v661 = vpop.permute.xlu0 %660
    %662 = vrot.lane.b32.xlu0 %v598, 32
    %v663 = vpop.permute.xlu0 %662
    %v664 = vsel %vm457, %v661, %v663
    %v665 = vsel %vm457, %v659, %v661
    %v666 = vsel %vm457, %v657, %v659
    %v667 = vsel %vm457, %v655, %v657
    %v668 = vsel %vm457, %v653, %v655
    %v669 = vsel %vm457, %v651, %v653
    %v670 = vsel %vm457, %v649, %v651
    %v671 = vsel %vm457, %v663, %v649
    %v672 = vsel %vm257, 0.0, %v671
    %v673 = vsel %vm258, 0.0, %v670
    %v674 = vsel %vm259, 0.0, %v669
    %v675 = vsel %vm260, 0.0, %v668
    %v676 = vsel %vm261, 0.0, %v667
    %v677 = vsel %vm262, 0.0, %v666
    %v678 = vsel %vm263, 0.0, %v665
    %v679 = vsel %vm264, 0.0, %v664
    %680 = vst [vmem:[#allocation3 + $0x40] sm:$0xff] %v672
    %681 = vst [vmem:[#allocation3 + $0x48] sm:$0xff] %v673
    %682 = vst [vmem:[#allocation3 + $0x50] sm:$0xff] %v674
    %683 = vst [vmem:[#allocation3 + $0x58] sm:$0xff] %v675
    %684 = vst [vmem:[#allocation3 + $0x60] sm:$0xff] %v676
    %685 = vst [vmem:[#allocation3 + $0x68] sm:$0xff] %v677
    %686 = vst [vmem:[#allocation3 + $0x70] sm:$0xff] %v678
    %687 = vst [vmem:[#allocation3 + $0x78] sm:$0xff] %v679
    %688 = vrot.lane.b32.xlu0 %v591, 31
    %v689 = vpop.permute.xlu0 %688
    %690 = vrot.lane.b32.xlu0 %v592, 31
    %v691 = vpop.permute.xlu0 %690
    %692 = vrot.lane.b32.xlu0 %v593, 31
    %v693 = vpop.permute.xlu0 %692
    %694 = vrot.lane.b32.xlu0 %v594, 31
    %v695 = vpop.permute.xlu0 %694
    %696 = vrot.lane.b32.xlu0 %v595, 31
    %v697 = vpop.permute.xlu0 %696
    %698 = vrot.lane.b32.xlu0 %v596, 31
    %v699 = vpop.permute.xlu0 %698
    %700 = vrot.lane.b32.xlu0 %v597, 31
    %v701 = vpop.permute.xlu0 %700
    %702 = vrot.lane.b32.xlu0 %v598, 31
    %v703 = vpop.permute.xlu0 %702
    %vm704 = vcmp.lt.s32.totalorder %v338, 31
    %v705 = vsel %vm704, %v701, %v703
    %v706 = vsel %vm704, %v699, %v701
    %v707 = vsel %vm704, %v697, %v699
    %v708 = vsel %vm704, %v695, %v697
    %v709 = vsel %vm704, %v693, %v695
    %v710 = vsel %vm704, %v691, %v693
    %v711 = vsel %vm704, %v689, %v691
    %v712 = vsel %vm704, %v703, %v689
    %v713 = vsel %vm257, 0.0, %v712
    %v714 = vsel %vm258, 0.0, %v711
    %v715 = vsel %vm259, 0.0, %v710
    %v716 = vsel %vm260, 0.0, %v709
    %v717 = vsel %vm261, 0.0, %v708
    %v718 = vsel %vm262, 0.0, %v707
    %v719 = vsel %vm263, 0.0, %v706
    %v720 = vsel %vm264, 0.0, %v705
    %v721 = vsel %vm217, 0.0, %v713
    %v722 = vsel %vm218, 0.0, %v714
    %v723 = vsel %vm219, 0.0, %v715
    %v724 = vsel %vm220, 0.0, %v716
    %v725 = vsel %vm221, 0.0, %v717
    %v726 = vsel %vm222, 0.0, %v718
    %v727 = vsel %vm223, 0.0, %v719
    %v728 = vsel %vm224, 0.0, %v720
    %729 = vst [vmem:[#allocation3 + $0x80] sm:$0xff] %v721
    %730 = vst [vmem:[#allocation3 + $0x88] sm:$0xff] %v722
    %731 = vst [vmem:[#allocation3 + $0x90] sm:$0xff] %v723
    %732 = vst [vmem:[#allocation3 + $0x98] sm:$0xff] %v724
    %733 = vst [vmem:[#allocation3 + $0xa0] sm:$0xff] %v725
    %734 = vst [vmem:[#allocation3 + $0xa8] sm:$0xff] %v726
    %735 = vst [vmem:[#allocation3 + $0xb0] sm:$0xff] %v727
    %736 = vst [vmem:[#allocation3 + $0xb8] sm:$0xff] %v728
    %737 = vrot.lane.b32.xlu0 %v591, 1
    %v738 = vpop.permute.xlu0 %737
    %739 = vrot.lane.b32.xlu0 %v592, 1
    %v740 = vpop.permute.xlu0 %739
    %741 = vrot.lane.b32.xlu0 %v593, 1
    %v742 = vpop.permute.xlu0 %741
    %743 = vrot.lane.b32.xlu0 %v594, 1
    %v744 = vpop.permute.xlu0 %743
    %745 = vrot.lane.b32.xlu0 %v595, 1
    %v746 = vpop.permute.xlu0 %745
    %747 = vrot.lane.b32.xlu0 %v596, 1
    %v748 = vpop.permute.xlu0 %747
    %749 = vrot.lane.b32.xlu0 %v597, 1
    %v750 = vpop.permute.xlu0 %749
    %751 = vrot.lane.b32.xlu0 %v598, 1
    %v752 = vpop.permute.xlu0 %751
    %v753 = vsel %vm339, %v750, %v752
    %v754 = vsel %vm339, %v748, %v750
    %v755 = vsel %vm339, %v746, %v748
    %v756 = vsel %vm339, %v744, %v746
    %v757 = vsel %vm339, %v742, %v744
    %v758 = vsel %vm339, %v740, %v742
    %v759 = vsel %vm339, %v738, %v740
    %v760 = vsel %vm339, %v752, %v738
    %v761 = vsel %vm177, 0.0, %v760
    %v762 = vsel %vm178, 0.0, %v759
    %v763 = vsel %vm179, 0.0, %v758
    %v764 = vsel %vm180, 0.0, %v757
    %v765 = vsel %vm181, 0.0, %v756
    %v766 = vsel %vm182, 0.0, %v755
    %v767 = vsel %vm183, 0.0, %v754
    %v768 = vsel %vm184, 0.0, %v753
    %769 = vst [vmem:[#allocation3 + $0xc0] sm:$0xff] %v761
    %770 = vst [vmem:[#allocation3 + $0xc8] sm:$0xff] %v762
    %771 = vst [vmem:[#allocation3 + $0xd0] sm:$0xff] %v763
    %772 = vst [vmem:[#allocation3 + $0xd8] sm:$0xff] %v764
    %773 = vst [vmem:[#allocation3 + $0xe0] sm:$0xff] %v765
    %774 = vst [vmem:[#allocation3 + $0xe8] sm:$0xff] %v766
    %775 = vst [vmem:[#allocation3 + $0xf0] sm:$0xff] %v767
    %776 = vst [vmem:[#allocation3 + $0xf8] sm:$0xff] %v768
    %777 = vst [vmem:[#allocation3 + $0x100] sm:$0xff] %v591
    %778 = vst [vmem:[#allocation3 + $0x108] sm:$0xff] %v592
    %779 = vst [vmem:[#allocation3 + $0x110] sm:$0xff] %v593
    %780 = vst [vmem:[#allocation3 + $0x118] sm:$0xff] %v594
    %781 = vst [vmem:[#allocation3 + $0x120] sm:$0xff] %v595
    %782 = vst [vmem:[#allocation3 + $0x128] sm:$0xff] %v596
    %783 = vst [vmem:[#allocation3 + $0x130] sm:$0xff] %v597
    %784 = vst [vmem:[#allocation3 + $0x138] sm:$0xff] %v598
    %785 = vrot.lane.b32.xlu0 %v591, 127
    %v786 = vpop.permute.xlu0 %785
    %787 = vrot.lane.b32.xlu0 %v592, 127
    %v788 = vpop.permute.xlu0 %787
    %789 = vrot.lane.b32.xlu0 %v593, 127
    %v790 = vpop.permute.xlu0 %789
    %791 = vrot.lane.b32.xlu0 %v594, 127
    %v792 = vpop.permute.xlu0 %791
    %793 = vrot.lane.b32.xlu0 %v595, 127
    %v794 = vpop.permute.xlu0 %793
    %795 = vrot.lane.b32.xlu0 %v596, 127
    %v796 = vpop.permute.xlu0 %795
    %797 = vrot.lane.b32.xlu0 %v597, 127
    %v798 = vpop.permute.xlu0 %797
    %799 = vrot.lane.b32.xlu0 %v598, 127
    %v800 = vpop.permute.xlu0 %799
    %v801 = vsel %vm372, %v798, %v800
    %v802 = vsel %vm372, %v796, %v798
    %v803 = vsel %vm372, %v794, %v796
    %v804 = vsel %vm372, %v792, %v794
    %v805 = vsel %vm372, %v790, %v792
    %v806 = vsel %vm372, %v788, %v790
    %v807 = vsel %vm372, %v786, %v788
    %v808 = vsel %vm372, %v800, %v786
    %v809 = vsel %vm217, 0.0, %v807
    %v810 = vsel %vm218, 0.0, %v806
    %v811 = vsel %vm219, 0.0, %v805
    %v812 = vsel %vm220, 0.0, %v804
    %v813 = vsel %vm221, 0.0, %v803
    %v814 = vsel %vm222, 0.0, %v802
    %v815 = vsel %vm223, 0.0, %v801
    %v816 = vsel %vm224, 0.0, %v808
    %817 = vst [vmem:[#allocation3 + $0x140] sm:$0xff] %v809
    %818 = vst [vmem:[#allocation3 + $0x148] sm:$0xff] %v810
    %819 = vst [vmem:[#allocation3 + $0x150] sm:$0xff] %v811
    %820 = vst [vmem:[#allocation3 + $0x158] sm:$0xff] %v812
    %821 = vst [vmem:[#allocation3 + $0x160] sm:$0xff] %v813
    %822 = vst [vmem:[#allocation3 + $0x168] sm:$0xff] %v814
    %823 = vst [vmem:[#allocation3 + $0x170] sm:$0xff] %v815
    %824 = vst [vmem:[#allocation3 + $0x178] sm:$0xff] %v816
    %825 = vrot.lane.b32.xlu0 %v591, 97
    %v826 = vpop.permute.xlu0 %825
    %827 = vrot.lane.b32.xlu0 %v592, 97
    %v828 = vpop.permute.xlu0 %827
    %829 = vrot.lane.b32.xlu0 %v593, 97
    %v830 = vpop.permute.xlu0 %829
    %831 = vrot.lane.b32.xlu0 %v594, 97
    %v832 = vpop.permute.xlu0 %831
    %833 = vrot.lane.b32.xlu0 %v595, 97
    %v834 = vpop.permute.xlu0 %833
    %835 = vrot.lane.b32.xlu0 %v596, 97
    %v836 = vpop.permute.xlu0 %835
    %837 = vrot.lane.b32.xlu0 %v597, 97
    %v838 = vpop.permute.xlu0 %837
    %839 = vrot.lane.b32.xlu0 %v598, 97
    %v840 = vpop.permute.xlu0 %839
    %vm841 = vcmp.lt.s32.totalorder %v338, 97
    %v842 = vsel %vm841, %v838, %v840
    %v843 = vsel %vm841, %v836, %v838
    %v844 = vsel %vm841, %v834, %v836
    %v845 = vsel %vm841, %v832, %v834
    %v846 = vsel %vm841, %v830, %v832
    %v847 = vsel %vm841, %v828, %v830
    %v848 = vsel %vm841, %v826, %v828
    %v849 = vsel %vm841, %v840, %v826
    %v850 = vsel %vm297, 0.0, %v848
    %v851 = vsel %vm298, 0.0, %v847
    %v852 = vsel %vm299, 0.0, %v846
    %v853 = vsel %vm300, 0.0, %v845
    %v854 = vsel %vm301, 0.0, %v844
    %v855 = vsel %vm302, 0.0, %v843
    %v856 = vsel %vm303, 0.0, %v842
    %v857 = vsel %vm304, 0.0, %v849
    %v858 = vsel %vm177, 0.0, %v850
    %v859 = vsel %vm178, 0.0, %v851
    %v860 = vsel %vm179, 0.0, %v852
    %v861 = vsel %vm180, 0.0, %v853
    %v862 = vsel %vm181, 0.0, %v854
    %v863 = vsel %vm182, 0.0, %v855
    %v864 = vsel %vm183, 0.0, %v856
    %v865 = vsel %vm184, 0.0, %v857
    %866 = vst [vmem:[#allocation3 + $0x180] sm:$0xff] %v858
    %867 = vst [vmem:[#allocation3 + $0x188] sm:$0xff] %v859
    %868 = vst [vmem:[#allocation3 + $0x190] sm:$0xff] %v860
    %869 = vst [vmem:[#allocation3 + $0x198] sm:$0xff] %v861
    %870 = vst [vmem:[#allocation3 + $0x1a0] sm:$0xff] %v862
    %871 = vst [vmem:[#allocation3 + $0x1a8] sm:$0xff] %v863
    %872 = vst [vmem:[#allocation3 + $0x1b0] sm:$0xff] %v864
    %873 = vst [vmem:[#allocation3 + $0x1b8] sm:$0xff] %v865
    %874 = vrot.lane.b32.xlu0 %v591, 96
    %v875 = vpop.permute.xlu0 %874
    %876 = vrot.lane.b32.xlu0 %v592, 96
    %v877 = vpop.permute.xlu0 %876
    %878 = vrot.lane.b32.xlu0 %v593, 96
    %v879 = vpop.permute.xlu0 %878
    %880 = vrot.lane.b32.xlu0 %v594, 96
    %v881 = vpop.permute.xlu0 %880
    %882 = vrot.lane.b32.xlu0 %v595, 96
    %v883 = vpop.permute.xlu0 %882
    %884 = vrot.lane.b32.xlu0 %v596, 96
    %v885 = vpop.permute.xlu0 %884
    %886 = vrot.lane.b32.xlu0 %v597, 96
    %v887 = vpop.permute.xlu0 %886
    %888 = vrot.lane.b32.xlu0 %v598, 96
    %v889 = vpop.permute.xlu0 %888
    %v890 = vsel %vm490, %v887, %v889
    %v891 = vsel %vm490, %v885, %v887
    %v892 = vsel %vm490, %v883, %v885
    %v893 = vsel %vm490, %v881, %v883
    %v894 = vsel %vm490, %v879, %v881
    %v895 = vsel %vm490, %v877, %v879
    %v896 = vsel %vm490, %v875, %v877
    %v897 = vsel %vm490, %v889, %v875
    %v898 = vsel %vm297, 0.0, %v896
    %v899 = vsel %vm298, 0.0, %v895
    %v900 = vsel %vm299, 0.0, %v894
    %v901 = vsel %vm300, 0.0, %v893
    %v902 = vsel %vm301, 0.0, %v892
    %v903 = vsel %vm302, 0.0, %v891
    %v904 = vsel %vm303, 0.0, %v890
    %v905 = vsel %vm304, 0.0, %v897
    %906 = vst [vmem:[#allocation3 + $0x1c0] sm:$0xff] %v898
    %907 = vst [vmem:[#allocation3 + $0x1c8] sm:$0xff] %v899
    %908 = vst [vmem:[#allocation3 + $0x1d0] sm:$0xff] %v900
    %909 = vst [vmem:[#allocation3 + $0x1d8] sm:$0xff] %v901
    %910 = vst [vmem:[#allocation3 + $0x1e0] sm:$0xff] %v902
    %911 = vst [vmem:[#allocation3 + $0x1e8] sm:$0xff] %v903
    %912 = vst [vmem:[#allocation3 + $0x1f0] sm:$0xff] %v904
    %913 = vst [vmem:[#allocation3 + $0x1f8] sm:$0xff] %v905
    %914 = vrot.lane.b32.xlu0 %v591, 95
    %v915 = vpop.permute.xlu0 %914
    %916 = vrot.lane.b32.xlu0 %v592, 95
    %v917 = vpop.permute.xlu0 %916
    %918 = vrot.lane.b32.xlu0 %v593, 95
    %v919 = vpop.permute.xlu0 %918
    %920 = vrot.lane.b32.xlu0 %v594, 95
    %v921 = vpop.permute.xlu0 %920
    %922 = vrot.lane.b32.xlu0 %v595, 95
    %v923 = vpop.permute.xlu0 %922
    %924 = vrot.lane.b32.xlu0 %v596, 95
    %v925 = vpop.permute.xlu0 %924
    %926 = vrot.lane.b32.xlu0 %v597, 95
    %v927 = vpop.permute.xlu0 %926
    %928 = vrot.lane.b32.xlu0 %v598, 95
    %v929 = vpop.permute.xlu0 %928
    %vm930 = vcmp.lt.s32.totalorder %v338, 95
    %v931 = vsel %vm930, %v927, %v929
    %v932 = vsel %vm930, %v925, %v927
    %v933 = vsel %vm930, %v923, %v925
    %v934 = vsel %vm930, %v921, %v923
    %v935 = vsel %vm930, %v919, %v921
    %v936 = vsel %vm930, %v917, %v919
    %v937 = vsel %vm930, %v915, %v917
    %v938 = vsel %vm930, %v929, %v915
    %v939 = vsel %vm297, 0.0, %v937
    %v940 = vsel %vm298, 0.0, %v936
    %v941 = vsel %vm299, 0.0, %v935
    %v942 = vsel %vm300, 0.0, %v934
    %v943 = vsel %vm301, 0.0, %v933
    %v944 = vsel %vm302, 0.0, %v932
    %v945 = vsel %vm303, 0.0, %v931
    %v946 = vsel %vm304, 0.0, %v938
    %v947 = vsel %vm217, 0.0, %v939
    %v948 = vsel %vm218, 0.0, %v940
    %v949 = vsel %vm219, 0.0, %v941
    %v950 = vsel %vm220, 0.0, %v942
    %v951 = vsel %vm221, 0.0, %v943
    %v952 = vsel %vm222, 0.0, %v944
    %v953 = vsel %vm223, 0.0, %v945
    %v954 = vsel %vm224, 0.0, %v946
    %955 = vst [vmem:[#allocation3 + $0x200] sm:$0xff] %v947
    %956 = vst [vmem:[#allocation3 + $0x208] sm:$0xff] %v948
    %957 = vst [vmem:[#allocation3 + $0x210] sm:$0xff] %v949
    %958 = vst [vmem:[#allocation3 + $0x218] sm:$0xff] %v950
    %959 = vst [vmem:[#allocation3 + $0x220] sm:$0xff] %v951
    %960 = vst [vmem:[#allocation3 + $0x228] sm:$0xff] %v952
    %961 = vst [vmem:[#allocation3 + $0x230] sm:$0xff] %v953
    %962 = vst [vmem:[#allocation3 + $0x238] sm:$0xff] %v954
    %v963 = vld [vmem:[%s3] sm:$0xff]
    %v964 = vld [vmem:[#allocation3] sm:$0xff]
    %v965 = vld [vmem:[#allocation3 + $0x8] sm:$0xff]
    %v966 = vld [vmem:[#allocation3 + $0x10] sm:$0xff]
    %v967 = vld [vmem:[#allocation3 + $0x18] sm:$0xff]
    %v968 = vld [vmem:[#allocation3 + $0x20] sm:$0xff]
    %v969 = vld [vmem:[#allocation3 + $0x28] sm:$0xff]
    %v970 = vld [vmem:[#allocation3 + $0x30] sm:$0xff]
    %v971 = vld [vmem:[#allocation3 + $0x38] sm:$0xff]
    %v972 = vld [vmem:[#allocation3 + $0x40] sm:$0xff]
    %v973 = vld [vmem:[#allocation3 + $0x48] sm:$0xff]
    %v974 = vld [vmem:[#allocation3 + $0x50] sm:$0xff]
    %v975 = vld [vmem:[#allocation3 + $0x58] sm:$0xff]
    %v976 = vld [vmem:[#allocation3 + $0x60] sm:$0xff]
    %v977 = vld [vmem:[#allocation3 + $0x68] sm:$0xff]
    %v978 = vld [vmem:[#allocation3 + $0x70] sm:$0xff]
    %v979 = vld [vmem:[#allocation3 + $0x78] sm:$0xff]
    %v980 = vld [vmem:[#allocation3 + $0x80] sm:$0xff]
    %v981 = vld [vmem:[#allocation3 + $0x88] sm:$0xff]
    %v982 = vld [vmem:[#allocation3 + $0x90] sm:$0xff]
    %v983 = vld [vmem:[#allocation3 + $0x98] sm:$0xff]
    %v984 = vld [vmem:[#allocation3 + $0xa0] sm:$0xff]
    %v985 = vld [vmem:[#allocation3 + $0xa8] sm:$0xff]
    %v986 = vld [vmem:[#allocation3 + $0xb0] sm:$0xff]
    %v987 = vld [vmem:[#allocation3 + $0xb8] sm:$0xff]
    %v988 = vld [vmem:[#allocation3 + $0xc0] sm:$0xff]
    %v989 = vld [vmem:[#allocation3 + $0xc8] sm:$0xff]
    %v990 = vld [vmem:[#allocation3 + $0xd0] sm:$0xff]
    %v991 = vld [vmem:[#allocation3 + $0xd8] sm:$0xff]
    %v992 = vld [vmem:[#allocation3 + $0xe0] sm:$0xff]
    %v993 = vld [vmem:[#allocation3 + $0xe8] sm:$0xff]
    %v994 = vld [vmem:[#allocation3 + $0xf0] sm:$0xff]
    %v995 = vld [vmem:[#allocation3 + $0xf8] sm:$0xff]
    %v996 = vld [vmem:[#allocation3 + $0x100] sm:$0xff]
    %v997 = vld [vmem:[#allocation3 + $0x108] sm:$0xff]
    %v998 = vld [vmem:[#allocation3 + $0x110] sm:$0xff]
    %v999 = vld [vmem:[#allocation3 + $0x118] sm:$0xff]
    %v1000 = vld [vmem:[#allocation3 + $0x120] sm:$0xff]
    %v1001 = vld [vmem:[#allocation3 + $0x128] sm:$0xff]
    %v1002 = vld [vmem:[#allocation3 + $0x130] sm:$0xff]
    %v1003 = vld [vmem:[#allocation3 + $0x138] sm:$0xff]
    %v1004 = vld [vmem:[#allocation3 + $0x140] sm:$0xff]
    %v1005 = vld [vmem:[#allocation3 + $0x148] sm:$0xff]
    %v1006 = vld [vmem:[#allocation3 + $0x150] sm:$0xff]
    %v1007 = vld [vmem:[#allocation3 + $0x158] sm:$0xff]
    %v1008 = vld [vmem:[#allocation3 + $0x160] sm:$0xff]
    %v1009 = vld [vmem:[#allocation3 + $0x168] sm:$0xff]
    %v1010 = vld [vmem:[#allocation3 + $0x170] sm:$0xff]
    %v1011 = vld [vmem:[#allocation3 + $0x178] sm:$0xff]
    %v1012 = vld [vmem:[#allocation3 + $0x180] sm:$0xff]
    %v1013 = vld [vmem:[#allocation3 + $0x188] sm:$0xff]
    %v1014 = vld [vmem:[#allocation3 + $0x190] sm:$0xff]
    %v1015 = vld [vmem:[#allocation3 + $0x198] sm:$0xff]
    %v1016 = vld [vmem:[#allocation3 + $0x1a0] sm:$0xff]
    %v1017 = vld [vmem:[#allocation3 + $0x1a8] sm:$0xff]
    %v1018 = vld [vmem:[#allocation3 + $0x1b0] sm:$0xff]
    %v1019 = vld [vmem:[#allocation3 + $0x1b8] sm:$0xff]
    %v1020 = vld [vmem:[#allocation3 + $0x1c0] sm:$0xff]
    %v1021 = vld [vmem:[#allocation3 + $0x1c8] sm:$0xff]
    %v1022 = vld [vmem:[#allocation3 + $0x1d0] sm:$0xff]
    %v1023 = vld [vmem:[#allocation3 + $0x1d8] sm:$0xff]
    %v1024 = vld [vmem:[#allocation3 + $0x1e0] sm:$0xff]
    %v1025 = vld [vmem:[#allocation3 + $0x1e8] sm:$0xff]
    %v1026 = vld [vmem:[#allocation3 + $0x1f0] sm:$0xff]
    %v1027 = vld [vmem:[#allocation3 + $0x1f8] sm:$0xff]
    %v1028 = vld [vmem:[#allocation3 + $0x200] sm:$0xff]
    %v1029 = vld [vmem:[#allocation3 + $0x208] sm:$0xff]
    %v1030 = vld [vmem:[#allocation3 + $0x210] sm:$0xff]
    %v1031 = vld [vmem:[#allocation3 + $0x218] sm:$0xff]
    %v1032 = vld [vmem:[#allocation3 + $0x220] sm:$0xff]
    %v1033 = vld [vmem:[#allocation3 + $0x228] sm:$0xff]
    %v1034 = vld [vmem:[#allocation3 + $0x230] sm:$0xff]
    %v1035 = vld [vmem:[#allocation3 + $0x238] sm:$0xff]
    %v1036 = vld [vmem:[%s4] sm:$0xff]
    %1038 = vset.pattern.permute.xlu0 0
    %1039 = vperm.xlu0 %1038, %v1036
    %v1040 = vpop.permute.xlu0 %1039
    %vm1042 = vcmask 588800
    %v1044 = vsel %vm1042, %v963, 0
    %1046 = vmatprep.subr.mxu0 %v965
    %1047 = vmatpush1.msra.mxu0 %v964
    %1048 = vmatprep.subr.mxu0 %v973
    %1049 = vmatpush1.msra.mxu0 %v972
    %1050 = vmatprep.subr.mxu0 %v981
    %1051 = vmatpush1.msra.mxu0 %v980
    %1052 = vmatprep.subr.mxu0 %v989
    %1053 = vmatpush1.msra.mxu0 %v988
    %1054 = vmatprep.subr.mxu0 %v997
    %1055 = vmatpush1.msra.mxu0 %v996
    %1056 = vmatprep.subr.mxu0 %v1005
    %1057 = vmatpush1.msra.mxu0 %v1004
    %1058 = vmatprep.subr.mxu0 %v1013
    %1059 = vmatpush1.msra.mxu0 %v1012
    %1060 = vmatprep.subr.mxu0 %v1021
    %1061 = vmatpush1.msra.mxu0 %v1020
    %1062 = vmatprep.subr.mxu0 %v1029
    %1063 = vmatpush1.msra.mxu0 %v1028
    %1064 = vmatprep.subr.mxu0 0.0
    %1065 = vmatpush1.msra.mxu0 0.0
    %1066 = vmatprep.subr.mxu0 0.0
    %1067 = vmatpush1.msra.mxu0 0.0
    %1068 = vmatprep.subr.mxu0 0.0
    %1069 = vmatpush1.msra.mxu0 0.0
    %1070 = vmatprep.subr.mxu0 0.0
    %1071 = vmatpush1.msra.mxu0 0.0
    %1072 = vmatprep.subr.mxu0 0.0
    %1073 = vmatpush1.msra.mxu0 0.0
    %1074 = vmatprep.subr.mxu0 0.0
    %1075 = vmatpush1.msra.mxu0 0.0
    %1076 = vmatprep.subr.mxu0 0.0
    %1077 = vmatpush1.msra.mxu0 0.0
    %1078 = vmatprep.subr.mxu0 0.0
    %1079 = vmatpush1.msra.mxu0 0.0
    %1080 = vmatprep.subr.mxu0 0.0
    %1081 = vmatpush1.msra.mxu0 0.0
    %1082 = vmatprep.subr.mxu0 0.0
    %1083 = vmatpush1.msra.mxu0 0.0
    %1084 = vmatprep.subr.mxu0 0.0
    %1085 = vmatpush1.msra.mxu0 0.0
    %1086 = vmatprep.subr.mxu0 0.0
    %1087 = vmatpush1.msra.mxu0 0.0
    %1088 = vmatprep.subr.mxu0 0.0
    %1089 = vmatpush1.msra.mxu0 0.0
    %1090 = vmatprep.subr.mxu0 0.0
    %1091 = vmatpush1.msra.mxu0 0.0
    %1092 = vmatprep.subr.mxu0 0.0
    %1093 = vmatpush1.msra.mxu0 0.0
    %1094 = vmatprep.subr.mxu0 0.0
    %1095 = vmatpush1.msra.mxu0 0.0
    %1096 = vmatprep.subr.mxu0 0.0
    %1097 = vmatpush1.msra.mxu0 0.0
    %1098 = vmatprep.subr.mxu0 0.0
    %1099 = vmatpush1.msra.mxu0 0.0
    %1100 = vmatprep.subr.mxu0 0.0
    %1101 = vmatpush1.msra.mxu0 0.0
    %1102 = vmatprep.subr.mxu0 0.0
    %1103 = vmatpush1.msra.mxu0 0.0
    %1104 = vmatprep.subr.mxu0 0.0
    %1105 = vmatpush1.msra.mxu0 0.0
    %1106 = vmatprep.subr.mxu0 0.0
    %1107 = vmatpush1.msra.mxu0 0.0
    %1108 = vmatprep.subr.mxu0 0.0
    %1109 = vmatpush1.msra.mxu0 0.0
    %1110 = vmatprep.mubr.f32.mxu0 0.0
    %1111 = vmatmul.mubr.f32.gmra.mrb[0].mxu0 %v1044
    %v1112 = vpop.f32.mrb[0].mxu0
    %v1113 = vadd.f32 %v1040, %v1112
    %v1114 = vpop.f32.mrb[0].mxu0
    %v1115 = vadd.f32 %v1040, %v1114
    %1116 = vdwg.mxu0
    %1117 = vmatprep.subr.mxu0 %v967
    %1118 = vmatpush1.msra.mxu0 %v966
    %1119 = vmatprep.subr.mxu0 %v975
    %1120 = vmatpush1.msra.mxu0 %v974
    %1121 = vmatprep.subr.mxu0 %v983
    %1122 = vmatpush1.msra.mxu0 %v982
    %1123 = vmatprep.subr.mxu0 %v991
    %1124 = vmatpush1.msra.mxu0 %v990
    %1125 = vmatprep.subr.mxu0 %v999
    %1126 = vmatpush1.msra.mxu0 %v998
    %1127 = vmatprep.subr.mxu0 %v1007
    %1128 = vmatpush1.msra.mxu0 %v1006
    %1129 = vmatprep.subr.mxu0 %v1015
    %1130 = vmatpush1.msra.mxu0 %v1014
    %1131 = vmatprep.subr.mxu0 %v1023
    %1132 = vmatpush1.msra.mxu0 %v1022
    %1133 = vmatprep.subr.mxu0 %v1031
    %1134 = vmatpush1.msra.mxu0 %v1030
    %1135 = vmatprep.subr.mxu0 0.0
    %1136 = vmatpush1.msra.mxu0 0.0
    %1137 = vmatprep.subr.mxu0 0.0
    %1138 = vmatpush1.msra.mxu0 0.0
    %1139 = vmatprep.subr.mxu0 0.0
    %1140 = vmatpush1.msra.mxu0 0.0
    %1141 = vmatprep.subr.mxu0 0.0
    %1142 = vmatpush1.msra.mxu0 0.0
    %1143 = vmatprep.subr.mxu0 0.0
    %1144 = vmatpush1.msra.mxu0 0.0
    %1145 = vmatprep.subr.mxu0 0.0
    %1146 = vmatpush1.msra.mxu0 0.0
    %1147 = vmatprep.subr.mxu0 0.0
    %1148 = vmatpush1.msra.mxu0 0.0
    %1149 = vmatprep.subr.mxu0 0.0
    %1150 = vmatpush1.msra.mxu0 0.0
    %1151 = vmatprep.subr.mxu0 0.0
    %1152 = vmatpush1.msra.mxu0 0.0
    %1153 = vmatprep.subr.mxu0 0.0
    %1154 = vmatpush1.msra.mxu0 0.0
    %1155 = vmatprep.subr.mxu0 0.0
    %1156 = vmatpush1.msra.mxu0 0.0
    %1157 = vmatprep.subr.mxu0 0.0
    %1158 = vmatpush1.msra.mxu0 0.0
    %1159 = vmatprep.subr.mxu0 0.0
    %1160 = vmatpush1.msra.mxu0 0.0
    %1161 = vmatprep.subr.mxu0 0.0
    %1162 = vmatpush1.msra.mxu0 0.0
    %1163 = vmatprep.subr.mxu0 0.0
    %1164 = vmatpush1.msra.mxu0 0.0
    %1165 = vmatprep.subr.mxu0 0.0
    %1166 = vmatpush1.msra.mxu0 0.0
    %1167 = vmatprep.subr.mxu0 0.0
    %1168 = vmatpush1.msra.mxu0 0.0
    %1169 = vmatprep.subr.mxu0 0.0
    %1170 = vmatpush1.msra.mxu0 0.0
    %1171 = vmatprep.subr.mxu0 0.0
    %1172 = vmatpush1.msra.mxu0 0.0
    %1173 = vmatprep.subr.mxu0 0.0
    %1174 = vmatpush1.msra.mxu0 0.0
    %1175 = vmatprep.subr.mxu0 0.0
    %1176 = vmatpush1.msra.mxu0 0.0
    %1177 = vmatprep.subr.mxu0 0.0
    %1178 = vmatpush1.msra.mxu0 0.0
    %1179 = vmatprep.subr.mxu0 0.0
    %1180 = vmatpush1.msra.mxu0 0.0
    %1181 = vmatprep.mubr.f32.mxu0 0.0
    %1182 = vmatmul.mubr.f32.gmra.mrb[0].mxu0 %v1044
    %v1183 = vpop.f32.mrb[0].mxu0
    %v1184 = vadd.f32 %v1040, %v1183
    %v1185 = vpop.f32.mrb[0].mxu0
    %v1186 = vadd.f32 %v1040, %v1185
    %1187 = vdwg.mxu0
    %1188 = vmatprep.subr.mxu0 %v969
    %1189 = vmatpush1.msra.mxu0 %v968
    %1190 = vmatprep.subr.mxu0 %v977
    %1191 = vmatpush1.msra.mxu0 %v976
    %1192 = vmatprep.subr.mxu0 %v985
    %1193 = vmatpush1.msra.mxu0 %v984
    %1194 = vmatprep.subr.mxu0 %v993
    %1195 = vmatpush1.msra.mxu0 %v992
    %1196 = vmatprep.subr.mxu0 %v1001
    %1197 = vmatpush1.msra.mxu0 %v1000
    %1198 = vmatprep.subr.mxu0 %v1009
    %1199 = vmatpush1.msra.mxu0 %v1008
    %1200 = vmatprep.subr.mxu0 %v1017
    %1201 = vmatpush1.msra.mxu0 %v1016
    %1202 = vmatprep.subr.mxu0 %v1025
    %1203 = vmatpush1.msra.mxu0 %v1024
    %1204 = vmatprep.subr.mxu0 %v1033
    %1205 = vmatpush1.msra.mxu0 %v1032
    %1206 = vmatprep.subr.mxu0 0.0
    %1207 = vmatpush1.msra.mxu0 0.0
    %1208 = vmatprep.subr.mxu0 0.0
    %1209 = vmatpush1.msra.mxu0 0.0
    %1210 = vmatprep.subr.mxu0 0.0
    %1211 = vmatpush1.msra.mxu0 0.0
    %1212 = vmatprep.subr.mxu0 0.0
    %1213 = vmatpush1.msra.mxu0 0.0
    %1214 = vmatprep.subr.mxu0 0.0
    %1215 = vmatpush1.msra.mxu0 0.0
    %1216 = vmatprep.subr.mxu0 0.0
    %1217 = vmatpush1.msra.mxu0 0.0
    %1218 = vmatprep.subr.mxu0 0.0
    %1219 = vmatpush1.msra.mxu0 0.0
    %1220 = vmatprep.subr.mxu0 0.0
    %1221 = vmatpush1.msra.mxu0 0.0
    %1222 = vmatprep.subr.mxu0 0.0
    %1223 = vmatpush1.msra.mxu0 0.0
    %1224 = vmatprep.subr.mxu0 0.0
    %1225 = vmatpush1.msra.mxu0 0.0
    %1226 = vmatprep.subr.mxu0 0.0
    %1227 = vmatpush1.msra.mxu0 0.0
    %1228 = vmatprep.subr.mxu0 0.0
    %1229 = vmatpush1.msra.mxu0 0.0
    %1230 = vmatprep.subr.mxu0 0.0
    %1231 = vmatpush1.msra.mxu0 0.0
    %1232 = vmatprep.subr.mxu0 0.0
    %1233 = vmatpush1.msra.mxu0 0.0
    %1234 = vmatprep.subr.mxu0 0.0
    %1235 = vmatpush1.msra.mxu0 0.0
    %1236 = vmatprep.subr.mxu0 0.0
    %1237 = vmatpush1.msra.mxu0 0.0
    %1238 = vmatprep.subr.mxu0 0.0
    %1239 = vmatpush1.msra.mxu0 0.0
    %1240 = vmatprep.subr.mxu0 0.0
    %1241 = vmatpush1.msra.mxu0 0.0
    %1242 = vmatprep.subr.mxu0 0.0
    %1243 = vmatpush1.msra.mxu0 0.0
    %1244 = vmatprep.subr.mxu0 0.0
    %1245 = vmatpush1.msra.mxu0 0.0
    %1246 = vmatprep.subr.mxu0 0.0
    %1247 = vmatpush1.msra.mxu0 0.0
    %1248 = vmatprep.subr.mxu0 0.0
    %1249 = vmatpush1.msra.mxu0 0.0
    %1250 = vmatprep.subr.mxu0 0.0
    %1251 = vmatpush1.msra.mxu0 0.0
    %1252 = vmatprep.mubr.f32.mxu0 0.0
    %1253 = vmatmul.mubr.f32.gmra.mrb[0].mxu0 %v1044
    %v1254 = vpop.f32.mrb[0].mxu0
    %v1255 = vadd.f32 %v1040, %v1254
    %v1256 = vpop.f32.mrb[0].mxu0
    %v1257 = vadd.f32 %v1040, %v1256
    %1258 = vdwg.mxu0
    %1259 = vmatprep.subr.mxu0 %v971
    %1260 = vmatpush1.msra.mxu0 %v970
    %1261 = vmatprep.subr.mxu0 %v979
    %1262 = vmatpush1.msra.mxu0 %v978
    %1263 = vmatprep.subr.mxu0 %v987
    %1264 = vmatpush1.msra.mxu0 %v986
    %1265 = vmatprep.subr.mxu0 %v995
    %1266 = vmatpush1.msra.mxu0 %v994
    %1267 = vmatprep.subr.mxu0 %v1003
    %1268 = vmatpush1.msra.mxu0 %v1002
    %1269 = vmatprep.subr.mxu0 %v1011
    %1270 = vmatpush1.msra.mxu0 %v1010
    %1271 = vmatprep.subr.mxu0 %v1019
    %1272 = vmatpush1.msra.mxu0 %v1018
    %1273 = vmatprep.subr.mxu0 %v1027
    %1274 = vmatpush1.msra.mxu0 %v1026
    %1275 = vmatprep.subr.mxu0 %v1035
    %1276 = vmatpush1.msra.mxu0 %v1034
    %1277 = vmatprep.subr.mxu0 0.0
    %1278 = vmatpush1.msra.mxu0 0.0
    %1279 = vmatprep.subr.mxu0 0.0
    %1280 = vmatpush1.msra.mxu0 0.0
    %1281 = vmatprep.subr.mxu0 0.0
    %1282 = vmatpush1.msra.mxu0 0.0
    %1283 = vmatprep.subr.mxu0 0.0
    %1284 = vmatpush1.msra.mxu0 0.0
    %1285 = vmatprep.subr.mxu0 0.0
    %1286 = vmatpush1.msra.mxu0 0.0
    %1287 = vmatprep.subr.mxu0 0.0
    %1288 = vmatpush1.msra.mxu0 0.0
    %1289 = vmatprep.subr.mxu0 0.0
    %1290 = vmatpush1.msra.mxu0 0.0
    %1291 = vmatprep.subr.mxu0 0.0
    %1292 = vmatpush1.msra.mxu0 0.0
    %1293 = vmatprep.subr.mxu0 0.0
    %1294 = vmatpush1.msra.mxu0 0.0
    %1295 = vmatprep.subr.mxu0 0.0
    %1296 = vmatpush1.msra.mxu0 0.0
    %1297 = vmatprep.subr.mxu0 0.0
    %1298 = vmatpush1.msra.mxu0 0.0
    %1299 = vmatprep.subr.mxu0 0.0
    %1300 = vmatpush1.msra.mxu0 0.0
    %1301 = vmatprep.subr.mxu0 0.0
    %1302 = vmatpush1.msra.mxu0 0.0
    %1303 = vmatprep.subr.mxu0 0.0
    %1304 = vmatpush1.msra.mxu0 0.0
    %1305 = vmatprep.subr.mxu0 0.0
    %1306 = vmatpush1.msra.mxu0 0.0
    %1307 = vmatprep.subr.mxu0 0.0
    %1308 = vmatpush1.msra.mxu0 0.0
    %1309 = vmatprep.subr.mxu0 0.0
    %1310 = vmatpush1.msra.mxu0 0.0
    %1311 = vmatprep.subr.mxu0 0.0
    %1312 = vmatpush1.msra.mxu0 0.0
    %1313 = vmatprep.subr.mxu0 0.0
    %1314 = vmatpush1.msra.mxu0 0.0
    %1315 = vmatprep.subr.mxu0 0.0
    %1316 = vmatpush1.msra.mxu0 0.0
    %1317 = vmatprep.subr.mxu0 0.0
    %1318 = vmatpush1.msra.mxu0 0.0
    %1319 = vmatprep.subr.mxu0 0.0
    %1320 = vmatpush1.msra.mxu0 0.0
    %1321 = vmatprep.subr.mxu0 0.0
    %1322 = vmatpush1.msra.mxu0 0.0
    %1323 = vmatprep.mubr.f32.mxu0 0.0
    %1324 = vmatmul.mubr.f32.gmra.mrb[0].mxu0 %v1044
    %v1325 = vpop.f32.mrb[0].mxu0
    %v1326 = vadd.f32 %v1040, %v1325
    %v1327 = vpop.f32.mrb[0].mxu0
    %v1328 = vadd.f32 %v1040, %v1327
    %1329 = vdwg.mxu0
    %v1330 = vmul.f32 %v1113, 0.2
    %v1331 = vmul.f32 %v1115, 0.2
    %v1332 = vmul.f32 %v1184, 0.2
    %v1333 = vmul.f32 %v1186, 0.2
    %v1334 = vmul.f32 %v1255, 0.2
    %v1335 = vmul.f32 %v1257, 0.2
    %v1336 = vmul.f32 %v1326, 0.2
    %v1337 = vmul.f32 %v1328, 0.2
    %v1338 = vmax.f32 %v1113, %v1330
    %v1339 = vmax.f32 %v1115, %v1331
    %v1340 = vmax.f32 %v1184, %v1332
    %v1341 = vmax.f32 %v1186, %v1333
    %v1342 = vmax.f32 %v1255, %v1334
    %v1343 = vmax.f32 %v1257, %v1335
    %v1344 = vmax.f32 %v1326, %v1336
    %v1345 = vmax.f32 %v1328, %v1337
    %1346 = vrot.lane.b32.xlu0 %v1338, 33
    %v1347 = vpop.permute.xlu0 %1346
    %1348 = vrot.lane.b32.xlu0 %v1339, 33
    %v1349 = vpop.permute.xlu0 %1348
    %1350 = vrot.lane.b32.xlu0 %v1340, 33
    %v1351 = vpop.permute.xlu0 %1350
    %1352 = vrot.lane.b32.xlu0 %v1341, 33
    %v1353 = vpop.permute.xlu0 %1352
    %1354 = vrot.lane.b32.xlu0 %v1342, 33
    %v1355 = vpop.permute.xlu0 %1354
    %1356 = vrot.lane.b32.xlu0 %v1343, 33
    %v1357 = vpop.permute.xlu0 %1356
    %1358 = vrot.lane.b32.xlu0 %v1344, 33
    %v1359 = vpop.permute.xlu0 %1358
    %1360 = vrot.lane.b32.xlu0 %v1345, 33
    %v1361 = vpop.permute.xlu0 %1360
    %v1362 = vsel %vm615, %v1359, %v1361
    %v1363 = vsel %vm615, %v1357, %v1359
    %v1364 = vsel %vm615, %v1355, %v1357
    %v1365 = vsel %vm615, %v1353, %v1355
    %v1366 = vsel %vm615, %v1351, %v1353
    %v1367 = vsel %vm615, %v1349, %v1351
    %v1368 = vsel %vm615, %v1347, %v1349
    %v1369 = vsel %vm615, %v1361, %v1347
    %v1370 = vsel %vm257, 0.0, %v1369
    %v1371 = vsel %vm258, 0.0, %v1368
    %v1372 = vsel %vm259, 0.0, %v1367
    %v1373 = vsel %vm260, 0.0, %v1366
    %v1374 = vsel %vm261, 0.0, %v1365
    %v1375 = vsel %vm262, 0.0, %v1364
    %v1376 = vsel %vm263, 0.0, %v1363
    %v1377 = vsel %vm264, 0.0, %v1362
    %v1378 = vsel %vm177, 0.0, %v1370
    %v1379 = vsel %vm178, 0.0, %v1371
    %v1380 = vsel %vm179, 0.0, %v1372
    %v1381 = vsel %vm180, 0.0, %v1373
    %v1382 = vsel %vm181, 0.0, %v1374
    %v1383 = vsel %vm182, 0.0, %v1375
    %v1384 = vsel %vm183, 0.0, %v1376
    %v1385 = vsel %vm184, 0.0, %v1377
    %1386 = vst [vmem:[#allocation4] sm:$0xff] %v1378
    %1387 = vst [vmem:[#allocation4 + $0x8] sm:$0xff] %v1379
    %1388 = vst [vmem:[#allocation4 + $0x10] sm:$0xff] %v1380
    %1389 = vst [vmem:[#allocation4 + $0x18] sm:$0xff] %v1381
    %1390 = vst [vmem:[#allocation4 + $0x20] sm:$0xff] %v1382
    %1391 = vst [vmem:[#allocation4 + $0x28] sm:$0xff] %v1383
    %1392 = vst [vmem:[#allocation4 + $0x30] sm:$0xff] %v1384
    %1393 = vst [vmem:[#allocation4 + $0x38] sm:$0xff] %v1385
    %1394 = vrot.lane.b32.xlu0 %v1338, 32
    %v1395 = vpop.permute.xlu0 %1394
    %1396 = vrot.lane.b32.xlu0 %v1339, 32
    %v1397 = vpop.permute.xlu0 %1396
    %1398 = vrot.lane.b32.xlu0 %v1340, 32
    %v1399 = vpop.permute.xlu0 %1398
    %1400 = vrot.lane.b32.xlu0 %v1341, 32
    %v1401 = vpop.permute.xlu0 %1400
    %1402 = vrot.lane.b32.xlu0 %v1342, 32
    %v1403 = vpop.permute.xlu0 %1402
    %1404 = vrot.lane.b32.xlu0 %v1343, 32
    %v1405 = vpop.permute.xlu0 %1404
    %1406 = vrot.lane.b32.xlu0 %v1344, 32
    %v1407 = vpop.permute.xlu0 %1406
    %1408 = vrot.lane.b32.xlu0 %v1345, 32
    %v1409 = vpop.permute.xlu0 %1408
    %v1410 = vsel %vm457, %v1407, %v1409
    %v1411 = vsel %vm457, %v1405, %v1407
    %v1412 = vsel %vm457, %v1403, %v1405
    %v1413 = vsel %vm457, %v1401, %v1403
    %v1414 = vsel %vm457, %v1399, %v1401
    %v1415 = vsel %vm457, %v1397, %v1399
    %v1416 = vsel %vm457, %v1395, %v1397
    %v1417 = vsel %vm457, %v1409, %v1395
    %v1418 = vsel %vm257, 0.0, %v1417
    %v1419 = vsel %vm258, 0.0, %v1416
    %v1420 = vsel %vm259, 0.0, %v1415
    %v1421 = vsel %vm260, 0.0, %v1414
    %v1422 = vsel %vm261, 0.0, %v1413
    %v1423 = vsel %vm262, 0.0, %v1412
    %v1424 = vsel %vm263, 0.0, %v1411
    %v1425 = vsel %vm264, 0.0, %v1410
    %1426 = vst [vmem:[#allocation4 + $0x40] sm:$0xff] %v1418
    %1427 = vst [vmem:[#allocation4 + $0x48] sm:$0xff] %v1419
    %1428 = vst [vmem:[#allocation4 + $0x50] sm:$0xff] %v1420
    %1429 = vst [vmem:[#allocation4 + $0x58] sm:$0xff] %v1421
    %1430 = vst [vmem:[#allocation4 + $0x60] sm:$0xff] %v1422
    %1431 = vst [vmem:[#allocation4 + $0x68] sm:$0xff] %v1423
    %1432 = vst [vmem:[#allocation4 + $0x70] sm:$0xff] %v1424
    %1433 = vst [vmem:[#allocation4 + $0x78] sm:$0xff] %v1425
    %1434 = vrot.lane.b32.xlu0 %v1338, 31
    %v1435 = vpop.permute.xlu0 %1434
    %1436 = vrot.lane.b32.xlu0 %v1339, 31
    %v1437 = vpop.permute.xlu0 %1436
    %1438 = vrot.lane.b32.xlu0 %v1340, 31
    %v1439 = vpop.permute.xlu0 %1438
    %1440 = vrot.lane.b32.xlu0 %v1341, 31
    %v1441 = vpop.permute.xlu0 %1440
    %1442 = vrot.lane.b32.xlu0 %v1342, 31
    %v1443 = vpop.permute.xlu0 %1442
    %1444 = vrot.lane.b32.xlu0 %v1343, 31
    %v1445 = vpop.permute.xlu0 %1444
    %1446 = vrot.lane.b32.xlu0 %v1344, 31
    %v1447 = vpop.permute.xlu0 %1446
    %1448 = vrot.lane.b32.xlu0 %v1345, 31
    %v1449 = vpop.permute.xlu0 %1448
    %v1450 = vsel %vm704, %v1447, %v1449
    %v1451 = vsel %vm704, %v1445, %v1447
    %v1452 = vsel %vm704, %v1443, %v1445
    %v1453 = vsel %vm704, %v1441, %v1443
    %v1454 = vsel %vm704, %v1439, %v1441
    %v1455 = vsel %vm704, %v1437, %v1439
    %v1456 = vsel %vm704, %v1435, %v1437
    %v1457 = vsel %vm704, %v1449, %v1435
    %v1458 = vsel %vm257, 0.0, %v1457
    %v1459 = vsel %vm258, 0.0, %v1456
    %v1460 = vsel %vm259, 0.0, %v1455
    %v1461 = vsel %vm260, 0.0, %v1454
    %v1462 = vsel %vm261, 0.0, %v1453
    %v1463 = vsel %vm262, 0.0, %v1452
    %v1464 = vsel %vm263, 0.0, %v1451
    %v1465 = vsel %vm264, 0.0, %v1450
    %v1466 = vsel %vm217, 0.0, %v1458
    %v1467 = vsel %vm218, 0.0, %v1459
    %v1468 = vsel %vm219, 0.0, %v1460
    %v1469 = vsel %vm220, 0.0, %v1461
    %v1470 = vsel %vm221, 0.0, %v1462
    %v1471 = vsel %vm222, 0.0, %v1463
    %v1472 = vsel %vm223, 0.0, %v1464
    %v1473 = vsel %vm224, 0.0, %v1465
    %1474 = vst [vmem:[#allocation4 + $0x80] sm:$0xff] %v1466
    %1475 = vst [vmem:[#allocation4 + $0x88] sm:$0xff] %v1467
    %1476 = vst [vmem:[#allocation4 + $0x90] sm:$0xff] %v1468
    %1477 = vst [vmem:[#allocation4 + $0x98] sm:$0xff] %v1469
    %1478 = vst [vmem:[#allocation4 + $0xa0] sm:$0xff] %v1470
    %1479 = vst [vmem:[#allocation4 + $0xa8] sm:$0xff] %v1471
    %1480 = vst [vmem:[#allocation4 + $0xb0] sm:$0xff] %v1472
    %1481 = vst [vmem:[#allocation4 + $0xb8] sm:$0xff] %v1473
    %1482 = vrot.lane.b32.xlu0 %v1338, 1
    %v1483 = vpop.permute.xlu0 %1482
    %1484 = vrot.lane.b32.xlu0 %v1339, 1
    %v1485 = vpop.permute.xlu0 %1484
    %1486 = vrot.lane.b32.xlu0 %v1340, 1
    %v1487 = vpop.permute.xlu0 %1486
    %1488 = vrot.lane.b32.xlu0 %v1341, 1
    %v1489 = vpop.permute.xlu0 %1488
    %1490 = vrot.lane.b32.xlu0 %v1342, 1
    %v1491 = vpop.permute.xlu0 %1490
    %1492 = vrot.lane.b32.xlu0 %v1343, 1
    %v1493 = vpop.permute.xlu0 %1492
    %1494 = vrot.lane.b32.xlu0 %v1344, 1
    %v1495 = vpop.permute.xlu0 %1494
    %1496 = vrot.lane.b32.xlu0 %v1345, 1
    %v1497 = vpop.permute.xlu0 %1496
    %v1498 = vsel %vm339, %v1495, %v1497
    %v1499 = vsel %vm339, %v1493, %v1495
    %v1500 = vsel %vm339, %v1491, %v1493
    %v1501 = vsel %vm339, %v1489, %v1491
    %v1502 = vsel %vm339, %v1487, %v1489
    %v1503 = vsel %vm339, %v1485, %v1487
    %v1504 = vsel %vm339, %v1483, %v1485
    %v1505 = vsel %vm339, %v1497, %v1483
    %v1506 = vsel %vm177, 0.0, %v1505
    %v1507 = vsel %vm178, 0.0, %v1504
    %v1508 = vsel %vm179, 0.0, %v1503
    %v1509 = vsel %vm180, 0.0, %v1502
    %v1510 = vsel %vm181, 0.0, %v1501
    %v1511 = vsel %vm182, 0.0, %v1500
    %v1512 = vsel %vm183, 0.0, %v1499
    %v1513 = vsel %vm184, 0.0, %v1498
    %1514 = vst [vmem:[#allocation4 + $0xc0] sm:$0xff] %v1506
    %1515 = vst [vmem:[#allocation4 + $0xc8] sm:$0xff] %v1507
    %1516 = vst [vmem:[#allocation4 + $0xd0] sm:$0xff] %v1508
    %1517 = vst [vmem:[#allocation4 + $0xd8] sm:$0xff] %v1509
    %1518 = vst [vmem:[#allocation4 + $0xe0] sm:$0xff] %v1510
    %1519 = vst [vmem:[#allocation4 + $0xe8] sm:$0xff] %v1511
    %1520 = vst [vmem:[#allocation4 + $0xf0] sm:$0xff] %v1512
    %1521 = vst [vmem:[#allocation4 + $0xf8] sm:$0xff] %v1513
    %1522 = vst [vmem:[#allocation4 + $0x100] sm:$0xff] %v1338
    %1523 = vst [vmem:[#allocation4 + $0x108] sm:$0xff] %v1339
    %1524 = vst [vmem:[#allocation4 + $0x110] sm:$0xff] %v1340
    %1525 = vst [vmem:[#allocation4 + $0x118] sm:$0xff] %v1341
    %1526 = vst [vmem:[#allocation4 + $0x120] sm:$0xff] %v1342
    %1527 = vst [vmem:[#allocation4 + $0x128] sm:$0xff] %v1343
    %1528 = vst [vmem:[#allocation4 + $0x130] sm:$0xff] %v1344
    %1529 = vst [vmem:[#allocation4 + $0x138] sm:$0xff] %v1345
    %1530 = vrot.lane.b32.xlu0 %v1338, 127
    %v1531 = vpop.permute.xlu0 %1530
    %1532 = vrot.lane.b32.xlu0 %v1339, 127
    %v1533 = vpop.permute.xlu0 %1532
    %1534 = vrot.lane.b32.xlu0 %v1340, 127
    %v1535 = vpop.permute.xlu0 %1534
    %1536 = vrot.lane.b32.xlu0 %v1341, 127
    %v1537 = vpop.permute.xlu0 %1536
    %1538 = vrot.lane.b32.xlu0 %v1342, 127
    %v1539 = vpop.permute.xlu0 %1538
    %1540 = vrot.lane.b32.xlu0 %v1343, 127
    %v1541 = vpop.permute.xlu0 %1540
    %1542 = vrot.lane.b32.xlu0 %v1344, 127
    %v1543 = vpop.permute.xlu0 %1542
    %1544 = vrot.lane.b32.xlu0 %v1345, 127
    %v1545 = vpop.permute.xlu0 %1544
    %v1546 = vsel %vm372, %v1543, %v1545
    %v1547 = vsel %vm372, %v1541, %v1543
    %v1548 = vsel %vm372, %v1539, %v1541
    %v1549 = vsel %vm372, %v1537, %v1539
    %v1550 = vsel %vm372, %v1535, %v1537
    %v1551 = vsel %vm372, %v1533, %v1535
    %v1552 = vsel %vm372, %v1531, %v1533
    %v1553 = vsel %vm372, %v1545, %v1531
    %v1554 = vsel %vm217, 0.0, %v1552
    %v1555 = vsel %vm218, 0.0, %v1551
    %v1556 = vsel %vm219, 0.0, %v1550
    %v1557 = vsel %vm220, 0.0, %v1549
    %v1558 = vsel %vm221, 0.0, %v1548
    %v1559 = vsel %vm222, 0.0, %v1547
    %v1560 = vsel %vm223, 0.0, %v1546
    %v1561 = vsel %vm224, 0.0, %v1553
    %1562 = vst [vmem:[#allocation4 + $0x140] sm:$0xff] %v1554
    %1563 = vst [vmem:[#allocation4 + $0x148] sm:$0xff] %v1555
    %1564 = vst [vmem:[#allocation4 + $0x150] sm:$0xff] %v1556
    %1565 = vst [vmem:[#allocation4 + $0x158] sm:$0xff] %v1557
    %1566 = vst [vmem:[#allocation4 + $0x160] sm:$0xff] %v1558
    %1567 = vst [vmem:[#allocation4 + $0x168] sm:$0xff] %v1559
    %1568 = vst [vmem:[#allocation4 + $0x170] sm:$0xff] %v1560
    %1569 = vst [vmem:[#allocation4 + $0x178] sm:$0xff] %v1561
    %1570 = vrot.lane.b32.xlu0 %v1338, 97
    %v1571 = vpop.permute.xlu0 %1570
    %1572 = vrot.lane.b32.xlu0 %v1339, 97
    %v1573 = vpop.permute.xlu0 %1572
    %1574 = vrot.lane.b32.xlu0 %v1340, 97
    %v1575 = vpop.permute.xlu0 %1574
    %1576 = vrot.lane.b32.xlu0 %v1341, 97
    %v1577 = vpop.permute.xlu0 %1576
    %1578 = vrot.lane.b32.xlu0 %v1342, 97
    %v1579 = vpop.permute.xlu0 %1578
    %1580 = vrot.lane.b32.xlu0 %v1343, 97
    %v1581 = vpop.permute.xlu0 %1580
    %1582 = vrot.lane.b32.xlu0 %v1344, 97
    %v1583 = vpop.permute.xlu0 %1582
    %1584 = vrot.lane.b32.xlu0 %v1345, 97
    %v1585 = vpop.permute.xlu0 %1584
    %v1586 = vsel %vm841, %v1583, %v1585
    %v1587 = vsel %vm841, %v1581, %v1583
    %v1588 = vsel %vm841, %v1579, %v1581
    %v1589 = vsel %vm841, %v1577, %v1579
    %v1590 = vsel %vm841, %v1575, %v1577
    %v1591 = vsel %vm841, %v1573, %v1575
    %v1592 = vsel %vm841, %v1571, %v1573
    %v1593 = vsel %vm841, %v1585, %v1571
    %v1594 = vsel %vm297, 0.0, %v1592
    %v1595 = vsel %vm298, 0.0, %v1591
    %v1596 = vsel %vm299, 0.0, %v1590
    %v1597 = vsel %vm300, 0.0, %v1589
    %v1598 = vsel %vm301, 0.0, %v1588
    %v1599 = vsel %vm302, 0.0, %v1587
    %v1600 = vsel %vm303, 0.0, %v1586
    %v1601 = vsel %vm304, 0.0, %v1593
    %v1602 = vsel %vm177, 0.0, %v1594
    %v1603 = vsel %vm178, 0.0, %v1595
    %v1604 = vsel %vm179, 0.0, %v1596
    %v1605 = vsel %vm180, 0.0, %v1597
    %v1606 = vsel %vm181, 0.0, %v1598
    %v1607 = vsel %vm182, 0.0, %v1599
    %v1608 = vsel %vm183, 0.0, %v1600
    %v1609 = vsel %vm184, 0.0, %v1601
    %1610 = vst [vmem:[#allocation4 + $0x180] sm:$0xff] %v1602
    %1611 = vst [vmem:[#allocation4 + $0x188] sm:$0xff] %v1603
    %1612 = vst [vmem:[#allocation4 + $0x190] sm:$0xff] %v1604
    %1613 = vst [vmem:[#allocation4 + $0x198] sm:$0xff] %v1605
    %1614 = vst [vmem:[#allocation4 + $0x1a0] sm:$0xff] %v1606
    %1615 = vst [vmem:[#allocation4 + $0x1a8] sm:$0xff] %v1607
    %1616 = vst [vmem:[#allocation4 + $0x1b0] sm:$0xff] %v1608
    %1617 = vst [vmem:[#allocation4 + $0x1b8] sm:$0xff] %v1609
    %1618 = vrot.lane.b32.xlu0 %v1338, 96
    %v1619 = vpop.permute.xlu0 %1618
    %1620 = vrot.lane.b32.xlu0 %v1339, 96
    %v1621 = vpop.permute.xlu0 %1620
    %1622 = vrot.lane.b32.xlu0 %v1340, 96
    %v1623 = vpop.permute.xlu0 %1622
    %1624 = vrot.lane.b32.xlu0 %v1341, 96
    %v1625 = vpop.permute.xlu0 %1624
    %1626 = vrot.lane.b32.xlu0 %v1342, 96
    %v1627 = vpop.permute.xlu0 %1626
    %1628 = vrot.lane.b32.xlu0 %v1343, 96
    %v1629 = vpop.permute.xlu0 %1628
    %1630 = vrot.lane.b32.xlu0 %v1344, 96
    %v1631 = vpop.permute.xlu0 %1630
    %1632 = vrot.lane.b32.xlu0 %v1345, 96
    %v1633 = vpop.permute.xlu0 %1632
    %v1634 = vsel %vm490, %v1631, %v1633
    %v1635 = vsel %vm490, %v1629, %v1631
    %v1636 = vsel %vm490, %v1627, %v1629
    %v1637 = vsel %vm490, %v1625, %v1627
    %v1638 = vsel %vm490, %v1623, %v1625
    %v1639 = vsel %vm490, %v1621, %v1623
    %v1640 = vsel %vm490, %v1619, %v1621
    %v1641 = vsel %vm490, %v1633, %v1619
    %v1642 = vsel %vm297, 0.0, %v1640
    %v1643 = vsel %vm298, 0.0, %v1639
    %v1644 = vsel %vm299, 0.0, %v1638
    %v1645 = vsel %vm300, 0.0, %v1637
    %v1646 = vsel %vm301, 0.0, %v1636
    %v1647 = vsel %vm302, 0.0, %v1635
    %v1648 = vsel %vm303, 0.0, %v1634
    %v1649 = vsel %vm304, 0.0, %v1641
    %1650 = vst [vmem:[#allocation4 + $0x1c0] sm:$0xff] %v1642
    %1651 = vst [vmem:[#allocation4 + $0x1c8] sm:$0xff] %v1643
    %1652 = vst [vmem:[#allocation4 + $0x1d0] sm:$0xff] %v1644
    %1653 = vst [vmem:[#allocation4 + $0x1d8] sm:$0xff] %v1645
    %1654 = vst [vmem:[#allocation4 + $0x1e0] sm:$0xff] %v1646
    %1655 = vst [vmem:[#allocation4 + $0x1e8] sm:$0xff] %v1647
    %1656 = vst [vmem:[#allocation4 + $0x1f0] sm:$0xff] %v1648
    %1657 = vst [vmem:[#allocation4 + $0x1f8] sm:$0xff] %v1649
    %1658 = vrot.lane.b32.xlu0 %v1338, 95
    %v1659 = vpop.permute.xlu0 %1658
    %1660 = vrot.lane.b32.xlu0 %v1339, 95
    %v1661 = vpop.permute.xlu0 %1660
    %1662 = vrot.lane.b32.xlu0 %v1340, 95
    %v1663 = vpop.permute.xlu0 %1662
    %1664 = vrot.lane.b32.xlu0 %v1341, 95
    %v1665 = vpop.permute.xlu0 %1664
    %1666 = vrot.lane.b32.xlu0 %v1342, 95
    %v1667 = vpop.permute.xlu0 %1666
    %1668 = vrot.lane.b32.xlu0 %v1343, 95
    %v1669 = vpop.permute.xlu0 %1668
    %1670 = vrot.lane.b32.xlu0 %v1344, 95
    %v1671 = vpop.permute.xlu0 %1670
    %1672 = vrot.lane.b32.xlu0 %v1345, 95
    %v1673 = vpop.permute.xlu0 %1672
    %v1674 = vsel %vm930, %v1671, %v1673
    %v1675 = vsel %vm930, %v1669, %v1671
    %v1676 = vsel %vm930, %v1667, %v1669
    %v1677 = vsel %vm930, %v1665, %v1667
    %v1678 = vsel %vm930, %v1663, %v1665
    %v1679 = vsel %vm930, %v1661, %v1663
    %v1680 = vsel %vm930, %v1659, %v1661
    %v1681 = vsel %vm930, %v1673, %v1659
    %v1682 = vsel %vm297, 0.0, %v1680
    %v1683 = vsel %vm298, 0.0, %v1679
    %v1684 = vsel %vm299, 0.0, %v1678
    %v1685 = vsel %vm300, 0.0, %v1677
    %v1686 = vsel %vm301, 0.0, %v1676
    %v1687 = vsel %vm302, 0.0, %v1675
    %v1688 = vsel %vm303, 0.0, %v1674
    %v1689 = vsel %vm304, 0.0, %v1681
    %v1690 = vsel %vm217, 0.0, %v1682
    %v1691 = vsel %vm218, 0.0, %v1683
    %v1692 = vsel %vm219, 0.0, %v1684
    %v1693 = vsel %vm220, 0.0, %v1685
    %v1694 = vsel %vm221, 0.0, %v1686
    %v1695 = vsel %vm222, 0.0, %v1687
    %v1696 = vsel %vm223, 0.0, %v1688
    %v1697 = vsel %vm224, 0.0, %v1689
    %1698 = vst [vmem:[#allocation4 + $0x200] sm:$0xff] %v1690
    %1699 = vst [vmem:[#allocation4 + $0x208] sm:$0xff] %v1691
    %1700 = vst [vmem:[#allocation4 + $0x210] sm:$0xff] %v1692
    %1701 = vst [vmem:[#allocation4 + $0x218] sm:$0xff] %v1693
    %1702 = vst [vmem:[#allocation4 + $0x220] sm:$0xff] %v1694
    %1703 = vst [vmem:[#allocation4 + $0x228] sm:$0xff] %v1695
    %1704 = vst [vmem:[#allocation4 + $0x230] sm:$0xff] %v1696
    %1705 = vst [vmem:[#allocation4 + $0x238] sm:$0xff] %v1697
    %v1706 = vld [vmem:[%s5] sm:$0xff]
    %v1707 = vld [vmem:[#allocation4] sm:$0xff]
    %v1708 = vld [vmem:[#allocation4 + $0x8] sm:$0xff]
    %v1709 = vld [vmem:[#allocation4 + $0x10] sm:$0xff]
    %v1710 = vld [vmem:[#allocation4 + $0x18] sm:$0xff]
    %v1711 = vld [vmem:[#allocation4 + $0x20] sm:$0xff]
    %v1712 = vld [vmem:[#allocation4 + $0x28] sm:$0xff]
    %v1713 = vld [vmem:[#allocation4 + $0x30] sm:$0xff]
    %v1714 = vld [vmem:[#allocation4 + $0x38] sm:$0xff]
    %v1715 = vld [vmem:[#allocation4 + $0x40] sm:$0xff]
    %v1716 = vld [vmem:[#allocation4 + $0x48] sm:$0xff]
    %v1717 = vld [vmem:[#allocation4 + $0x50] sm:$0xff]
    %v1718 = vld [vmem:[#allocation4 + $0x58] sm:$0xff]
    %v1719 = vld [vmem:[#allocation4 + $0x60] sm:$0xff]
    %v1720 = vld [vmem:[#allocation4 + $0x68] sm:$0xff]
    %v1721 = vld [vmem:[#allocation4 + $0x70] sm:$0xff]
    %v1722 = vld [vmem:[#allocation4 + $0x78] sm:$0xff]
    %v1723 = vld [vmem:[#allocation4 + $0x80] sm:$0xff]
    %v1724 = vld [vmem:[#allocation4 + $0x88] sm:$0xff]
    %v1725 = vld [vmem:[#allocation4 + $0x90] sm:$0xff]
    %v1726 = vld [vmem:[#allocation4 + $0x98] sm:$0xff]
    %v1727 = vld [vmem:[#allocation4 + $0xa0] sm:$0xff]
    %v1728 = vld [vmem:[#allocation4 + $0xa8] sm:$0xff]
    %v1729 = vld [vmem:[#allocation4 + $0xb0] sm:$0xff]
    %v1730 = vld [vmem:[#allocation4 + $0xb8] sm:$0xff]
    %v1731 = vld [vmem:[#allocation4 + $0xc0] sm:$0xff]
    %v1732 = vld [vmem:[#allocation4 + $0xc8] sm:$0xff]
    %v1733 = vld [vmem:[#allocation4 + $0xd0] sm:$0xff]
    %v1734 = vld [vmem:[#allocation4 + $0xd8] sm:$0xff]
    %v1735 = vld [vmem:[#allocation4 + $0xe0] sm:$0xff]
    %v1736 = vld [vmem:[#allocation4 + $0xe8] sm:$0xff]
    %v1737 = vld [vmem:[#allocation4 + $0xf0] sm:$0xff]
    %v1738 = vld [vmem:[#allocation4 + $0xf8] sm:$0xff]
    %v1739 = vld [vmem:[#allocation4 + $0x100] sm:$0xff]
    %v1740 = vld [vmem:[#allocation4 + $0x108] sm:$0xff]
    %v1741 = vld [vmem:[#allocation4 + $0x110] sm:$0xff]
    %v1742 = vld [vmem:[#allocation4 + $0x118] sm:$0xff]
    %v1743 = vld [vmem:[#allocation4 + $0x120] sm:$0xff]
    %v1744 = vld [vmem:[#allocation4 + $0x128] sm:$0xff]
    %v1745 = vld [vmem:[#allocation4 + $0x130] sm:$0xff]
    %v1746 = vld [vmem:[#allocation4 + $0x138] sm:$0xff]
    %v1747 = vld [vmem:[#allocation4 + $0x140] sm:$0xff]
    %v1748 = vld [vmem:[#allocation4 + $0x148] sm:$0xff]
    %v1749 = vld [vmem:[#allocation4 + $0x150] sm:$0xff]
    %v1750 = vld [vmem:[#allocation4 + $0x158] sm:$0xff]
    %v1751 = vld [vmem:[#allocation4 + $0x160] sm:$0xff]
    %v1752 = vld [vmem:[#allocation4 + $0x168] sm:$0xff]
    %v1753 = vld [vmem:[#allocation4 + $0x170] sm:$0xff]
    %v1754 = vld [vmem:[#allocation4 + $0x178] sm:$0xff]
    %v1755 = vld [vmem:[#allocation4 + $0x180] sm:$0xff]
    %v1756 = vld [vmem:[#allocation4 + $0x188] sm:$0xff]
    %v1757 = vld [vmem:[#allocation4 + $0x190] sm:$0xff]
    %v1758 = vld [vmem:[#allocation4 + $0x198] sm:$0xff]
    %v1759 = vld [vmem:[#allocation4 + $0x1a0] sm:$0xff]
    %v1760 = vld [vmem:[#allocation4 + $0x1a8] sm:$0xff]
    %v1761 = vld [vmem:[#allocation4 + $0x1b0] sm:$0xff]
    %v1762 = vld [vmem:[#allocation4 + $0x1b8] sm:$0xff]
    %v1763 = vld [vmem:[#allocation4 + $0x1c0] sm:$0xff]
    %v1764 = vld [vmem:[#allocation4 + $0x1c8] sm:$0xff]
    %v1765 = vld [vmem:[#allocation4 + $0x1d0] sm:$0xff]
    %v1766 = vld [vmem:[#allocation4 + $0x1d8] sm:$0xff]
    %v1767 = vld [vmem:[#allocation4 + $0x1e0] sm:$0xff]
    %v1768 = vld [vmem:[#allocation4 + $0x1e8] sm:$0xff]
    %v1769 = vld [vmem:[#allocation4 + $0x1f0] sm:$0xff]
    %v1770 = vld [vmem:[#allocation4 + $0x1f8] sm:$0xff]
    %v1771 = vld [vmem:[#allocation4 + $0x200] sm:$0xff]
    %v1772 = vld [vmem:[#allocation4 + $0x208] sm:$0xff]
    %v1773 = vld [vmem:[#allocation4 + $0x210] sm:$0xff]
    %v1774 = vld [vmem:[#allocation4 + $0x218] sm:$0xff]
    %v1775 = vld [vmem:[#allocation4 + $0x220] sm:$0xff]
    %v1776 = vld [vmem:[#allocation4 + $0x228] sm:$0xff]
    %v1777 = vld [vmem:[#allocation4 + $0x230] sm:$0xff]
    %v1778 = vld [vmem:[#allocation4 + $0x238] sm:$0xff]
    %v1779 = vld [vmem:[%s6] sm:$0xff]
    %1781 = vset.pattern.permute.xlu0 0
    %1782 = vperm.xlu0 %1781, %v1779
    %v1783 = vpop.permute.xlu0 %1782
    %v1786 = vsel %vm1042, %v1706, 0
    %1788 = vmatprep.subr.mxu0 %v1708
    %1789 = vmatpush1.msra.mxu0 %v1707
    %1790 = vmatprep.subr.mxu0 %v1716
    %1791 = vmatpush1.msra.mxu0 %v1715
    %1792 = vmatprep.subr.mxu0 %v1724
    %1793 = vmatpush1.msra.mxu0 %v1723
    %1794 = vmatprep.subr.mxu0 %v1732
    %1795 = vmatpush1.msra.mxu0 %v1731
    %1796 = vmatprep.subr.mxu0 %v1740
    %1797 = vmatpush1.msra.mxu0 %v1739
    %1798 = vmatprep.subr.mxu0 %v1748
    %1799 = vmatpush1.msra.mxu0 %v1747
    %1800 = vmatprep.subr.mxu0 %v1756
    %1801 = vmatpush1.msra.mxu0 %v1755
    %1802 = vmatprep.subr.mxu0 %v1764
    %1803 = vmatpush1.msra.mxu0 %v1763
    %1804 = vmatprep.subr.mxu0 %v1772
    %1805 = vmatpush1.msra.mxu0 %v1771
    %1806 = vmatprep.subr.mxu0 0.0
    %1807 = vmatpush1.msra.mxu0 0.0
    %1808 = vmatprep.subr.mxu0 0.0
    %1809 = vmatpush1.msra.mxu0 0.0
    %1810 = vmatprep.subr.mxu0 0.0
    %1811 = vmatpush1.msra.mxu0 0.0
    %1812 = vmatprep.subr.mxu0 0.0
    %1813 = vmatpush1.msra.mxu0 0.0
    %1814 = vmatprep.subr.mxu0 0.0
    %1815 = vmatpush1.msra.mxu0 0.0
    %1816 = vmatprep.subr.mxu0 0.0
    %1817 = vmatpush1.msra.mxu0 0.0
    %1818 = vmatprep.subr.mxu0 0.0
    %1819 = vmatpush1.msra.mxu0 0.0
    %1820 = vmatprep.subr.mxu0 0.0
    %1821 = vmatpush1.msra.mxu0 0.0
    %1822 = vmatprep.subr.mxu0 0.0
    %1823 = vmatpush1.msra.mxu0 0.0
    %1824 = vmatprep.subr.mxu0 0.0
    %1825 = vmatpush1.msra.mxu0 0.0
    %1826 = vmatprep.subr.mxu0 0.0
    %1827 = vmatpush1.msra.mxu0 0.0
    %1828 = vmatprep.subr.mxu0 0.0
    %1829 = vmatpush1.msra.mxu0 0.0
    %1830 = vmatprep.subr.mxu0 0.0
    %1831 = vmatpush1.msra.mxu0 0.0
    %1832 = vmatprep.subr.mxu0 0.0
    %1833 = vmatpush1.msra.mxu0 0.0
    %1834 = vmatprep.subr.mxu0 0.0
    %1835 = vmatpush1.msra.mxu0 0.0
    %1836 = vmatprep.subr.mxu0 0.0
    %1837 = vmatpush1.msra.mxu0 0.0
    %1838 = vmatprep.subr.mxu0 0.0
    %1839 = vmatpush1.msra.mxu0 0.0
    %1840 = vmatprep.subr.mxu0 0.0
    %1841 = vmatpush1.msra.mxu0 0.0
    %1842 = vmatprep.subr.mxu0 0.0
    %1843 = vmatpush1.msra.mxu0 0.0
    %1844 = vmatprep.subr.mxu0 0.0
    %1845 = vmatpush1.msra.mxu0 0.0
    %1846 = vmatprep.subr.mxu0 0.0
    %1847 = vmatpush1.msra.mxu0 0.0
    %1848 = vmatprep.subr.mxu0 0.0
    %1849 = vmatpush1.msra.mxu0 0.0
    %1850 = vmatprep.subr.mxu0 0.0
    %1851 = vmatpush1.msra.mxu0 0.0
    %1852 = vmatprep.mubr.f32.mxu0 0.0
    %1853 = vmatmul.mubr.f32.gmra.mrb[0].mxu0 %v1786
    %v1854 = vpop.f32.mrb[0].mxu0
    %v1855 = vadd.f32 %v1783, %v1854
    %v1856 = vpop.f32.mrb[0].mxu0
    %v1857 = vadd.f32 %v1783, %v1856
    %1858 = vdwg.mxu0
    %1859 = vmatprep.subr.mxu0 %v1710
    %1860 = vmatpush1.msra.mxu0 %v1709
    %1861 = vmatprep.subr.mxu0 %v1718
    %1862 = vmatpush1.msra.mxu0 %v1717
    %1863 = vmatprep.subr.mxu0 %v1726
    %1864 = vmatpush1.msra.mxu0 %v1725
    %1865 = vmatprep.subr.mxu0 %v1734
    %1866 = vmatpush1.msra.mxu0 %v1733
    %1867 = vmatprep.subr.mxu0 %v1742
    %1868 = vmatpush1.msra.mxu0 %v1741
    %1869 = vmatprep.subr.mxu0 %v1750
    %1870 = vmatpush1.msra.mxu0 %v1749
    %1871 = vmatprep.subr.mxu0 %v1758
    %1872 = vmatpush1.msra.mxu0 %v1757
    %1873 = vmatprep.subr.mxu0 %v1766
    %1874 = vmatpush1.msra.mxu0 %v1765
    %1875 = vmatprep.subr.mxu0 %v1774
    %1876 = vmatpush1.msra.mxu0 %v1773
    %1877 = vmatprep.subr.mxu0 0.0
    %1878 = vmatpush1.msra.mxu0 0.0
    %1879 = vmatprep.subr.mxu0 0.0
    %1880 = vmatpush1.msra.mxu0 0.0
    %1881 = vmatprep.subr.mxu0 0.0
    %1882 = vmatpush1.msra.mxu0 0.0
    %1883 = vmatprep.subr.mxu0 0.0
    %1884 = vmatpush1.msra.mxu0 0.0
    %1885 = vmatprep.subr.mxu0 0.0
    %1886 = vmatpush1.msra.mxu0 0.0
    %1887 = vmatprep.subr.mxu0 0.0
    %1888 = vmatpush1.msra.mxu0 0.0
    %1889 = vmatprep.subr.mxu0 0.0
    %1890 = vmatpush1.msra.mxu0 0.0
    %1891 = vmatprep.subr.mxu0 0.0
    %1892 = vmatpush1.msra.mxu0 0.0
    %1893 = vmatprep.subr.mxu0 0.0
    %1894 = vmatpush1.msra.mxu0 0.0
    %1895 = vmatprep.subr.mxu0 0.0
    %1896 = vmatpush1.msra.mxu0 0.0
    %1897 = vmatprep.subr.mxu0 0.0
    %1898 = vmatpush1.msra.mxu0 0.0
    %1899 = vmatprep.subr.mxu0 0.0
    %1900 = vmatpush1.msra.mxu0 0.0
    %1901 = vmatprep.subr.mxu0 0.0
    %1902 = vmatpush1.msra.mxu0 0.0
    %1903 = vmatprep.subr.mxu0 0.0
    %1904 = vmatpush1.msra.mxu0 0.0
    %1905 = vmatprep.subr.mxu0 0.0
    %1906 = vmatpush1.msra.mxu0 0.0
    %1907 = vmatprep.subr.mxu0 0.0
    %1908 = vmatpush1.msra.mxu0 0.0
    %1909 = vmatprep.subr.mxu0 0.0
    %1910 = vmatpush1.msra.mxu0 0.0
    %1911 = vmatprep.subr.mxu0 0.0
    %1912 = vmatpush1.msra.mxu0 0.0
    %1913 = vmatprep.subr.mxu0 0.0
    %1914 = vmatpush1.msra.mxu0 0.0
    %1915 = vmatprep.subr.mxu0 0.0
    %1916 = vmatpush1.msra.mxu0 0.0
    %1917 = vmatprep.subr.mxu0 0.0
    %1918 = vmatpush1.msra.mxu0 0.0
    %1919 = vmatprep.subr.mxu0 0.0
    %1920 = vmatpush1.msra.mxu0 0.0
    %1921 = vmatprep.subr.mxu0 0.0
    %1922 = vmatpush1.msra.mxu0 0.0
    %1923 = vmatprep.mubr.f32.mxu0 0.0
    %1924 = vmatmul.mubr.f32.gmra.mrb[0].mxu0 %v1786
    %v1925 = vpop.f32.mrb[0].mxu0
    %v1926 = vadd.f32 %v1783, %v1925
    %v1927 = vpop.f32.mrb[0].mxu0
    %v1928 = vadd.f32 %v1783, %v1927
    %1929 = vdwg.mxu0
    %1930 = vmatprep.subr.mxu0 %v1712
    %1931 = vmatpush1.msra.mxu0 %v1711
    %1932 = vmatprep.subr.mxu0 %v1720
    %1933 = vmatpush1.msra.mxu0 %v1719
    %1934 = vmatprep.subr.mxu0 %v1728
    %1935 = vmatpush1.msra.mxu0 %v1727
    %1936 = vmatprep.subr.mxu0 %v1736
    %1937 = vmatpush1.msra.mxu0 %v1735
    %1938 = vmatprep.subr.mxu0 %v1744
    %1939 = vmatpush1.msra.mxu0 %v1743
    %1940 = vmatprep.subr.mxu0 %v1752
    %1941 = vmatpush1.msra.mxu0 %v1751
    %1942 = vmatprep.subr.mxu0 %v1760
    %1943 = vmatpush1.msra.mxu0 %v1759
    %1944 = vmatprep.subr.mxu0 %v1768
    %1945 = vmatpush1.msra.mxu0 %v1767
    %1946 = vmatprep.subr.mxu0 %v1776
    %1947 = vmatpush1.msra.mxu0 %v1775
    %1948 = vmatprep.subr.mxu0 0.0
    %1949 = vmatpush1.msra.mxu0 0.0
    %1950 = vmatprep.subr.mxu0 0.0
    %1951 = vmatpush1.msra.mxu0 0.0
    %1952 = vmatprep.subr.mxu0 0.0
    %1953 = vmatpush1.msra.mxu0 0.0
    %1954 = vmatprep.subr.mxu0 0.0
    %1955 = vmatpush1.msra.mxu0 0.0
    %1956 = vmatprep.subr.mxu0 0.0
    %1957 = vmatpush1.msra.mxu0 0.0
    %1958 = vmatprep.subr.mxu0 0.0
    %1959 = vmatpush1.msra.mxu0 0.0
    %1960 = vmatprep.subr.mxu0 0.0
    %1961 = vmatpush1.msra.mxu0 0.0
    %1962 = vmatprep.subr.mxu0 0.0
    %1963 = vmatpush1.msra.mxu0 0.0
    %1964 = vmatprep.subr.mxu0 0.0
    %1965 = vmatpush1.msra.mxu0 0.0
    %1966 = vmatprep.subr.mxu0 0.0
    %1967 = vmatpush1.msra.mxu0 0.0
    %1968 = vmatprep.subr.mxu0 0.0
    %1969 = vmatpush1.msra.mxu0 0.0
    %1970 = vmatprep.subr.mxu0 0.0
    %1971 = vmatpush1.msra.mxu0 0.0
    %1972 = vmatprep.subr.mxu0 0.0
    %1973 = vmatpush1.msra.mxu0 0.0
    %1974 = vmatprep.subr.mxu0 0.0
    %1975 = vmatpush1.msra.mxu0 0.0
    %1976 = vmatprep.subr.mxu0 0.0
    %1977 = vmatpush1.msra.mxu0 0.0
    %1978 = vmatprep.subr.mxu0 0.0
    %1979 = vmatpush1.msra.mxu0 0.0
    %1980 = vmatprep.subr.mxu0 0.0
    %1981 = vmatpush1.msra.mxu0 0.0
    %1982 = vmatprep.subr.mxu0 0.0
    %1983 = vmatpush1.msra.mxu0 0.0
    %1984 = vmatprep.subr.mxu0 0.0
    %1985 = vmatpush1.msra.mxu0 0.0
    %1986 = vmatprep.subr.mxu0 0.0
    %1987 = vmatpush1.msra.mxu0 0.0
    %1988 = vmatprep.subr.mxu0 0.0
    %1989 = vmatpush1.msra.mxu0 0.0
    %1990 = vmatprep.subr.mxu0 0.0
    %1991 = vmatpush1.msra.mxu0 0.0
    %1992 = vmatprep.subr.mxu0 0.0
    %1993 = vmatpush1.msra.mxu0 0.0
    %1994 = vmatprep.mubr.f32.mxu0 0.0
    %1995 = vmatmul.mubr.f32.gmra.mrb[0].mxu0 %v1786
    %v1996 = vpop.f32.mrb[0].mxu0
    %v1997 = vadd.f32 %v1783, %v1996
    %v1998 = vpop.f32.mrb[0].mxu0
    %v1999 = vadd.f32 %v1783, %v1998
    %2000 = vdwg.mxu0
    %2001 = vmatprep.subr.mxu0 %v1714
    %2002 = vmatpush1.msra.mxu0 %v1713
    %2003 = vmatprep.subr.mxu0 %v1722
    %2004 = vmatpush1.msra.mxu0 %v1721
    %2005 = vmatprep.subr.mxu0 %v1730
    %2006 = vmatpush1.msra.mxu0 %v1729
    %2007 = vmatprep.subr.mxu0 %v1738
    %2008 = vmatpush1.msra.mxu0 %v1737
    %2009 = vmatprep.subr.mxu0 %v1746
    %2010 = vmatpush1.msra.mxu0 %v1745
    %2011 = vmatprep.subr.mxu0 %v1754
    %2012 = vmatpush1.msra.mxu0 %v1753
    %2013 = vmatprep.subr.mxu0 %v1762
    %2014 = vmatpush1.msra.mxu0 %v1761
    %2015 = vmatprep.subr.mxu0 %v1770
    %2016 = vmatpush1.msra.mxu0 %v1769
    %2017 = vmatprep.subr.mxu0 %v1778
    %2018 = vmatpush1.msra.mxu0 %v1777
    %2019 = vmatprep.subr.mxu0 0.0
    %2020 = vmatpush1.msra.mxu0 0.0
    %2021 = vmatprep.subr.mxu0 0.0
    %2022 = vmatpush1.msra.mxu0 0.0
    %2023 = vmatprep.subr.mxu0 0.0
    %2024 = vmatpush1.msra.mxu0 0.0
    %2025 = vmatprep.subr.mxu0 0.0
    %2026 = vmatpush1.msra.mxu0 0.0
    %2027 = vmatprep.subr.mxu0 0.0
    %2028 = vmatpush1.msra.mxu0 0.0
    %2029 = vmatprep.subr.mxu0 0.0
    %2030 = vmatpush1.msra.mxu0 0.0
    %2031 = vmatprep.subr.mxu0 0.0
    %2032 = vmatpush1.msra.mxu0 0.0
    %2033 = vmatprep.subr.mxu0 0.0
    %2034 = vmatpush1.msra.mxu0 0.0
    %2035 = vmatprep.subr.mxu0 0.0
    %2036 = vmatpush1.msra.mxu0 0.0
    %2037 = vmatprep.subr.mxu0 0.0
    %2038 = vmatpush1.msra.mxu0 0.0
    %2039 = vmatprep.subr.mxu0 0.0
    %2040 = vmatpush1.msra.mxu0 0.0
    %2041 = vmatprep.subr.mxu0 0.0
    %2042 = vmatpush1.msra.mxu0 0.0
    %2043 = vmatprep.subr.mxu0 0.0
    %2044 = vmatpush1.msra.mxu0 0.0
    %2045 = vmatprep.subr.mxu0 0.0
    %2046 = vmatpush1.msra.mxu0 0.0
    %2047 = vmatprep.subr.mxu0 0.0
    %2048 = vmatpush1.msra.mxu0 0.0
    %2049 = vmatprep.subr.mxu0 0.0
    %2050 = vmatpush1.msra.mxu0 0.0
    %2051 = vmatprep.subr.mxu0 0.0
    %2052 = vmatpush1.msra.mxu0 0.0
    %2053 = vmatprep.subr.mxu0 0.0
    %2054 = vmatpush1.msra.mxu0 0.0
    %2055 = vmatprep.subr.mxu0 0.0
    %2056 = vmatpush1.msra.mxu0 0.0
    %2057 = vmatprep.subr.mxu0 0.0
    %2058 = vmatpush1.msra.mxu0 0.0
    %2059 = vmatprep.subr.mxu0 0.0
    %2060 = vmatpush1.msra.mxu0 0.0
    %2061 = vmatprep.subr.mxu0 0.0
    %2062 = vmatpush1.msra.mxu0 0.0
    %2063 = vmatprep.subr.mxu0 0.0
    %2064 = vmatpush1.msra.mxu0 0.0
    %2065 = vmatprep.mubr.f32.mxu0 0.0
    %2066 = vmatmul.mubr.f32.gmra.mrb[0].mxu0 %v1786
    %v2067 = vpop.f32.mrb[0].mxu0
    %v2068 = vadd.f32 %v1783, %v2067
    %v2069 = vpop.f32.mrb[0].mxu0
    %v2070 = vadd.f32 %v1783, %v2069
    %2071 = vdwg.mxu0
    %v2072 = vmul.f32 %v1855, 0.2
    %v2073 = vmul.f32 %v1857, 0.2
    %v2074 = vmul.f32 %v1926, 0.2
    %v2075 = vmul.f32 %v1928, 0.2
    %v2076 = vmul.f32 %v1997, 0.2
    %v2077 = vmul.f32 %v1999, 0.2
    %v2078 = vmul.f32 %v2068, 0.2
    %v2079 = vmul.f32 %v2070, 0.2
    %v2080 = vmax.f32 %v1855, %v2072
    %v2081 = vmax.f32 %v1857, %v2073
    %v2082 = vmax.f32 %v1926, %v2074
    %v2083 = vmax.f32 %v1928, %v2075
    %v2084 = vmax.f32 %v1997, %v2076
    %v2085 = vmax.f32 %v1999, %v2077
    %v2086 = vmax.f32 %v2068, %v2078
    %v2087 = vmax.f32 %v2070, %v2079
    %v2088 = vld [vmem:[%s7] sm:$0xff]
    %v2089 = vld [vmem:[%s0] sm:$0xff]
    %v2090 = vld [vmem:[%s0 + $0x8] sm:$0xff]
    %v2091 = vld [vmem:[%s0 + $0x10] sm:$0xff]
    %v2092 = vld [vmem:[%s0 + $0x18] sm:$0xff]
    %v2097 = vcombine.high %v2089, %v2089
    %v2098 = vcombine.high %v2090, %v2090
    %v2099 = vcombine.high %v2091, %v2091
    %v2100 = vcombine.high %v2092, %v2092
    %vm2101 = vcmask 31744
    %v2103 = vsel %vm2101, %v2088, 0
    %vm2105 = vcmask 1043456
    %v2106 = vsel %vm2105, %v2089, 0
    %v2108 = vsel %vm2105, %v2097, 0
    %v2110 = vsel %vm2105, %v2090, 0
    %v2112 = vsel %vm2105, %v2098, 0
    %v2114 = vsel %vm2105, %v2091, 0
    %v2116 = vsel %vm2105, %v2099, 0
    %v2118 = vsel %vm2105, %v2092, 0
    %v2120 = vsel %vm2105, %v2100, 0
    %2122 = vmatprep.subr.mxu0 %v2108
    %2123 = vmatpush1.msra.mxu0 %v2106
    %2124 = vmatprep.subr.mxu0 0.0
    %2125 = vmatpush1.msra.mxu0 0.0
    %2126 = vmatprep.subr.mxu0 0.0
    %2127 = vmatpush1.msra.mxu0 0.0
    %2128 = vmatprep.subr.mxu0 0.0
    %2129 = vmatpush1.msra.mxu0 0.0
    %2130 = vmatprep.subr.mxu0 0.0
    %2131 = vmatpush1.msra.mxu0 0.0
    %2132 = vmatprep.subr.mxu0 0.0
    %2133 = vmatpush1.msra.mxu0 0.0
    %2134 = vmatprep.subr.mxu0 0.0
    %2135 = vmatpush1.msra.mxu0 0.0
    %2136 = vmatprep.subr.mxu0 0.0
    %2137 = vmatpush1.msra.mxu0 0.0
    %2138 = vmatprep.subr.mxu0 0.0
    %2139 = vmatpush1.msra.mxu0 0.0
    %2140 = vmatprep.subr.mxu0 0.0
    %2141 = vmatpush1.msra.mxu0 0.0
    %2142 = vmatprep.subr.mxu0 0.0
    %2143 = vmatpush1.msra.mxu0 0.0
    %2144 = vmatprep.subr.mxu0 0.0
    %2145 = vmatpush1.msra.mxu0 0.0
    %2146 = vmatprep.subr.mxu0 0.0
    %2147 = vmatpush1.msra.mxu0 0.0
    %2148 = vmatprep.subr.mxu0 0.0
    %2149 = vmatpush1.msra.mxu0 0.0
    %2150 = vmatprep.subr.mxu0 0.0
    %2151 = vmatpush1.msra.mxu0 0.0
    %2152 = vmatprep.subr.mxu0 0.0
    %2153 = vmatpush1.msra.mxu0 0.0
    %2154 = vmatprep.subr.mxu0 0.0
    %2155 = vmatpush1.msra.mxu0 0.0
    %2156 = vmatprep.subr.mxu0 0.0
    %2157 = vmatpush1.msra.mxu0 0.0
    %2158 = vmatprep.subr.mxu0 0.0
    %2159 = vmatpush1.msra.mxu0 0.0
    %2160 = vmatprep.subr.mxu0 0.0
    %2161 = vmatpush1.msra.mxu0 0.0
    %2162 = vmatprep.subr.mxu0 0.0
    %2163 = vmatpush1.msra.mxu0 0.0
    %2164 = vmatprep.subr.mxu0 0.0
    %2165 = vmatpush1.msra.mxu0 0.0
    %2166 = vmatprep.subr.mxu0 0.0
    %2167 = vmatpush1.msra.mxu0 0.0
    %2168 = vmatprep.subr.mxu0 0.0
    %2169 = vmatpush1.msra.mxu0 0.0
    %2170 = vmatprep.subr.mxu0 0.0
    %2171 = vmatpush1.msra.mxu0 0.0
    %2172 = vmatprep.subr.mxu0 0.0
    %2173 = vmatpush1.msra.mxu0 0.0
    %2174 = vmatprep.subr.mxu0 0.0
    %2175 = vmatpush1.msra.mxu0 0.0
    %2176 = vmatprep.subr.mxu0 0.0
    %2177 = vmatpush1.msra.mxu0 0.0
    %2178 = vmatprep.subr.mxu0 0.0
    %2179 = vmatpush1.msra.mxu0 0.0
    %2180 = vmatprep.subr.mxu0 0.0
    %2181 = vmatpush1.msra.mxu0 0.0
    %2182 = vmatprep.subr.mxu0 0.0
    %2183 = vmatpush1.msra.mxu0 0.0
    %2184 = vmatprep.subr.mxu0 0.0
    %2185 = vmatpush1.msra.mxu0 0.0
    %2186 = vmatprep.mubr.f32.mxu0 0.0
    %2187 = vmatmul.mubr.f32.gmra.mrb[0].mxu0 %v2103
    %v2188 = vpop.f32.mrb[0].mxu0
    %v2189 = vadd.f32 0.0, %v2188
    %v2190 = vpop.f32.mrb[0].mxu0
    %v2191 = vadd.f32 0.0, %v2190
    %2192 = vdwg.mxu0
    %2193 = vmatprep.subr.mxu0 %v2112
    %2194 = vmatpush1.msra.mxu0 %v2110
    %2195 = vmatprep.subr.mxu0 0.0
    %2196 = vmatpush1.msra.mxu0 0.0
    %2197 = vmatprep.subr.mxu0 0.0
    %2198 = vmatpush1.msra.mxu0 0.0
    %2199 = vmatprep.subr.mxu0 0.0
    %2200 = vmatpush1.msra.mxu0 0.0
    %2201 = vmatprep.subr.mxu0 0.0
    %2202 = vmatpush1.msra.mxu0 0.0
    %2203 = vmatprep.subr.mxu0 0.0
    %2204 = vmatpush1.msra.mxu0 0.0
    %2205 = vmatprep.subr.mxu0 0.0
    %2206 = vmatpush1.msra.mxu0 0.0
    %2207 = vmatprep.subr.mxu0 0.0
    %2208 = vmatpush1.msra.mxu0 0.0
    %2209 = vmatprep.subr.mxu0 0.0
    %2210 = vmatpush1.msra.mxu0 0.0
    %2211 = vmatprep.subr.mxu0 0.0
    %2212 = vmatpush1.msra.mxu0 0.0
    %2213 = vmatprep.subr.mxu0 0.0
    %2214 = vmatpush1.msra.mxu0 0.0
    %2215 = vmatprep.subr.mxu0 0.0
    %2216 = vmatpush1.msra.mxu0 0.0
    %2217 = vmatprep.subr.mxu0 0.0
    %2218 = vmatpush1.msra.mxu0 0.0
    %2219 = vmatprep.subr.mxu0 0.0
    %2220 = vmatpush1.msra.mxu0 0.0
    %2221 = vmatprep.subr.mxu0 0.0
    %2222 = vmatpush1.msra.mxu0 0.0
    %2223 = vmatprep.subr.mxu0 0.0
    %2224 = vmatpush1.msra.mxu0 0.0
    %2225 = vmatprep.subr.mxu0 0.0
    %2226 = vmatpush1.msra.mxu0 0.0
    %2227 = vmatprep.subr.mxu0 0.0
    %2228 = vmatpush1.msra.mxu0 0.0
    %2229 = vmatprep.subr.mxu0 0.0
    %2230 = vmatpush1.msra.mxu0 0.0
    %2231 = vmatprep.subr.mxu0 0.0
    %2232 = vmatpush1.msra.mxu0 0.0
    %2233 = vmatprep.subr.mxu0 0.0
    %2234 = vmatpush1.msra.mxu0 0.0
    %2235 = vmatprep.subr.mxu0 0.0
    %2236 = vmatpush1.msra.mxu0 0.0
    %2237 = vmatprep.subr.mxu0 0.0
    %2238 = vmatpush1.msra.mxu0 0.0
    %2239 = vmatprep.subr.mxu0 0.0
    %2240 = vmatpush1.msra.mxu0 0.0
    %2241 = vmatprep.subr.mxu0 0.0
    %2242 = vmatpush1.msra.mxu0 0.0
    %2243 = vmatprep.subr.mxu0 0.0
    %2244 = vmatpush1.msra.mxu0 0.0
    %2245 = vmatprep.subr.mxu0 0.0
    %2246 = vmatpush1.msra.mxu0 0.0
    %2247 = vmatprep.subr.mxu0 0.0
    %2248 = vmatpush1.msra.mxu0 0.0
    %2249 = vmatprep.subr.mxu0 0.0
    %2250 = vmatpush1.msra.mxu0 0.0
    %2251 = vmatprep.subr.mxu0 0.0
    %2252 = vmatpush1.msra.mxu0 0.0
    %2253 = vmatprep.subr.mxu0 0.0
    %2254 = vmatpush1.msra.mxu0 0.0
    %2255 = vmatprep.subr.mxu0 0.0
    %2256 = vmatpush1.msra.mxu0 0.0
    %2257 = vmatprep.mubr.f32.mxu0 0.0
    %2258 = vmatmul.mubr.f32.gmra.mrb[0].mxu0 %v2103
    %v2259 = vpop.f32.mrb[0].mxu0
    %v2260 = vadd.f32 0.0, %v2259
    %v2261 = vpop.f32.mrb[0].mxu0
    %v2262 = vadd.f32 0.0, %v2261
    %2263 = vdwg.mxu0
    %2264 = vmatprep.subr.mxu0 %v2116
    %2265 = vmatpush1.msra.mxu0 %v2114
    %2266 = vmatprep.subr.mxu0 0.0
    %2267 = vmatpush1.msra.mxu0 0.0
    %2268 = vmatprep.subr.mxu0 0.0
    %2269 = vmatpush1.msra.mxu0 0.0
    %2270 = vmatprep.subr.mxu0 0.0
    %2271 = vmatpush1.msra.mxu0 0.0
    %2272 = vmatprep.subr.mxu0 0.0
    %2273 = vmatpush1.msra.mxu0 0.0
    %2274 = vmatprep.subr.mxu0 0.0
    %2275 = vmatpush1.msra.mxu0 0.0
    %2276 = vmatprep.subr.mxu0 0.0
    %2277 = vmatpush1.msra.mxu0 0.0
    %2278 = vmatprep.subr.mxu0 0.0
    %2279 = vmatpush1.msra.mxu0 0.0
    %2280 = vmatprep.subr.mxu0 0.0
    %2281 = vmatpush1.msra.mxu0 0.0
    %2282 = vmatprep.subr.mxu0 0.0
    %2283 = vmatpush1.msra.mxu0 0.0
    %2284 = vmatprep.subr.mxu0 0.0
    %2285 = vmatpush1.msra.mxu0 0.0
    %2286 = vmatprep.subr.mxu0 0.0
    %2287 = vmatpush1.msra.mxu0 0.0
    %2288 = vmatprep.subr.mxu0 0.0
    %2289 = vmatpush1.msra.mxu0 0.0
    %2290 = vmatprep.subr.mxu0 0.0
    %2291 = vmatpush1.msra.mxu0 0.0
    %2292 = vmatprep.subr.mxu0 0.0
    %2293 = vmatpush1.msra.mxu0 0.0
    %2294 = vmatprep.subr.mxu0 0.0
    %2295 = vmatpush1.msra.mxu0 0.0
    %2296 = vmatprep.subr.mxu0 0.0
    %2297 = vmatpush1.msra.mxu0 0.0
    %2298 = vmatprep.subr.mxu0 0.0
    %2299 = vmatpush1.msra.mxu0 0.0
    %2300 = vmatprep.subr.mxu0 0.0
    %2301 = vmatpush1.msra.mxu0 0.0
    %2302 = vmatprep.subr.mxu0 0.0
    %2303 = vmatpush1.msra.mxu0 0.0
    %2304 = vmatprep.subr.mxu0 0.0
    %2305 = vmatpush1.msra.mxu0 0.0
    %2306 = vmatprep.subr.mxu0 0.0
    %2307 = vmatpush1.msra.mxu0 0.0
    %2308 = vmatprep.subr.mxu0 0.0
    %2309 = vmatpush1.msra.mxu0 0.0
    %2310 = vmatprep.subr.mxu0 0.0
    %2311 = vmatpush1.msra.mxu0 0.0
    %2312 = vmatprep.subr.mxu0 0.0
    %2313 = vmatpush1.msra.mxu0 0.0
    %2314 = vmatprep.subr.mxu0 0.0
    %2315 = vmatpush1.msra.mxu0 0.0
    %2316 = vmatprep.subr.mxu0 0.0
    %2317 = vmatpush1.msra.mxu0 0.0
    %2318 = vmatprep.subr.mxu0 0.0
    %2319 = vmatpush1.msra.mxu0 0.0
    %2320 = vmatprep.subr.mxu0 0.0
    %2321 = vmatpush1.msra.mxu0 0.0
    %2322 = vmatprep.subr.mxu0 0.0
    %2323 = vmatpush1.msra.mxu0 0.0
    %2324 = vmatprep.subr.mxu0 0.0
    %2325 = vmatpush1.msra.mxu0 0.0
    %2326 = vmatprep.subr.mxu0 0.0
    %2327 = vmatpush1.msra.mxu0 0.0
    %2328 = vmatprep.mubr.f32.mxu0 0.0
    %2329 = vmatmul.mubr.f32.gmra.mrb[0].mxu0 %v2103
    %v2330 = vpop.f32.mrb[0].mxu0
    %v2331 = vadd.f32 0.0, %v2330
    %v2332 = vpop.f32.mrb[0].mxu0
    %v2333 = vadd.f32 0.0, %v2332
    %2334 = vdwg.mxu0
    %2335 = vmatprep.subr.mxu0 %v2120
    %2336 = vmatpush1.msra.mxu0 %v2118
    %2337 = vmatprep.subr.mxu0 0.0
    %2338 = vmatpush1.msra.mxu0 0.0
    %2339 = vmatprep.subr.mxu0 0.0
    %2340 = vmatpush1.msra.mxu0 0.0
    %2341 = vmatprep.subr.mxu0 0.0
    %2342 = vmatpush1.msra.mxu0 0.0
    %2343 = vmatprep.subr.mxu0 0.0
    %2344 = vmatpush1.msra.mxu0 0.0
    %2345 = vmatprep.subr.mxu0 0.0
    %2346 = vmatpush1.msra.mxu0 0.0
    %2347 = vmatprep.subr.mxu0 0.0
    %2348 = vmatpush1.msra.mxu0 0.0
    %2349 = vmatprep.subr.mxu0 0.0
    %2350 = vmatpush1.msra.mxu0 0.0
    %2351 = vmatprep.subr.mxu0 0.0
    %2352 = vmatpush1.msra.mxu0 0.0
    %2353 = vmatprep.subr.mxu0 0.0
    %2354 = vmatpush1.msra.mxu0 0.0
    %2355 = vmatprep.subr.mxu0 0.0
    %2356 = vmatpush1.msra.mxu0 0.0
    %2357 = vmatprep.subr.mxu0 0.0
    %2358 = vmatpush1.msra.mxu0 0.0
    %2359 = vmatprep.subr.mxu0 0.0
    %2360 = vmatpush1.msra.mxu0 0.0
    %2361 = vmatprep.subr.mxu0 0.0
    %2362 = vmatpush1.msra.mxu0 0.0
    %2363 = vmatprep.subr.mxu0 0.0
    %2364 = vmatpush1.msra.mxu0 0.0
    %2365 = vmatprep.subr.mxu0 0.0
    %2366 = vmatpush1.msra.mxu0 0.0
    %2367 = vmatprep.subr.mxu0 0.0
    %2368 = vmatpush1.msra.mxu0 0.0
    %2369 = vmatprep.subr.mxu0 0.0
    %2370 = vmatpush1.msra.mxu0 0.0
    %2371 = vmatprep.subr.mxu0 0.0
    %2372 = vmatpush1.msra.mxu0 0.0
    %2373 = vmatprep.subr.mxu0 0.0
    %2374 = vmatpush1.msra.mxu0 0.0
    %2375 = vmatprep.subr.mxu0 0.0
    %2376 = vmatpush1.msra.mxu0 0.0
    %2377 = vmatprep.subr.mxu0 0.0
    %2378 = vmatpush1.msra.mxu0 0.0
    %2379 = vmatprep.subr.mxu0 0.0
    %2380 = vmatpush1.msra.mxu0 0.0
    %2381 = vmatprep.subr.mxu0 0.0
    %2382 = vmatpush1.msra.mxu0 0.0
    %2383 = vmatprep.subr.mxu0 0.0
    %2384 = vmatpush1.msra.mxu0 0.0
    %2385 = vmatprep.subr.mxu0 0.0
    %2386 = vmatpush1.msra.mxu0 0.0
    %2387 = vmatprep.subr.mxu0 0.0
    %2388 = vmatpush1.msra.mxu0 0.0
    %2389 = vmatprep.subr.mxu0 0.0
    %2390 = vmatpush1.msra.mxu0 0.0
    %2391 = vmatprep.subr.mxu0 0.0
    %2392 = vmatpush1.msra.mxu0 0.0
    %2393 = vmatprep.subr.mxu0 0.0
    %2394 = vmatpush1.msra.mxu0 0.0
    %2395 = vmatprep.subr.mxu0 0.0
    %2396 = vmatpush1.msra.mxu0 0.0
    %2397 = vmatprep.subr.mxu0 0.0
    %2398 = vmatpush1.msra.mxu0 0.0
    %2399 = vmatprep.mubr.f32.mxu0 0.0
    %2400 = vmatmul.mubr.f32.gmra.mrb[0].mxu0 %v2103
    %v2401 = vpop.f32.mrb[0].mxu0
    %v2402 = vadd.f32 0.0, %v2401
    %v2403 = vpop.f32.mrb[0].mxu0
    %v2404 = vadd.f32 0.0, %v2403
    %2405 = vdwg.mxu0
    %vm2406 = vmand %vm97, %vm137
    %vm2407 = vmand %vm98, %vm138
    %vm2408 = vmand %vm99, %vm139
    %vm2409 = vmand %vm100, %vm140
    %vm2410 = vmand %vm101, %vm141
    %vm2411 = vmand %vm102, %vm142
    %vm2412 = vmand %vm103, %vm143
    %vm2413 = vmand %vm104, %vm144
    %v2414 = vsel %vm2406, %v2189, 0.0
    %v2415 = vsel %vm2407, %v2191, 0.0
    %v2416 = vsel %vm2408, %v2260, 0.0
    %v2417 = vsel %vm2409, %v2262, 0.0
    %v2418 = vsel %vm2410, %v2331, 0.0
    %v2419 = vsel %vm2411, %v2333, 0.0
    %v2420 = vsel %vm2412, %v2402, 0.0
    %v2421 = vsel %vm2413, %v2404, 0.0
    %v2422 = vadd.f32 %v2080, %v2414
    %v2423 = vadd.f32 %v2081, %v2415
    %v2424 = vadd.f32 %v2082, %v2416
    %v2425 = vadd.f32 %v2083, %v2417
    %v2426 = vadd.f32 %v2084, %v2418
    %v2427 = vadd.f32 %v2085, %v2419
    %v2428 = vadd.f32 %v2086, %v2420
    %v2429 = vadd.f32 %v2087, %v2421
    %v2430 = vld [vmem:[%s8] sm:$0xff]
    %2432 = vset.pattern.permute.xlu0 0
    %2433 = vperm.xlu0 %2432, %v2430
    %v2434 = vpop.permute.xlu0 %2433
    %v2436 = vadd.f32 %v2422, %v2434
    %v2437 = vadd.f32 %v2423, %v2434
    %v2438 = vadd.f32 %v2424, %v2434
    %v2439 = vadd.f32 %v2425, %v2434
    %v2440 = vadd.f32 %v2426, %v2434
    %v2441 = vadd.f32 %v2427, %v2434
    %v2442 = vadd.f32 %v2428, %v2434
    %v2443 = vadd.f32 %v2429, %v2434
    %2444 = vst [vmem:[#allocation10] sm:$0xff] %v2436
    %2445 = vst [vmem:[#allocation10 + $0x8] sm:$0xff] %v2437
    %2446 = vst [vmem:[#allocation10 + $0x10] sm:$0xff] %v2438
    %2447 = vst [vmem:[#allocation10 + $0x18] sm:$0xff] %v2439
    %2448 = vst [vmem:[#allocation10 + $0x20] sm:$0xff] %v2440
    %2449 = vst [vmem:[#allocation10 + $0x28] sm:$0xff] %v2441
    %2450 = vst [vmem:[#allocation10 + $0x30] sm:$0xff] %v2442
    %2451 = vst [vmem:[#allocation10 + $0x38] sm:$0xff] %v2443
    // Predicated region
    $region46: #{tpu_custom_call.1} parent=1 // pred_check
      _
    $region47: #{tpu_custom_call.1} parent=1 // pred_check_branch
      %2453 = sbr.rel (0) target = $region49
    $region48: #{tpu_custom_call.1} parent=1 // pred_region
      %s2455 = ssub.s32 1024, 1024
      %2456 = vsyncadd [#allocation7], %s2455
      %s2458 = sshll.u32 [#allocation10], 4
      %s2459 = int_to_ptr.vmem [resolvable:$true] %s2458
      %2461 = dma.vmem_to_hbm [thread:$0]  %s2459, 1024, %s9, [#allocation7]
    $region49: #{tpu_custom_call.1} parent=1 // pred_fallthru
      _
    // Predicated region
    $region50: #{tpu_custom_call.1} parent=1 // pred_check
      _
    $region51: #{tpu_custom_call.1} parent=1 // pred_check_branch
      %2463 = sbr.rel (0) target = $region53
    $region52: #{tpu_custom_call.1} parent=1 // pred_region
      %2464 = dma.done [#allocation7], 1024
    $region53: #{tpu_custom_call.1} parent=1 // pred_fallthru
      _
    %2465 = vsyncpa [#allocation6], 1
    %2466 = vsyncpa [#allocation9], 1
    %2467 = vsyncpa [#allocation7], 1

</llo_original>
